<compile_context>
chip_gen: v7x
topology: tpu7x:2x2x1
jax: 0.10.0
libtpu: 0.0.40
codegen_flags: <defaults>
</compile_context>

<pallas_src>
import functools

import jax
import jax.numpy as jnp
from jax.experimental import pallas as pl
from jax.experimental.pallas import tpu as pltpu


def _round_up(x, m):
    return ((x + m - 1) // m) * m


def bert_cnn_kernel(x_ref, wconv_ref, bconv_ref, o_ref, *,
                    block_b, l_pad, l_out, n_k):
    # x_ref:     (block_b, l_pad, H)  bf16 raw sequence activations (zero-padded)
    # wconv_ref: (K, H, C_out)        bf16 conv weight, tap-major
    # bconv_ref: (1, C_out)           f32  conv bias
    # o_ref:     (block_b, C_out)     f32  max-pooled conv features (lane-dense)
    h = x_ref.shape[-1]
    c_out = wconv_ref.shape[-1]
    m_rows = block_b * l_pad

    # Batch and output position fold into the matmul M dimension.  l_pad and H
    # are tile-aligned, so this collapse is a pure relabeling (no relayout).
    x = x_ref[...].reshape(m_rows, h)

    # Conv1d(kernel_size=K, no padding), f32 accumulation on the MXU:
    #   conv[b, t, c] = sum_k x[b, t + k, :] @ W[k, :, c]
    # The k-th partial product is computed over ALL rows, then rotated up by k
    # rows (32-bit sublane rotate on the XLU -- a free-ish slot next to the
    # MXU) so that row b*l_pad + t accumulates x[b, t+k] @ W[k].  Rows that
    # pick up wrapped / zero-padded positions only land at t >= l_out and are
    # masked with -inf before the max-pool.
    acc = jnp.dot(x, wconv_ref[0], preferred_element_type=jnp.float32)
    for k in range(1, n_k):
        p_k = jnp.dot(x, wconv_ref[k], preferred_element_type=jnp.float32)
        acc = acc + pltpu.roll(p_k, shift=m_rows - k, axis=0)

    # 0/-inf mask over output positions: one (l_pad, C_out) tile, broadcast
    # over the batch dim (much cheaper than a full (M, C_out) iota/mod/select).
    pos = jax.lax.broadcasted_iota(jnp.int32, (l_pad, c_out), 0)
    neg = jnp.where(pos < l_out, 0.0, -jnp.inf).astype(jnp.float32)
    conv = acc.reshape(block_b, l_pad, c_out) + neg[None, :, :]

    # torch.max(conv_output, 2)[0]; the per-channel bias is constant over the
    # pooled axis, so it commutes with the max and is added afterwards.
    pooled = jnp.max(conv, axis=1) + bconv_ref[...]          # (block_b, C_out)
    o_ref[...] = pooled.astype(o_ref.dtype)


def bert_cnn_head(seq_out, conv_w, conv_b, fc_w, fc_b, *, block_b=None):
    """seq_out: (B, L, H) f32; conv_w: (C_out, H, K); fc_w: (n_cls, C_out)."""
    B, L, H = seq_out.shape
    C_out, _, K = conv_w.shape
    n_classes = fc_w.shape[0]
    assert L >= K, "Conv1d(kernel_size=3) needs seq_len >= 3 (else L_out == 0)"
    L_out = L - K + 1
    # Rows per element, rounded to 16 so the bf16 (16,128)-packed
    # (block_b, L_pad, H) -> (block_b*L_pad, H) collapse stays layout-aligned.
    L_pad = _round_up(L, 16)

    # Batch block: target M = block_b * L_pad ~= 256 rows (one full pass of a
    # v6e/v7x 256-wide MXU; also fills v5e's 4x128 MXU), but keep >= 2 grid
    # blocks when the batch allows so the "parallel" axis can be split across
    # v7x's two TensorCores.
    if block_b is None:
        bb_target = max(8, _round_up(max(1, 256 // L_pad), 8))
        b8 = _round_up(B, 8)
        if b8 >= 2 * bb_target:
            block_b = bb_target                              # >=2 blocks, M~256
        elif b8 >= 16:
            block_b = max(8, _round_up((b8 + 1) // 2, 8))    # 2 smaller blocks
        else:
            block_b = b8                                     # tiny batch: 1 block
    block_b = max(8, _round_up(block_b, 8))
    block_b = min(block_b, _round_up(B, 8))
    B_pad = _round_up(B, block_b)
    num_blocks = B_pad // block_b

    # Per-step VMEM residency (double-buffered tiles).  Keep well under the
    # 32 MiB scoped-VMEM default; v7x has only 64 MiB total per TensorCore.
    # (The grid-invariant wconv/bconv could additionally be single-buffered
    # via pipeline_mode=pl.Buffered(1) if this ever gets tight.)
    vmem_bytes = (2 * block_b * L_pad * H * 2        # x tile (bf16)
                  + 2 * K * H * C_out * 2            # conv weight (bf16)
                  + 2 * C_out * 4                    # conv bias (f32)
                  + 2 * block_b * C_out * 4)         # pooled output (f32)
    assert vmem_bytes < 28 * 1024 * 1024, (
        f"per-step VMEM residency {vmem_bytes / 2**20:.1f} MiB exceeds budget; "
        "reduce block_b")

    # Cast to bf16 BEFORE padding so the only activation intermediate written
    # to HBM is the 1x-sized bf16 slab (no im2col duplication).
    x = seq_out.astype(jnp.bfloat16)
    if B_pad != B or L_pad != L:
        x = jnp.pad(x, ((0, B_pad - B), (0, L_pad - L), (0, 0)))

    # Conv weight tap-major: wconv[k, i, c] = conv_w[c, i, k].
    wconv = jnp.transpose(conv_w, (2, 1, 0)).astype(jnp.bfloat16)   # (K, H, C)
    bconv = conv_b.reshape(1, C_out).astype(jnp.float32)

    kernel = functools.partial(bert_cnn_kernel, block_b=block_b,
                               l_pad=L_pad, l_out=L_out, n_k=K)

    pooled = pl.pallas_call(
        kernel,
        out_shape=jax.ShapeDtypeStruct((B_pad, C_out), jnp.float32),
        grid_spec=pltpu.PrefetchScalarGridSpec(
            num_scalar_prefetch=0,
            grid=(num_blocks,),
            in_specs=[
                pl.BlockSpec((block_b, L_pad, H), lambda b: (b, 0, 0)),   # x
                pl.BlockSpec((K, H, C_out), lambda b: (0, 0, 0)),         # conv W
                pl.BlockSpec((1, C_out), lambda b: (0, 0)),               # conv b
            ],
            out_specs=pl.BlockSpec((block_b, C_out), lambda b: (b, 0)),
        ),
        compiler_params=pltpu.CompilerParams(
            dimension_semantics=("parallel",)),   # batch-block axis -> megacore
    )(x, wconv, bconv)

    pooled = pooled[:B]                                # drop padded batch rows
    # nn.Dropout(0.3) is the identity at inference.  fc1 is a tiny
    # (B, 256) @ (256, n_classes) GEMM, done once over the whole batch in f32
    # here instead of spending an MXU pass per grid step on an M=block_b matmul.
    logits = pooled @ fc_w.T.astype(jnp.float32) + fc_b.astype(jnp.float32)
    return logits


def fake_bert_encoder(input_ids, attention_mask, emb_table):
    # TODO(synk): the pretrained 'bert-base-uncased' encoder cannot be loaded
    # in-script; replaced with a deterministic embedding-lookup stand-in that
    # produces a (B, L, H) last_hidden_state-shaped tensor.
    seq = emb_table[input_ids]                                   # (B, L, H)
    return seq * attention_mask[..., None].astype(seq.dtype)


def reference_head(seq_out, conv_w, conv_b, fc_w, fc_b):
    """Plain-JAX f32 reference reproducing the PyTorch semantics exactly."""
    B, L, H = seq_out.shape
    C_out, _, K = conv_w.shape
    L_out = L - K + 1
    conv_out = jnp.zeros((B, C_out, L_out), jnp.float32)
    for k in range(K):
        conv_out = conv_out + jnp.einsum(
            'bti,ci->bct', seq_out[:, k:k + L_out, :], conv_w[:, :, k])
    conv_out = conv_out + conv_b[None, :, None]
    pooled = jnp.max(conv_out, axis=2)                           # (B, C_out)
    return pooled @ fc_w.T + fc_b[None, :]


if __name__ == "__main__":
    # B=32 with L=16 -> block_b=16, two "parallel" grid blocks of M = 256 rows
    # each: full 256-wide MXU passes on v6e/v7x AND both v7x TensorCores busy.
    B, L, H = 32, 16, 768         # hidden=768 fixed by the module (BERT base)
    C_OUT, K = 256, 3             # Conv1d(768 -> 256, kernel_size=3)
    N_CLASSES = 4
    VOCAB = 32

    key = jax.random.PRNGKey(0)
    k_emb, k_ids, k_cw, k_cb, k_fw, k_fb = jax.random.split(key, 6)

    emb_table = jax.random.normal(k_emb, (VOCAB, H), jnp.float32) * 0.02
    input_ids = jax.random.randint(k_ids, (B, L), 0, VOCAB)
    attention_mask = jnp.ones((B, L), jnp.int32)

    conv_w = jax.random.normal(k_cw, (C_OUT, H, K), jnp.float32) * 0.02
    conv_b = jax.random.normal(k_cb, (C_OUT,), jnp.float32) * 0.02
    fc_w = jax.random.normal(k_fw, (N_CLASSES, C_OUT), jnp.float32) * 0.02
    fc_b = jax.random.normal(k_fb, (N_CLASSES,), jnp.float32) * 0.02

    seq_out = fake_bert_encoder(input_ids, attention_mask, emb_table)

    logits = bert_cnn_head(seq_out, conv_w, conv_b, fc_w, fc_b)
    logits = jax.block_until_ready(logits)

    ref = reference_head(seq_out, conv_w, conv_b, fc_w, fc_b)
    assert logits.shape == (B, N_CLASSES)
    # bf16 conv operands (f32 accumulation, f32 fc) give ~1e-3 level error,
    # well inside the 2e-2 tolerance.
    assert jnp.allclose(logits, ref, rtol=2e-2, atol=2e-2), (logits, ref)

    print("KERNEL_OK")
</pallas_src>

<mosaic_0001>
module attributes {stable_mosaic.version = 11 : i64} {
  func.func @bert_cnn_kernel(%arg0: i32, %arg1: memref<16x16x768xbf16, #tpu.memory_space<vmem>>, %arg2: memref<3x768x256xbf16, #tpu.memory_space<vmem>>, %arg3: memref<1x256xf32, #tpu.memory_space<vmem>>, %arg4: memref<16x256xf32, #tpu.memory_space<vmem>>) attributes {dimension_semantics = [#tpu.dimension_semantics<parallel>], iteration_bounds = array<i64: 2>, scalar_prefetch = 0 : i64, scratch_operands = 0 : i64, tpu.core_type = #tpu.core_type<tc>, window_params = [{transform_indices = @transform_0, window_bounds = array<i64: 16, 16, 768>}, {pipeline_mode = #tpu.pipeline_mode<synchronous>, transform_indices = @transform_1, window_bounds = array<i64: 3, 768, 256>}, {pipeline_mode = #tpu.pipeline_mode<synchronous>, transform_indices = @transform_2, window_bounds = array<i64: 1, 256>}, {transform_indices = @transform_3, window_bounds = array<i64: 16, 256>}]} {
    %c0 = arith.constant 0 : index
    %c0_0 = arith.constant 0 : index
    %c0_1 = arith.constant 0 : index
    %0 = vector.load %arg1[%c0, %c0_0, %c0_1] : memref<16x16x768xbf16, #tpu.memory_space<vmem>>, vector<16x16x768xbf16>
    %1 = vector.shape_cast %0 : vector<16x16x768xbf16> to vector<256x768xbf16>
    %c0_2 = arith.constant 0 : index
    %c0_3 = arith.constant 0 : index
    %c0_4 = arith.constant 0 : index
    %2 = vector.load %arg2[%c0_2, %c0_3, %c0_4] : memref<3x768x256xbf16, #tpu.memory_space<vmem>>, vector<1x768x256xbf16>
    %3 = vector.shape_cast %2 : vector<1x768x256xbf16> to vector<768x256xbf16>
    %cst = arith.constant dense<0.000000e+00> : vector<256x256xf32>
    %4 = tpu.matmul %1, %3, %cst {dimension_numbers = #tpu.dot_dimension_numbers<[1], [0], [0], [1], [0, 0, 1, 1], [], []>} : vector<256x768xbf16>, vector<768x256xbf16>, vector<256x256xf32> -> vector<256x256xf32>
    %c1 = arith.constant 1 : index
    %c0_5 = arith.constant 0 : index
    %c0_6 = arith.constant 0 : index
    %5 = vector.load %arg2[%c1, %c0_5, %c0_6] : memref<3x768x256xbf16, #tpu.memory_space<vmem>>, vector<1x768x256xbf16>
    %6 = vector.shape_cast %5 : vector<1x768x256xbf16> to vector<768x256xbf16>
    %cst_7 = arith.constant dense<0.000000e+00> : vector<256x256xf32>
    %7 = tpu.matmul %1, %6, %cst_7 {dimension_numbers = #tpu.dot_dimension_numbers<[1], [0], [0], [1], [0, 0, 1, 1], [], []>} : vector<256x768xbf16>, vector<768x256xbf16>, vector<256x256xf32> -> vector<256x256xf32>
    %c255_i32 = arith.constant 255 : i32
    %8 = tpu.dynamic_rotate %7 by %c255_i32 dim 0 : vector<256x256xf32>, i32 -> vector<256x256xf32>
    %9 = arith.addf %4, %8 : vector<256x256xf32>
    %c2 = arith.constant 2 : index
    %c0_8 = arith.constant 0 : index
    %c0_9 = arith.constant 0 : index
    %10 = vector.load %arg2[%c2, %c0_8, %c0_9] : memref<3x768x256xbf16, #tpu.memory_space<vmem>>, vector<1x768x256xbf16>
    %11 = vector.shape_cast %10 : vector<1x768x256xbf16> to vector<768x256xbf16>
    %cst_10 = arith.constant dense<0.000000e+00> : vector<256x256xf32>
    %12 = tpu.matmul %1, %11, %cst_10 {dimension_numbers = #tpu.dot_dimension_numbers<[1], [0], [0], [1], [0, 0, 1, 1], [], []>} : vector<256x768xbf16>, vector<768x256xbf16>, vector<256x256xf32> -> vector<256x256xf32>
    %c254_i32 = arith.constant 254 : i32
    %13 = tpu.dynamic_rotate %12 by %c254_i32 dim 0 : vector<256x256xf32>, i32 -> vector<256x256xf32>
    %14 = arith.addf %9, %13 : vector<256x256xf32>
    %15 = tpu.iota {dimensions = array<i32: 0>} : vector<16x256xi32>
    %c14_i32 = arith.constant 14 : i32
    %16 = vector.broadcast %c14_i32 : i32 to vector<16x256xi32>
    %17 = arith.cmpi slt, %15, %16 : vector<16x256xi32>
    %cst_11 = arith.constant 0.000000e+00 : f32
    %cst_12 = arith.constant 0xFF800000 : f32
    %18 = vector.broadcast %cst_11 : f32 to vector<16x256xf32>
    %19 = vector.broadcast %cst_12 : f32 to vector<16x256xf32>
    %20 = arith.select %17, %18, %19 : vector<16x256xi1>, vector<16x256xf32>
    %21 = vector.shape_cast %14 : vector<256x256xf32> to vector<16x16x256xf32>
    %22 = vector.shape_cast %20 : vector<16x256xf32> to vector<1x16x256xf32>
    %23 = vector.broadcast %22 : vector<1x16x256xf32> to vector<16x16x256xf32>
    %24 = arith.addf %21, %23 : vector<16x16x256xf32>
    %cst_13 = arith.constant dense<0xFF800000> : vector<16x256xf32>
    %25 = vector.multi_reduction <maximumf>, %24, %cst_13 [1] : vector<16x16x256xf32> to vector<16x256xf32>
    %c0_14 = arith.constant 0 : index
    %c0_15 = arith.constant 0 : index
    %26 = vector.load %arg3[%c0_14, %c0_15] : memref<1x256xf32, #tpu.memory_space<vmem>>, vector<1x256xf32>
    %27 = vector.broadcast %26 : vector<1x256xf32> to vector<16x256xf32>
    %28 = arith.addf %25, %27 : vector<16x256xf32>
    %c0_16 = arith.constant 0 : index
    %c0_17 = arith.constant 0 : index
    %29 = vector.load %arg4[%c0_16, %c0_17] : memref<16x256xf32, #tpu.memory_space<vmem>>, vector<16x256xf32>
    tpu.vector_store %arg4[%c0_16, %c0_17], %28 {strides = array<i32>} : memref<16x256xf32, #tpu.memory_space<vmem>>, vector<16x256xf32>,
    return
  }
  func.func @transform_0(%arg0: i32) -> (i32, i32, i32) {
    %c0_i32 = arith.constant 0 : i32
    %c0_i32_0 = arith.constant 0 : i32
    %c0_i32_1 = arith.constant 0 : i32
    return %arg0, %c0_i32, %c0_i32_0 : i32, i32, i32
  }
  func.func @transform_1(%arg0: i32) -> (i32, i32, i32) {
    %c0_i32 = arith.constant 0 : i32
    %c0_i32_0 = arith.constant 0 : i32
    %c0_i32_1 = arith.constant 0 : i32
    %c0_i32_2 = arith.constant 0 : i32
    return %c0_i32, %c0_i32_0, %c0_i32_1 : i32, i32, i32
  }
  func.func @transform_2(%arg0: i32) -> (i32, i32) {
    %c0_i32 = arith.constant 0 : i32
    %c0_i32_0 = arith.constant 0 : i32
    %c0_i32_1 = arith.constant 0 : i32
    return %c0_i32, %c0_i32_0 : i32, i32
  }
  func.func @transform_3(%arg0: i32) -> (i32, i32) {
    %c0_i32 = arith.constant 0 : i32
    %c0_i32_0 = arith.constant 0 : i32
    return %arg0, %c0_i32 : i32, i32
  }
}

</mosaic_0001>

<llo_original>
// kernel: tpu_custom_call.1
$region0: #{tpu_custom_call.1}
  #allocation0 [shape = 'u32[]', space=smem, size = 0x4, offset = 0x4, fixed_abs, tag = 'smem constant byte address 0x4 - core index']
  #allocation1 [shape = 'u32[144,128]{1,0:T(1,128)}', space=vmem, size = 0x12000, scoped, tag = 'internal scratch']
  %s0 = inlined_call_operand.hbm [shape: bf16[32,16,768], index: 0, kind: input, shape index: {}]
  %s1 = inlined_call_operand.hbm [shape: bf16[3,768,256], index: 1, kind: input, shape index: {}]
  %s2 = inlined_call_operand.hbm [shape: f32[1,256], index: 2, kind: input, shape index: {}]
  %s3 = inlined_call_operand.hbm [shape: f32[32,256], index: 3, kind: output, shape index: {}]
  %s4 = sld [smem:[#allocation0]]
  $region57: #{tpu_custom_call.1} parent=0
    _
  %s6 = ssub.s32 1, %s4
  %s7 = scalar_select 0, %s6, %s4
  $region1: #{tpu_custom_call.1} parent=0
    #allocation2 [shape = 'u8[786432]{0}', space=vmem, size = 0xc0000, scoped, tag = 'input window, operand 0']
    #allocation3 [shape = 's32[2]{0}', space=sflag, size = 0x8, scoped, tag = 'scoped memory for tpu_custom_call.1']
    #allocation4 [shape = 's32[2]{0}', space=sflag, size = 0x8, scoped, tag = 'scoped memory for tpu_custom_call.1']
    #allocation5 [shape = 'u8[1179648]{0}', space=vmem, size = 0x120000, scoped, tag = 'input window, operand 1, single buffered']
    #allocation6 [shape = 's32[1]{0}', space=sflag, size = 0x4, scoped, tag = 'scoped memory for tpu_custom_call.1']
    #allocation7 [shape = 'u8[1024]{0}', space=vmem, size = 0x400, scoped, tag = 'input window, operand 2, single buffered']
    #allocation8 [shape = 'u8[32768]{0}', space=vmem, size = 0x8000, scoped, tag = 'output window, operand 0']
    %8 = vsyncpa [#allocation3], 0
    %s9 = scalar_lea.sflag [#allocation3], 1
    %10 = vsyncpa %s9, 0
    %11 = vsyncpa [#allocation6], 0
    %12 = vsyncpa [#allocation4], 0
    %s13 = scalar_lea.sflag [#allocation4], 1
    %14 = vsyncpa %s13, 0
    loop: start=0, step=1, limit=4
    $region2: #{tpu_custom_call.1} parent=1 // loop_pre_header
      _
    $region3: #{tpu_custom_call.1} parent=1 // loop_header
      %s16 = sphi 0, %s20
      %p17 = scmp.ge.s32.totalorder %s16, 4
      %s26 = sphi 0, %s28
      %s29 = sphi 0, %s26
      %s30 = sphi 0, %s29
      %s46 = sphi 0, %s30
      %s50 = sphi 0, %s50
      %s52 = sphi 0, %s50
      %s53 = sphi 0, %s52
      %s67 = sphi 0, %s53
      %s71 = sphi 0, %s71
      %s73 = sphi 0, %s71
      %s74 = sphi 0, %s73
      %s88 = sphi 0, %s74
      %s94 = sphi 0, %s96
      %s97 = sphi 0, %s94
      %s98 = sphi 0, %s97
      %s114 = sphi 0, %s98
    $region4: #{tpu_custom_call.1} parent=1 // loop_header_branch
      %19 = sbr.rel (%p17) target = $region8
    $region5: #{tpu_custom_call.1} parent=1 // loop_body
      %s21 = ssub.s32 %s16, 1
      %s22 = ssub.s32 %s16, 2
      %s23 = sadd.s32 %s16, 1
      %s24 = ssub.s32 %s16, %s23
      %p25 = scmp.eq.s32.totalorder %s24, 0
      %s27 = sadd.s32 %s26, 1
      %s28 = scalar_select %p25, %s26, %s27
      %p31 = pneg %p25
      %p32 = scmp.eq.s32.totalorder %s16, 1
      %p33 = por %p31, %p32
      %p34 = scmp.ne.s32.totalorder %s26, %s29
      %p35 = scmp.eq.s32.totalorder %s16, 0
      %p36 = por %p34, %p35
      %p37 = scmp.ne.s32.totalorder %s26, %s29
      %p38 = scmp.eq.s32.totalorder %s21, 1
      %p39 = por %p37, %p38
      %p40 = scmp.ne.s32.totalorder %s29, %s30
      %p41 = scmp.eq.s32.totalorder %s21, 0
      %p42 = por %p40, %p41
      %p43 = scmp.ne.s32.totalorder %s29, %s30
      %p44 = scmp.eq.s32.totalorder %s22, 1
      %p45 = por %p43, %p44
      %p47 = scmp.ne.s32.totalorder %s30, %s46
      %p48 = scmp.eq.s32.totalorder %s22, 0
      %p49 = por %p47, %p48
      %s51 = sadd.s32 %s50, 1
      %p54 = scmp.eq.s32.totalorder %s16, 1
      %p55 = scmp.ne.s32.totalorder %s50, %s52
      %p56 = scmp.eq.s32.totalorder %s16, 0
      %p57 = por %p55, %p56
      %p58 = scmp.ne.s32.totalorder %s50, %s52
      %p59 = scmp.eq.s32.totalorder %s21, 1
      %p60 = por %p58, %p59
      %p61 = scmp.ne.s32.totalorder %s52, %s53
      %p62 = scmp.eq.s32.totalorder %s21, 0
      %p63 = por %p61, %p62
      %p64 = scmp.ne.s32.totalorder %s52, %s53
      %p65 = scmp.eq.s32.totalorder %s22, 1
      %p66 = por %p64, %p65
      %p68 = scmp.ne.s32.totalorder %s53, %s67
      %p69 = scmp.eq.s32.totalorder %s22, 0
      %p70 = por %p68, %p69
      %s72 = sadd.s32 %s71, 1
      %p75 = scmp.eq.s32.totalorder %s16, 1
      %p76 = scmp.ne.s32.totalorder %s71, %s73
      %p77 = scmp.eq.s32.totalorder %s16, 0
      %p78 = por %p76, %p77
      %p79 = scmp.ne.s32.totalorder %s71, %s73
      %p80 = scmp.eq.s32.totalorder %s21, 1
      %p81 = por %p79, %p80
      %p82 = scmp.ne.s32.totalorder %s73, %s74
      %p83 = scmp.eq.s32.totalorder %s21, 0
      %p84 = por %p82, %p83
      %p85 = scmp.ne.s32.totalorder %s73, %s74
      %p86 = scmp.eq.s32.totalorder %s22, 1
      %p87 = por %p85, %p86
      %p89 = scmp.ne.s32.totalorder %s74, %s88
      %p90 = scmp.eq.s32.totalorder %s22, 0
      %p91 = por %p89, %p90
      %s92 = ssub.s32 %s16, %s23
      %p93 = scmp.eq.s32.totalorder %s92, 0
      %s95 = sadd.s32 %s94, 1
      %s96 = scalar_select %p93, %s94, %s95
      %p99 = pneg %p93
      %p100 = scmp.eq.s32.totalorder %s16, 1
      %p101 = por %p99, %p100
      %p102 = scmp.ne.s32.totalorder %s94, %s97
      %p103 = scmp.eq.s32.totalorder %s16, 0
      %p104 = por %p102, %p103
      %p105 = scmp.ne.s32.totalorder %s94, %s97
      %p106 = scmp.eq.s32.totalorder %s21, 1
      %p107 = por %p105, %p106
      %p108 = scmp.ne.s32.totalorder %s97, %s98
      %p109 = scmp.eq.s32.totalorder %s21, 0
      %p110 = por %p108, %p109
      %p111 = scmp.ne.s32.totalorder %s97, %s98
      %p112 = scmp.eq.s32.totalorder %s22, 1
      %p113 = por %p111, %p112
      %p115 = scmp.ne.s32.totalorder %s98, %s114
      %p116 = scmp.eq.s32.totalorder %s22, 0
      %p117 = por %p115, %p116
      %p118 = scmp.le.s32.totalorder 1, %s16
      %p119 = scmp.lt.s32.totalorder %s16, 3
      %p120 = pnand %p118, %p119
      %p121 = pneg %p120
      // Predicated region
      $region9: #{tpu_custom_call.1} parent=5 // pred_check
        _
      $region10: #{tpu_custom_call.1} parent=5 // pred_check_branch
        %123 = sbr.rel (%p120) target = $region12
      $region11: #{tpu_custom_call.1} parent=5 // pred_region
        %s124 = ssub.s32 %s16, 1
        // Predicated region
        $region13: #{tpu_custom_call.1} parent=11 // pred_check
          %p125 = pneg %p63
        $region14: #{tpu_custom_call.1} parent=11 // pred_check_branch
          %127 = sbr.rel (%p125) target = $region16
        $region15: #{tpu_custom_call.1} parent=11 // pred_region
          %s129 = ssub.s32 36864, 36864
          %130 = vsyncadd [#allocation6], %s129
          %s131 = sshll.u32 [#allocation5], 4
          %s132 = int_to_ptr.vmem [resolvable:$true] %s131
          %137 = dma.hbm_to_vmem [thread:$0]  %s1, 36864, %s132, [#allocation6], 128, 128, 8
        $region16: #{tpu_custom_call.1} parent=11 // pred_fallthru
          _
        // Predicated region
        $region17: #{tpu_custom_call.1} parent=11 // pred_check
          %p138 = pneg %p84
        $region18: #{tpu_custom_call.1} parent=11 // pred_check_branch
          %140 = sbr.rel (%p138) target = $region20
        $region19: #{tpu_custom_call.1} parent=11 // pred_region
          %s142 = ssub.s32 32, 32
          %143 = vsyncadd [#allocation6], %s142
          %s145 = sshll.u32 [#allocation7], 4
          %s146 = int_to_ptr.vmem [resolvable:$true] %s145
          %148 = dma.hbm_to_vmem [thread:$0]  %s2, 32, %s146, [#allocation6]
        $region20: #{tpu_custom_call.1} parent=11 // pred_fallthru
          _
      $region12: #{tpu_custom_call.1} parent=5 // pred_fallthru
        _
      %p149 = scmp.lt.s32.totalorder %s16, 2
      // Predicated region
      $region21: #{tpu_custom_call.1} parent=5 // pred_check
        %p150 = pneg %p149
      $region22: #{tpu_custom_call.1} parent=5 // pred_check_branch
        %152 = sbr.rel (%p150) target = $region24
      $region23: #{tpu_custom_call.1} parent=5 // pred_region
        // Predicated region
        $region25: #{tpu_custom_call.1} parent=23 // pred_check
          %p153 = pneg %p36
        $region26: #{tpu_custom_call.1} parent=23 // pred_check_branch
          %155 = sbr.rel (%p153) target = $region28
        $region27: #{tpu_custom_call.1} parent=23 // pred_region
          %s156 = sand.u32 %s26, 1
          %s157 = scalar_lea.sflag [#allocation3], %s156
          %s158 = sand.u32 %s26, 1
          %s159 = smul.addr %s158, 768
          %s160 = scalar_lea.vmem [#allocation2], %s159
          %s161 = smul.u32 16, %s16
          %s163 = ssub.s32 12288, 12288
          %164 = vsyncadd %s157, %s163
          %s165 = smul.addr %s161, 12
          %s166 = smul.addr %s165, 64
          %s167 = scalar_lea.hbm %s0, %s166
          %s168 = sshll.u32 %s160, 4
          %s169 = int_to_ptr.vmem [resolvable:$true] %s168
          %174 = dma.hbm_to_vmem [thread:$0]  %s167, 12288, %s169, %s157, 384, 384, 24
        $region28: #{tpu_custom_call.1} parent=23 // pred_fallthru
          _
      $region24: #{tpu_custom_call.1} parent=5 // pred_fallthru
        _
      %p175 = scmp.le.s32.totalorder 1, %s16
      %p176 = scmp.lt.s32.totalorder %s16, 3
      %p177 = pnand %p175, %p176
      %p178 = pneg %p177
      // Predicated region
      $region29: #{tpu_custom_call.1} parent=5 // pred_check
        _
      $region30: #{tpu_custom_call.1} parent=5 // pred_check_branch
        %180 = sbr.rel (%p177) target = $region32
      $region31: #{tpu_custom_call.1} parent=5 // pred_region
        %s181 = ssub.s32 %s16, 1
        %s182 = sand.u32 %s29, 1
        %s183 = scalar_lea.sflag [#allocation3], %s182
        %s184 = sand.u32 %s29, 1
        %s185 = smul.addr %s184, 768
        %s186 = scalar_lea.vmem [#allocation2], %s185
        // Predicated region
        $region33: #{tpu_custom_call.1} parent=31 // pred_check
          %p187 = pneg %p42
        $region34: #{tpu_custom_call.1} parent=31 // pred_check_branch
          %189 = sbr.rel (%p187) target = $region36
        $region35: #{tpu_custom_call.1} parent=31 // pred_region
          %190 = dma.done %s183, 12288
        $region36: #{tpu_custom_call.1} parent=31 // pred_fallthru
          _
        // Predicated region
        $region37: #{tpu_custom_call.1} parent=31 // pred_check
          %p191 = pneg %p63
        $region38: #{tpu_custom_call.1} parent=31 // pred_check_branch
          %193 = sbr.rel (%p191) target = $region40
        $region39: #{tpu_custom_call.1} parent=31 // pred_region
          %194 = dma.done [#allocation6], 36864
        $region40: #{tpu_custom_call.1} parent=31 // pred_fallthru
          _
        // Predicated region
        $region41: #{tpu_custom_call.1} parent=31 // pred_check
          %p195 = pneg %p84
        $region42: #{tpu_custom_call.1} parent=31 // pred_check_branch
          %197 = sbr.rel (%p195) target = $region44
        $region43: #{tpu_custom_call.1} parent=31 // pred_region
          %198 = dma.done [#allocation6], 32
        $region44: #{tpu_custom_call.1} parent=31 // pred_fallthru
          _
        %s199 = sand.u32 %s29, 1
        %s200 = scalar_lea.sflag [#allocation3], %s199
        %s201 = sand.u32 %s29, 1
        %s202 = smul.addr %s201, 768
        %s203 = scalar_lea.vmem [#allocation2], %s202
        %p204 = pneg %p42
        %p205 = pneg %p39
        %p206 = pneg %p63
        %p207 = pneg %p60
        %p208 = pneg %p84
        %p209 = pneg %p81
        %p210 = pneg %p110
        %p211 = pneg %p107
        %s212 = sand.u32 %s97, 1
        %s213 = scalar_lea.sflag [#allocation4], %s212
        %s214 = sand.u32 %s97, 1
        %s215 = smul.addr %s214, 32
        %s216 = scalar_lea.vmem [#allocation8], %s215
        %s217 = smul.u32 16, %s21
        %s218 = smul.u32 2, %s21
        %v219 = vld [vmem:[%s186] sm:$0xff]
        %v220 = vld [vmem:[%s186 + $0x8] sm:$0xff]
        %v221 = vld [vmem:[%s186 + $0x10] sm:$0xff]
        %v222 = vld [vmem:[%s186 + $0x18] sm:$0xff]
        %v223 = vld [vmem:[%s186 + $0x20] sm:$0xff]
        %v224 = vld [vmem:[%s186 + $0x28] sm:$0xff]
        %v225 = vld [vmem:[%s186 + $0x30] sm:$0xff]
        %v226 = vld [vmem:[%s186 + $0x38] sm:$0xff]
        %v227 = vld [vmem:[%s186 + $0x40] sm:$0xff]
        %v228 = vld [vmem:[%s186 + $0x48] sm:$0xff]
        %v229 = vld [vmem:[%s186 + $0x50] sm:$0xff]
        %v230 = vld [vmem:[%s186 + $0x58] sm:$0xff]
        %v231 = vld [vmem:[%s186 + $0x60] sm:$0xff]
        %v232 = vld [vmem:[%s186 + $0x68] sm:$0xff]
        %v233 = vld [vmem:[%s186 + $0x70] sm:$0xff]
        %v234 = vld [vmem:[%s186 + $0x78] sm:$0xff]
        %v235 = vld [vmem:[%s186 + $0x80] sm:$0xff]
        %v236 = vld [vmem:[%s186 + $0x88] sm:$0xff]
        %v237 = vld [vmem:[%s186 + $0x90] sm:$0xff]
        %v238 = vld [vmem:[%s186 + $0x98] sm:$0xff]
        %v239 = vld [vmem:[%s186 + $0xa0] sm:$0xff]
        %v240 = vld [vmem:[%s186 + $0xa8] sm:$0xff]
        %v241 = vld [vmem:[%s186 + $0xb0] sm:$0xff]
        %v242 = vld [vmem:[%s186 + $0xb8] sm:$0xff]
        %v243 = vld [vmem:[%s186 + $0xc0] sm:$0xff]
        %v244 = vld [vmem:[%s186 + $0xc8] sm:$0xff]
        %v245 = vld [vmem:[%s186 + $0xd0] sm:$0xff]
        %v246 = vld [vmem:[%s186 + $0xd8] sm:$0xff]
        %v247 = vld [vmem:[%s186 + $0xe0] sm:$0xff]
        %v248 = vld [vmem:[%s186 + $0xe8] sm:$0xff]
        %v249 = vld [vmem:[%s186 + $0xf0] sm:$0xff]
        %v250 = vld [vmem:[%s186 + $0xf8] sm:$0xff]
        %v251 = vld [vmem:[%s186 + $0x100] sm:$0xff]
        %v252 = vld [vmem:[%s186 + $0x108] sm:$0xff]
        %v253 = vld [vmem:[%s186 + $0x110] sm:$0xff]
        %v254 = vld [vmem:[%s186 + $0x118] sm:$0xff]
        %v255 = vld [vmem:[%s186 + $0x120] sm:$0xff]
        %v256 = vld [vmem:[%s186 + $0x128] sm:$0xff]
        %v257 = vld [vmem:[%s186 + $0x130] sm:$0xff]
        %v258 = vld [vmem:[%s186 + $0x138] sm:$0xff]
        %v259 = vld [vmem:[%s186 + $0x140] sm:$0xff]
        %v260 = vld [vmem:[%s186 + $0x148] sm:$0xff]
        %v261 = vld [vmem:[%s186 + $0x150] sm:$0xff]
        %v262 = vld [vmem:[%s186 + $0x158] sm:$0xff]
        %v263 = vld [vmem:[%s186 + $0x160] sm:$0xff]
        %v264 = vld [vmem:[%s186 + $0x168] sm:$0xff]
        %v265 = vld [vmem:[%s186 + $0x170] sm:$0xff]
        %v266 = vld [vmem:[%s186 + $0x178] sm:$0xff]
        %v267 = vld [vmem:[%s186 + $0x180] sm:$0xff]
        %v268 = vld [vmem:[%s186 + $0x188] sm:$0xff]
        %v269 = vld [vmem:[%s186 + $0x190] sm:$0xff]
        %v270 = vld [vmem:[%s186 + $0x198] sm:$0xff]
        %v271 = vld [vmem:[%s186 + $0x1a0] sm:$0xff]
        %v272 = vld [vmem:[%s186 + $0x1a8] sm:$0xff]
        %v273 = vld [vmem:[%s186 + $0x1b0] sm:$0xff]
        %v274 = vld [vmem:[%s186 + $0x1b8] sm:$0xff]
        %v275 = vld [vmem:[%s186 + $0x1c0] sm:$0xff]
        %v276 = vld [vmem:[%s186 + $0x1c8] sm:$0xff]
        %v277 = vld [vmem:[%s186 + $0x1d0] sm:$0xff]
        %v278 = vld [vmem:[%s186 + $0x1d8] sm:$0xff]
        %v279 = vld [vmem:[%s186 + $0x1e0] sm:$0xff]
        %v280 = vld [vmem:[%s186 + $0x1e8] sm:$0xff]
        %v281 = vld [vmem:[%s186 + $0x1f0] sm:$0xff]
        %v282 = vld [vmem:[%s186 + $0x1f8] sm:$0xff]
        %v283 = vld [vmem:[%s186 + $0x200] sm:$0xff]
        %v284 = vld [vmem:[%s186 + $0x208] sm:$0xff]
        %v285 = vld [vmem:[%s186 + $0x210] sm:$0xff]
        %v286 = vld [vmem:[%s186 + $0x218] sm:$0xff]
        %v287 = vld [vmem:[%s186 + $0x220] sm:$0xff]
        %v288 = vld [vmem:[%s186 + $0x228] sm:$0xff]
        %v289 = vld [vmem:[%s186 + $0x230] sm:$0xff]
        %v290 = vld [vmem:[%s186 + $0x238] sm:$0xff]
        %v291 = vld [vmem:[%s186 + $0x240] sm:$0xff]
        %v292 = vld [vmem:[%s186 + $0x248] sm:$0xff]
        %v293 = vld [vmem:[%s186 + $0x250] sm:$0xff]
        %v294 = vld [vmem:[%s186 + $0x258] sm:$0xff]
        %v295 = vld [vmem:[%s186 + $0x260] sm:$0xff]
        %v296 = vld [vmem:[%s186 + $0x268] sm:$0xff]
        %v297 = vld [vmem:[%s186 + $0x270] sm:$0xff]
        %v298 = vld [vmem:[%s186 + $0x278] sm:$0xff]
        %v299 = vld [vmem:[%s186 + $0x280] sm:$0xff]
        %v300 = vld [vmem:[%s186 + $0x288] sm:$0xff]
        %v301 = vld [vmem:[%s186 + $0x290] sm:$0xff]
        %v302 = vld [vmem:[%s186 + $0x298] sm:$0xff]
        %v303 = vld [vmem:[%s186 + $0x2a0] sm:$0xff]
        %v304 = vld [vmem:[%s186 + $0x2a8] sm:$0xff]
        %v305 = vld [vmem:[%s186 + $0x2b0] sm:$0xff]
        %v306 = vld [vmem:[%s186 + $0x2b8] sm:$0xff]
        %v307 = vld [vmem:[%s186 + $0x2c0] sm:$0xff]
        %v308 = vld [vmem:[%s186 + $0x2c8] sm:$0xff]
        %v309 = vld [vmem:[%s186 + $0x2d0] sm:$0xff]
        %v310 = vld [vmem:[%s186 + $0x2d8] sm:$0xff]
        %v311 = vld [vmem:[%s186 + $0x2e0] sm:$0xff]
        %v312 = vld [vmem:[%s186 + $0x2e8] sm:$0xff]
        %v313 = vld [vmem:[%s186 + $0x2f0] sm:$0xff]
        %v314 = vld [vmem:[%s186 + $0x2f8] sm:$0xff]
        %v315 = vld [vmem:[#allocation5] sm:$0xff]
        %v316 = vld [vmem:[#allocation5 + $0x8] sm:$0xff]
        %v317 = vld [vmem:[#allocation5 + $0x10] sm:$0xff]
        %v318 = vld [vmem:[#allocation5 + $0x18] sm:$0xff]
        %v319 = vld [vmem:[#allocation5 + $0x20] sm:$0xff]
        %v320 = vld [vmem:[#allocation5 + $0x28] sm:$0xff]
        %v321 = vld [vmem:[#allocation5 + $0x30] sm:$0xff]
        %v322 = vld [vmem:[#allocation5 + $0x38] sm:$0xff]
        %v323 = vld [vmem:[#allocation5 + $0x40] sm:$0xff]
        %v324 = vld [vmem:[#allocation5 + $0x48] sm:$0xff]
        %v325 = vld [vmem:[#allocation5 + $0x50] sm:$0xff]
        %v326 = vld [vmem:[#allocation5 + $0x58] sm:$0xff]
        %v327 = vld [vmem:[#allocation5 + $0x60] sm:$0xff]
        %v328 = vld [vmem:[#allocation5 + $0x68] sm:$0xff]
        %v329 = vld [vmem:[#allocation5 + $0x70] sm:$0xff]
        %v330 = vld [vmem:[#allocation5 + $0x78] sm:$0xff]
        %v331 = vld [vmem:[#allocation5 + $0x80] sm:$0xff]
        %v332 = vld [vmem:[#allocation5 + $0x88] sm:$0xff]
        %v333 = vld [vmem:[#allocation5 + $0x90] sm:$0xff]
        %v334 = vld [vmem:[#allocation5 + $0x98] sm:$0xff]
        %v335 = vld [vmem:[#allocation5 + $0xa0] sm:$0xff]
        %v336 = vld [vmem:[#allocation5 + $0xa8] sm:$0xff]
        %v337 = vld [vmem:[#allocation5 + $0xb0] sm:$0xff]
        %v338 = vld [vmem:[#allocation5 + $0xb8] sm:$0xff]
        %v339 = vld [vmem:[#allocation5 + $0xc0] sm:$0xff]
        %v340 = vld [vmem:[#allocation5 + $0xc8] sm:$0xff]
        %v341 = vld [vmem:[#allocation5 + $0xd0] sm:$0xff]
        %v342 = vld [vmem:[#allocation5 + $0xd8] sm:$0xff]
        %v343 = vld [vmem:[#allocation5 + $0xe0] sm:$0xff]
        %v344 = vld [vmem:[#allocation5 + $0xe8] sm:$0xff]
        %v345 = vld [vmem:[#allocation5 + $0xf0] sm:$0xff]
        %v346 = vld [vmem:[#allocation5 + $0xf8] sm:$0xff]
        %v347 = vld [vmem:[#allocation5 + $0x100] sm:$0xff]
        %v348 = vld [vmem:[#allocation5 + $0x108] sm:$0xff]
        %v349 = vld [vmem:[#allocation5 + $0x110] sm:$0xff]
        %v350 = vld [vmem:[#allocation5 + $0x118] sm:$0xff]
        %v351 = vld [vmem:[#allocation5 + $0x120] sm:$0xff]
        %v352 = vld [vmem:[#allocation5 + $0x128] sm:$0xff]
        %v353 = vld [vmem:[#allocation5 + $0x130] sm:$0xff]
        %v354 = vld [vmem:[#allocation5 + $0x138] sm:$0xff]
        %v355 = vld [vmem:[#allocation5 + $0x140] sm:$0xff]
        %v356 = vld [vmem:[#allocation5 + $0x148] sm:$0xff]
        %v357 = vld [vmem:[#allocation5 + $0x150] sm:$0xff]
        %v358 = vld [vmem:[#allocation5 + $0x158] sm:$0xff]
        %v359 = vld [vmem:[#allocation5 + $0x160] sm:$0xff]
        %v360 = vld [vmem:[#allocation5 + $0x168] sm:$0xff]
        %v361 = vld [vmem:[#allocation5 + $0x170] sm:$0xff]
        %v362 = vld [vmem:[#allocation5 + $0x178] sm:$0xff]
        %v363 = vld [vmem:[#allocation5 + $0x180] sm:$0xff]
        %v364 = vld [vmem:[#allocation5 + $0x188] sm:$0xff]
        %v365 = vld [vmem:[#allocation5 + $0x190] sm:$0xff]
        %v366 = vld [vmem:[#allocation5 + $0x198] sm:$0xff]
        %v367 = vld [vmem:[#allocation5 + $0x1a0] sm:$0xff]
        %v368 = vld [vmem:[#allocation5 + $0x1a8] sm:$0xff]
        %v369 = vld [vmem:[#allocation5 + $0x1b0] sm:$0xff]
        %v370 = vld [vmem:[#allocation5 + $0x1b8] sm:$0xff]
        %v371 = vld [vmem:[#allocation5 + $0x1c0] sm:$0xff]
        %v372 = vld [vmem:[#allocation5 + $0x1c8] sm:$0xff]
        %v373 = vld [vmem:[#allocation5 + $0x1d0] sm:$0xff]
        %v374 = vld [vmem:[#allocation5 + $0x1d8] sm:$0xff]
        %v375 = vld [vmem:[#allocation5 + $0x1e0] sm:$0xff]
        %v376 = vld [vmem:[#allocation5 + $0x1e8] sm:$0xff]
        %v377 = vld [vmem:[#allocation5 + $0x1f0] sm:$0xff]
        %v378 = vld [vmem:[#allocation5 + $0x1f8] sm:$0xff]
        %v379 = vld [vmem:[#allocation5 + $0x200] sm:$0xff]
        %v380 = vld [vmem:[#allocation5 + $0x208] sm:$0xff]
        %v381 = vld [vmem:[#allocation5 + $0x210] sm:$0xff]
        %v382 = vld [vmem:[#allocation5 + $0x218] sm:$0xff]
        %v383 = vld [vmem:[#allocation5 + $0x220] sm:$0xff]
        %v384 = vld [vmem:[#allocation5 + $0x228] sm:$0xff]
        %v385 = vld [vmem:[#allocation5 + $0x230] sm:$0xff]
        %v386 = vld [vmem:[#allocation5 + $0x238] sm:$0xff]
        %v387 = vld [vmem:[#allocation5 + $0x240] sm:$0xff]
        %v388 = vld [vmem:[#allocation5 + $0x248] sm:$0xff]
        %v389 = vld [vmem:[#allocation5 + $0x250] sm:$0xff]
        %v390 = vld [vmem:[#allocation5 + $0x258] sm:$0xff]
        %v391 = vld [vmem:[#allocation5 + $0x260] sm:$0xff]
        %v392 = vld [vmem:[#allocation5 + $0x268] sm:$0xff]
        %v393 = vld [vmem:[#allocation5 + $0x270] sm:$0xff]
        %v394 = vld [vmem:[#allocation5 + $0x278] sm:$0xff]
        %v395 = vld [vmem:[#allocation5 + $0x280] sm:$0xff]
        %v396 = vld [vmem:[#allocation5 + $0x288] sm:$0xff]
        %v397 = vld [vmem:[#allocation5 + $0x290] sm:$0xff]
        %v398 = vld [vmem:[#allocation5 + $0x298] sm:$0xff]
        %v399 = vld [vmem:[#allocation5 + $0x2a0] sm:$0xff]
        %v400 = vld [vmem:[#allocation5 + $0x2a8] sm:$0xff]
        %v401 = vld [vmem:[#allocation5 + $0x2b0] sm:$0xff]
        %v402 = vld [vmem:[#allocation5 + $0x2b8] sm:$0xff]
        %v403 = vld [vmem:[#allocation5 + $0x2c0] sm:$0xff]
        %v404 = vld [vmem:[#allocation5 + $0x2c8] sm:$0xff]
        %v405 = vld [vmem:[#allocation5 + $0x2d0] sm:$0xff]
        %v406 = vld [vmem:[#allocation5 + $0x2d8] sm:$0xff]
        %v407 = vld [vmem:[#allocation5 + $0x2e0] sm:$0xff]
        %v408 = vld [vmem:[#allocation5 + $0x2e8] sm:$0xff]
        %v409 = vld [vmem:[#allocation5 + $0x2f0] sm:$0xff]
        %v410 = vld [vmem:[#allocation5 + $0x2f8] sm:$0xff]
        %s411 = scalar_lea.vmem [#allocation5], 768
        %v412 = vld [vmem:[%s411] sm:$0xff]
        %v413 = vld [vmem:[%s411 + $0x8] sm:$0xff]
        %v414 = vld [vmem:[%s411 + $0x10] sm:$0xff]
        %v415 = vld [vmem:[%s411 + $0x18] sm:$0xff]
        %v416 = vld [vmem:[%s411 + $0x20] sm:$0xff]
        %v417 = vld [vmem:[%s411 + $0x28] sm:$0xff]
        %v418 = vld [vmem:[%s411 + $0x30] sm:$0xff]
        %v419 = vld [vmem:[%s411 + $0x38] sm:$0xff]
        %v420 = vld [vmem:[%s411 + $0x40] sm:$0xff]
        %v421 = vld [vmem:[%s411 + $0x48] sm:$0xff]
        %v422 = vld [vmem:[%s411 + $0x50] sm:$0xff]
        %v423 = vld [vmem:[%s411 + $0x58] sm:$0xff]
        %v424 = vld [vmem:[%s411 + $0x60] sm:$0xff]
        %v425 = vld [vmem:[%s411 + $0x68] sm:$0xff]
        %v426 = vld [vmem:[%s411 + $0x70] sm:$0xff]
        %v427 = vld [vmem:[%s411 + $0x78] sm:$0xff]
        %v428 = vld [vmem:[%s411 + $0x80] sm:$0xff]
        %v429 = vld [vmem:[%s411 + $0x88] sm:$0xff]
        %v430 = vld [vmem:[%s411 + $0x90] sm:$0xff]
        %v431 = vld [vmem:[%s411 + $0x98] sm:$0xff]
        %v432 = vld [vmem:[%s411 + $0xa0] sm:$0xff]
        %v433 = vld [vmem:[%s411 + $0xa8] sm:$0xff]
        %v434 = vld [vmem:[%s411 + $0xb0] sm:$0xff]
        %v435 = vld [vmem:[%s411 + $0xb8] sm:$0xff]
        %v436 = vld [vmem:[%s411 + $0xc0] sm:$0xff]
        %v437 = vld [vmem:[%s411 + $0xc8] sm:$0xff]
        %v438 = vld [vmem:[%s411 + $0xd0] sm:$0xff]
        %v439 = vld [vmem:[%s411 + $0xd8] sm:$0xff]
        %v440 = vld [vmem:[%s411 + $0xe0] sm:$0xff]
        %v441 = vld [vmem:[%s411 + $0xe8] sm:$0xff]
        %v442 = vld [vmem:[%s411 + $0xf0] sm:$0xff]
        %v443 = vld [vmem:[%s411 + $0xf8] sm:$0xff]
        %v444 = vld [vmem:[%s411 + $0x100] sm:$0xff]
        %v445 = vld [vmem:[%s411 + $0x108] sm:$0xff]
        %v446 = vld [vmem:[%s411 + $0x110] sm:$0xff]
        %v447 = vld [vmem:[%s411 + $0x118] sm:$0xff]
        %v448 = vld [vmem:[%s411 + $0x120] sm:$0xff]
        %v449 = vld [vmem:[%s411 + $0x128] sm:$0xff]
        %v450 = vld [vmem:[%s411 + $0x130] sm:$0xff]
        %v451 = vld [vmem:[%s411 + $0x138] sm:$0xff]
        %v452 = vld [vmem:[%s411 + $0x140] sm:$0xff]
        %v453 = vld [vmem:[%s411 + $0x148] sm:$0xff]
        %v454 = vld [vmem:[%s411 + $0x150] sm:$0xff]
        %v455 = vld [vmem:[%s411 + $0x158] sm:$0xff]
        %v456 = vld [vmem:[%s411 + $0x160] sm:$0xff]
        %v457 = vld [vmem:[%s411 + $0x168] sm:$0xff]
        %v458 = vld [vmem:[%s411 + $0x170] sm:$0xff]
        %v459 = vld [vmem:[%s411 + $0x178] sm:$0xff]
        %v460 = vld [vmem:[%s411 + $0x180] sm:$0xff]
        %v461 = vld [vmem:[%s411 + $0x188] sm:$0xff]
        %v462 = vld [vmem:[%s411 + $0x190] sm:$0xff]
        %v463 = vld [vmem:[%s411 + $0x198] sm:$0xff]
        %v464 = vld [vmem:[%s411 + $0x1a0] sm:$0xff]
        %v465 = vld [vmem:[%s411 + $0x1a8] sm:$0xff]
        %v466 = vld [vmem:[%s411 + $0x1b0] sm:$0xff]
        %v467 = vld [vmem:[%s411 + $0x1b8] sm:$0xff]
        %v468 = vld [vmem:[%s411 + $0x1c0] sm:$0xff]
        %v469 = vld [vmem:[%s411 + $0x1c8] sm:$0xff]
        %v470 = vld [vmem:[%s411 + $0x1d0] sm:$0xff]
        %v471 = vld [vmem:[%s411 + $0x1d8] sm:$0xff]
        %v472 = vld [vmem:[%s411 + $0x1e0] sm:$0xff]
        %v473 = vld [vmem:[%s411 + $0x1e8] sm:$0xff]
        %v474 = vld [vmem:[%s411 + $0x1f0] sm:$0xff]
        %v475 = vld [vmem:[%s411 + $0x1f8] sm:$0xff]
        %v476 = vld [vmem:[%s411 + $0x200] sm:$0xff]
        %v477 = vld [vmem:[%s411 + $0x208] sm:$0xff]
        %v478 = vld [vmem:[%s411 + $0x210] sm:$0xff]
        %v479 = vld [vmem:[%s411 + $0x218] sm:$0xff]
        %v480 = vld [vmem:[%s411 + $0x220] sm:$0xff]
        %v481 = vld [vmem:[%s411 + $0x228] sm:$0xff]
        %v482 = vld [vmem:[%s411 + $0x230] sm:$0xff]
        %v483 = vld [vmem:[%s411 + $0x238] sm:$0xff]
        %v484 = vld [vmem:[%s411 + $0x240] sm:$0xff]
        %v485 = vld [vmem:[%s411 + $0x248] sm:$0xff]
        %v486 = vld [vmem:[%s411 + $0x250] sm:$0xff]
        %v487 = vld [vmem:[%s411 + $0x258] sm:$0xff]
        %v488 = vld [vmem:[%s411 + $0x260] sm:$0xff]
        %v489 = vld [vmem:[%s411 + $0x268] sm:$0xff]
        %v490 = vld [vmem:[%s411 + $0x270] sm:$0xff]
        %v491 = vld [vmem:[%s411 + $0x278] sm:$0xff]
        %v492 = vld [vmem:[%s411 + $0x280] sm:$0xff]
        %v493 = vld [vmem:[%s411 + $0x288] sm:$0xff]
        %v494 = vld [vmem:[%s411 + $0x290] sm:$0xff]
        %v495 = vld [vmem:[%s411 + $0x298] sm:$0xff]
        %v496 = vld [vmem:[%s411 + $0x2a0] sm:$0xff]
        %v497 = vld [vmem:[%s411 + $0x2a8] sm:$0xff]
        %v498 = vld [vmem:[%s411 + $0x2b0] sm:$0xff]
        %v499 = vld [vmem:[%s411 + $0x2b8] sm:$0xff]
        %v500 = vld [vmem:[%s411 + $0x2c0] sm:$0xff]
        %v501 = vld [vmem:[%s411 + $0x2c8] sm:$0xff]
        %v502 = vld [vmem:[%s411 + $0x2d0] sm:$0xff]
        %v503 = vld [vmem:[%s411 + $0x2d8] sm:$0xff]
        %v504 = vld [vmem:[%s411 + $0x2e0] sm:$0xff]
        %v505 = vld [vmem:[%s411 + $0x2e8] sm:$0xff]
        %v506 = vld [vmem:[%s411 + $0x2f0] sm:$0xff]
        %v507 = vld [vmem:[%s411 + $0x2f8] sm:$0xff]
        %v604 = vunpack.c.l.b16 %v219
        %v605 = vunpack.c.h.b16 %v219
        %v606 = vunpack.c.l.b16 %v220
        %v607 = vunpack.c.h.b16 %v220
        %v608 = vunpack.c.l.b16 %v221
        %v609 = vunpack.c.h.b16 %v221
        %v610 = vunpack.c.l.b16 %v222
        %v611 = vunpack.c.h.b16 %v222
        %v612 = vunpack.c.l.b16 %v223
        %v613 = vunpack.c.h.b16 %v223
        %v614 = vunpack.c.l.b16 %v224
        %v615 = vunpack.c.h.b16 %v224
        %v616 = vunpack.c.l.b16 %v225
        %v617 = vunpack.c.h.b16 %v225
        %v618 = vunpack.c.l.b16 %v226
        %v619 = vunpack.c.h.b16 %v226
        %v620 = vunpack.c.l.b16 %v227
        %v621 = vunpack.c.h.b16 %v227
        %v622 = vunpack.c.l.b16 %v228
        %v623 = vunpack.c.h.b16 %v228
        %v624 = vunpack.c.l.b16 %v229
        %v625 = vunpack.c.h.b16 %v229
        %v626 = vunpack.c.l.b16 %v230
        %v627 = vunpack.c.h.b16 %v230
        %v628 = vunpack.c.l.b16 %v231
        %v629 = vunpack.c.h.b16 %v231
        %v630 = vunpack.c.l.b16 %v232
        %v631 = vunpack.c.h.b16 %v232
        %v632 = vunpack.c.l.b16 %v233
        %v633 = vunpack.c.h.b16 %v233
        %v634 = vunpack.c.l.b16 %v234
        %v635 = vunpack.c.h.b16 %v234
        %v636 = vunpack.c.l.b16 %v235
        %v637 = vunpack.c.h.b16 %v235
        %v638 = vunpack.c.l.b16 %v236
        %v639 = vunpack.c.h.b16 %v236
        %v640 = vunpack.c.l.b16 %v237
        %v641 = vunpack.c.h.b16 %v237
        %v642 = vunpack.c.l.b16 %v238
        %v643 = vunpack.c.h.b16 %v238
        %v644 = vunpack.c.l.b16 %v239
        %v645 = vunpack.c.h.b16 %v239
        %v646 = vunpack.c.l.b16 %v240
        %v647 = vunpack.c.h.b16 %v240
        %v648 = vunpack.c.l.b16 %v241
        %v649 = vunpack.c.h.b16 %v241
        %v650 = vunpack.c.l.b16 %v242
        %v651 = vunpack.c.h.b16 %v242
        %v652 = vunpack.c.l.b16 %v243
        %v653 = vunpack.c.h.b16 %v243
        %v654 = vunpack.c.l.b16 %v244
        %v655 = vunpack.c.h.b16 %v244
        %v656 = vunpack.c.l.b16 %v245
        %v657 = vunpack.c.h.b16 %v245
        %v658 = vunpack.c.l.b16 %v246
        %v659 = vunpack.c.h.b16 %v246
        %v660 = vunpack.c.l.b16 %v247
        %v661 = vunpack.c.h.b16 %v247
        %v662 = vunpack.c.l.b16 %v248
        %v663 = vunpack.c.h.b16 %v248
        %v664 = vunpack.c.l.b16 %v249
        %v665 = vunpack.c.h.b16 %v249
        %v666 = vunpack.c.l.b16 %v250
        %v667 = vunpack.c.h.b16 %v250
        %v668 = vunpack.c.l.b16 %v251
        %v669 = vunpack.c.h.b16 %v251
        %v670 = vunpack.c.l.b16 %v252
        %v671 = vunpack.c.h.b16 %v252
        %v672 = vunpack.c.l.b16 %v253
        %v673 = vunpack.c.h.b16 %v253
        %v674 = vunpack.c.l.b16 %v254
        %v675 = vunpack.c.h.b16 %v254
        %v676 = vunpack.c.l.b16 %v255
        %v677 = vunpack.c.h.b16 %v255
        %v678 = vunpack.c.l.b16 %v256
        %v679 = vunpack.c.h.b16 %v256
        %v680 = vunpack.c.l.b16 %v257
        %v681 = vunpack.c.h.b16 %v257
        %v682 = vunpack.c.l.b16 %v258
        %v683 = vunpack.c.h.b16 %v258
        %v684 = vunpack.c.l.b16 %v259
        %v685 = vunpack.c.h.b16 %v259
        %v686 = vunpack.c.l.b16 %v260
        %v687 = vunpack.c.h.b16 %v260
        %v688 = vunpack.c.l.b16 %v261
        %v689 = vunpack.c.h.b16 %v261
        %v690 = vunpack.c.l.b16 %v262
        %v691 = vunpack.c.h.b16 %v262
        %v692 = vunpack.c.l.b16 %v263
        %v693 = vunpack.c.h.b16 %v263
        %v694 = vunpack.c.l.b16 %v264
        %v695 = vunpack.c.h.b16 %v264
        %v696 = vunpack.c.l.b16 %v265
        %v697 = vunpack.c.h.b16 %v265
        %v698 = vunpack.c.l.b16 %v266
        %v699 = vunpack.c.h.b16 %v266
        %v700 = vunpack.c.l.b16 %v267
        %v701 = vunpack.c.h.b16 %v267
        %v702 = vunpack.c.l.b16 %v268
        %v703 = vunpack.c.h.b16 %v268
        %v704 = vunpack.c.l.b16 %v269
        %v705 = vunpack.c.h.b16 %v269
        %v706 = vunpack.c.l.b16 %v270
        %v707 = vunpack.c.h.b16 %v270
        %v708 = vunpack.c.l.b16 %v271
        %v709 = vunpack.c.h.b16 %v271
        %v710 = vunpack.c.l.b16 %v272
        %v711 = vunpack.c.h.b16 %v272
        %v712 = vunpack.c.l.b16 %v273
        %v713 = vunpack.c.h.b16 %v273
        %v714 = vunpack.c.l.b16 %v274
        %v715 = vunpack.c.h.b16 %v274
        %v716 = vunpack.c.l.b16 %v275
        %v717 = vunpack.c.h.b16 %v275
        %v718 = vunpack.c.l.b16 %v276
        %v719 = vunpack.c.h.b16 %v276
        %v720 = vunpack.c.l.b16 %v277
        %v721 = vunpack.c.h.b16 %v277
        %v722 = vunpack.c.l.b16 %v278
        %v723 = vunpack.c.h.b16 %v278
        %v724 = vunpack.c.l.b16 %v279
        %v725 = vunpack.c.h.b16 %v279
        %v726 = vunpack.c.l.b16 %v280
        %v727 = vunpack.c.h.b16 %v280
        %v728 = vunpack.c.l.b16 %v281
        %v729 = vunpack.c.h.b16 %v281
        %v730 = vunpack.c.l.b16 %v282
        %v731 = vunpack.c.h.b16 %v282
        %v732 = vunpack.c.l.b16 %v283
        %v733 = vunpack.c.h.b16 %v283
        %v734 = vunpack.c.l.b16 %v284
        %v735 = vunpack.c.h.b16 %v284
        %v736 = vunpack.c.l.b16 %v285
        %v737 = vunpack.c.h.b16 %v285
        %v738 = vunpack.c.l.b16 %v286
        %v739 = vunpack.c.h.b16 %v286
        %v740 = vunpack.c.l.b16 %v287
        %v741 = vunpack.c.h.b16 %v287
        %v742 = vunpack.c.l.b16 %v288
        %v743 = vunpack.c.h.b16 %v288
        %v744 = vunpack.c.l.b16 %v289
        %v745 = vunpack.c.h.b16 %v289
        %v746 = vunpack.c.l.b16 %v290
        %v747 = vunpack.c.h.b16 %v290
        %v748 = vunpack.c.l.b16 %v291
        %v749 = vunpack.c.h.b16 %v291
        %v750 = vunpack.c.l.b16 %v292
        %v751 = vunpack.c.h.b16 %v292
        %v752 = vunpack.c.l.b16 %v293
        %v753 = vunpack.c.h.b16 %v293
        %v754 = vunpack.c.l.b16 %v294
        %v755 = vunpack.c.h.b16 %v294
        %v756 = vunpack.c.l.b16 %v295
        %v757 = vunpack.c.h.b16 %v295
        %v758 = vunpack.c.l.b16 %v296
        %v759 = vunpack.c.h.b16 %v296
        %v760 = vunpack.c.l.b16 %v297
        %v761 = vunpack.c.h.b16 %v297
        %v762 = vunpack.c.l.b16 %v298
        %v763 = vunpack.c.h.b16 %v298
        %v764 = vunpack.c.l.b16 %v299
        %v765 = vunpack.c.h.b16 %v299
        %v766 = vunpack.c.l.b16 %v300
        %v767 = vunpack.c.h.b16 %v300
        %v768 = vunpack.c.l.b16 %v301
        %v769 = vunpack.c.h.b16 %v301
        %v770 = vunpack.c.l.b16 %v302
        %v771 = vunpack.c.h.b16 %v302
        %v772 = vunpack.c.l.b16 %v303
        %v773 = vunpack.c.h.b16 %v303
        %v774 = vunpack.c.l.b16 %v304
        %v775 = vunpack.c.h.b16 %v304
        %v776 = vunpack.c.l.b16 %v305
        %v777 = vunpack.c.h.b16 %v305
        %v778 = vunpack.c.l.b16 %v306
        %v779 = vunpack.c.h.b16 %v306
        %v780 = vunpack.c.l.b16 %v307
        %v781 = vunpack.c.h.b16 %v307
        %v782 = vunpack.c.l.b16 %v308
        %v783 = vunpack.c.h.b16 %v308
        %v784 = vunpack.c.l.b16 %v309
        %v785 = vunpack.c.h.b16 %v309
        %v786 = vunpack.c.l.b16 %v310
        %v787 = vunpack.c.h.b16 %v310
        %v788 = vunpack.c.l.b16 %v311
        %v789 = vunpack.c.h.b16 %v311
        %v790 = vunpack.c.l.b16 %v312
        %v791 = vunpack.c.h.b16 %v312
        %v792 = vunpack.c.l.b16 %v313
        %v793 = vunpack.c.h.b16 %v313
        %v794 = vunpack.c.l.b16 %v314
        %v795 = vunpack.c.h.b16 %v314
        %v796 = vpack.c.b16 %v610, %v604
        %v797 = vpack.c.b16 %v611, %v605
        %v798 = vpack.c.b16 %v612, %v606
        %v799 = vpack.c.b16 %v613, %v607
        %v800 = vpack.c.b16 %v614, %v608
        %v801 = vpack.c.b16 %v615, %v609
        %v802 = vpack.c.b16 %v622, %v616
        %v803 = vpack.c.b16 %v623, %v617
        %v804 = vpack.c.b16 %v624, %v618
        %v805 = vpack.c.b16 %v625, %v619
        %v806 = vpack.c.b16 %v626, %v620
        %v807 = vpack.c.b16 %v627, %v621
        %v808 = vpack.c.b16 %v634, %v628
        %v809 = vpack.c.b16 %v635, %v629
        %v810 = vpack.c.b16 %v636, %v630
        %v811 = vpack.c.b16 %v637, %v631
        %v812 = vpack.c.b16 %v638, %v632
        %v813 = vpack.c.b16 %v639, %v633
        %v814 = vpack.c.b16 %v646, %v640
        %v815 = vpack.c.b16 %v647, %v641
        %v816 = vpack.c.b16 %v648, %v642
        %v817 = vpack.c.b16 %v649, %v643
        %v818 = vpack.c.b16 %v650, %v644
        %v819 = vpack.c.b16 %v651, %v645
        %v820 = vpack.c.b16 %v658, %v652
        %v821 = vpack.c.b16 %v659, %v653
        %v822 = vpack.c.b16 %v660, %v654
        %v823 = vpack.c.b16 %v661, %v655
        %v824 = vpack.c.b16 %v662, %v656
        %v825 = vpack.c.b16 %v663, %v657
        %v826 = vpack.c.b16 %v670, %v664
        %v827 = vpack.c.b16 %v671, %v665
        %v828 = vpack.c.b16 %v672, %v666
        %v829 = vpack.c.b16 %v673, %v667
        %v830 = vpack.c.b16 %v674, %v668
        %v831 = vpack.c.b16 %v675, %v669
        %v832 = vpack.c.b16 %v682, %v676
        %v833 = vpack.c.b16 %v683, %v677
        %v834 = vpack.c.b16 %v684, %v678
        %v835 = vpack.c.b16 %v685, %v679
        %v836 = vpack.c.b16 %v686, %v680
        %v837 = vpack.c.b16 %v687, %v681
        %v838 = vpack.c.b16 %v694, %v688
        %v839 = vpack.c.b16 %v695, %v689
        %v840 = vpack.c.b16 %v696, %v690
        %v841 = vpack.c.b16 %v697, %v691
        %v842 = vpack.c.b16 %v698, %v692
        %v843 = vpack.c.b16 %v699, %v693
        %v844 = vpack.c.b16 %v706, %v700
        %v845 = vpack.c.b16 %v707, %v701
        %v846 = vpack.c.b16 %v708, %v702
        %v847 = vpack.c.b16 %v709, %v703
        %v848 = vpack.c.b16 %v710, %v704
        %v849 = vpack.c.b16 %v711, %v705
        %v850 = vpack.c.b16 %v718, %v712
        %v851 = vpack.c.b16 %v719, %v713
        %v852 = vpack.c.b16 %v720, %v714
        %v853 = vpack.c.b16 %v721, %v715
        %v854 = vpack.c.b16 %v722, %v716
        %v855 = vpack.c.b16 %v723, %v717
        %v856 = vpack.c.b16 %v730, %v724
        %v857 = vpack.c.b16 %v731, %v725
        %v858 = vpack.c.b16 %v732, %v726
        %v859 = vpack.c.b16 %v733, %v727
        %v860 = vpack.c.b16 %v734, %v728
        %v861 = vpack.c.b16 %v735, %v729
        %v862 = vpack.c.b16 %v742, %v736
        %v863 = vpack.c.b16 %v743, %v737
        %v864 = vpack.c.b16 %v744, %v738
        %v865 = vpack.c.b16 %v745, %v739
        %v866 = vpack.c.b16 %v746, %v740
        %v867 = vpack.c.b16 %v747, %v741
        %v868 = vpack.c.b16 %v754, %v748
        %v869 = vpack.c.b16 %v755, %v749
        %v870 = vpack.c.b16 %v756, %v750
        %v871 = vpack.c.b16 %v757, %v751
        %v872 = vpack.c.b16 %v758, %v752
        %v873 = vpack.c.b16 %v759, %v753
        %v874 = vpack.c.b16 %v766, %v760
        %v875 = vpack.c.b16 %v767, %v761
        %v876 = vpack.c.b16 %v768, %v762
        %v877 = vpack.c.b16 %v769, %v763
        %v878 = vpack.c.b16 %v770, %v764
        %v879 = vpack.c.b16 %v771, %v765
        %v880 = vpack.c.b16 %v778, %v772
        %v881 = vpack.c.b16 %v779, %v773
        %v882 = vpack.c.b16 %v780, %v774
        %v883 = vpack.c.b16 %v781, %v775
        %v884 = vpack.c.b16 %v782, %v776
        %v885 = vpack.c.b16 %v783, %v777
        %v886 = vpack.c.b16 %v790, %v784
        %v887 = vpack.c.b16 %v791, %v785
        %v888 = vpack.c.b16 %v792, %v786
        %v889 = vpack.c.b16 %v793, %v787
        %v890 = vpack.c.b16 %v794, %v788
        %v891 = vpack.c.b16 %v795, %v789
        %v1084 = vunpack.c.l.b16 %v412
        %v1085 = vunpack.c.h.b16 %v412
        %v1086 = vunpack.c.l.b16 %v413
        %v1087 = vunpack.c.h.b16 %v413
        %v1088 = vunpack.c.l.b16 %v414
        %v1089 = vunpack.c.h.b16 %v414
        %v1090 = vunpack.c.l.b16 %v415
        %v1091 = vunpack.c.h.b16 %v415
        %v1092 = vunpack.c.l.b16 %v416
        %v1093 = vunpack.c.h.b16 %v416
        %v1094 = vunpack.c.l.b16 %v417
        %v1095 = vunpack.c.h.b16 %v417
        %v1096 = vunpack.c.l.b16 %v418
        %v1097 = vunpack.c.h.b16 %v418
        %v1098 = vunpack.c.l.b16 %v419
        %v1099 = vunpack.c.h.b16 %v419
        %v1100 = vunpack.c.l.b16 %v420
        %v1101 = vunpack.c.h.b16 %v420
        %v1102 = vunpack.c.l.b16 %v421
        %v1103 = vunpack.c.h.b16 %v421
        %v1104 = vunpack.c.l.b16 %v422
        %v1105 = vunpack.c.h.b16 %v422
        %v1106 = vunpack.c.l.b16 %v423
        %v1107 = vunpack.c.h.b16 %v423
        %v1108 = vunpack.c.l.b16 %v424
        %v1109 = vunpack.c.h.b16 %v424
        %v1110 = vunpack.c.l.b16 %v425
        %v1111 = vunpack.c.h.b16 %v425
        %v1112 = vunpack.c.l.b16 %v426
        %v1113 = vunpack.c.h.b16 %v426
        %v1114 = vunpack.c.l.b16 %v427
        %v1115 = vunpack.c.h.b16 %v427
        %v1116 = vunpack.c.l.b16 %v428
        %v1117 = vunpack.c.h.b16 %v428
        %v1118 = vunpack.c.l.b16 %v429
        %v1119 = vunpack.c.h.b16 %v429
        %v1120 = vunpack.c.l.b16 %v430
        %v1121 = vunpack.c.h.b16 %v430
        %v1122 = vunpack.c.l.b16 %v431
        %v1123 = vunpack.c.h.b16 %v431
        %v1124 = vunpack.c.l.b16 %v432
        %v1125 = vunpack.c.h.b16 %v432
        %v1126 = vunpack.c.l.b16 %v433
        %v1127 = vunpack.c.h.b16 %v433
        %v1128 = vunpack.c.l.b16 %v434
        %v1129 = vunpack.c.h.b16 %v434
        %v1130 = vunpack.c.l.b16 %v435
        %v1131 = vunpack.c.h.b16 %v435
        %v1132 = vunpack.c.l.b16 %v436
        %v1133 = vunpack.c.h.b16 %v436
        %v1134 = vunpack.c.l.b16 %v437
        %v1135 = vunpack.c.h.b16 %v437
        %v1136 = vunpack.c.l.b16 %v438
        %v1137 = vunpack.c.h.b16 %v438
        %v1138 = vunpack.c.l.b16 %v439
        %v1139 = vunpack.c.h.b16 %v439
        %v1140 = vunpack.c.l.b16 %v440
        %v1141 = vunpack.c.h.b16 %v440
        %v1142 = vunpack.c.l.b16 %v441
        %v1143 = vunpack.c.h.b16 %v441
        %v1144 = vunpack.c.l.b16 %v442
        %v1145 = vunpack.c.h.b16 %v442
        %v1146 = vunpack.c.l.b16 %v443
        %v1147 = vunpack.c.h.b16 %v443
        %v1148 = vunpack.c.l.b16 %v444
        %v1149 = vunpack.c.h.b16 %v444
        %v1150 = vunpack.c.l.b16 %v445
        %v1151 = vunpack.c.h.b16 %v445
        %v1152 = vunpack.c.l.b16 %v446
        %v1153 = vunpack.c.h.b16 %v446
        %v1154 = vunpack.c.l.b16 %v447
        %v1155 = vunpack.c.h.b16 %v447
        %v1156 = vunpack.c.l.b16 %v448
        %v1157 = vunpack.c.h.b16 %v448
        %v1158 = vunpack.c.l.b16 %v449
        %v1159 = vunpack.c.h.b16 %v449
        %v1160 = vunpack.c.l.b16 %v450
        %v1161 = vunpack.c.h.b16 %v450
        %v1162 = vunpack.c.l.b16 %v451
        %v1163 = vunpack.c.h.b16 %v451
        %v1164 = vunpack.c.l.b16 %v452
        %v1165 = vunpack.c.h.b16 %v452
        %v1166 = vunpack.c.l.b16 %v453
        %v1167 = vunpack.c.h.b16 %v453
        %v1168 = vunpack.c.l.b16 %v454
        %v1169 = vunpack.c.h.b16 %v454
        %v1170 = vunpack.c.l.b16 %v455
        %v1171 = vunpack.c.h.b16 %v455
        %v1172 = vunpack.c.l.b16 %v456
        %v1173 = vunpack.c.h.b16 %v456
        %v1174 = vunpack.c.l.b16 %v457
        %v1175 = vunpack.c.h.b16 %v457
        %v1176 = vunpack.c.l.b16 %v458
        %v1177 = vunpack.c.h.b16 %v458
        %v1178 = vunpack.c.l.b16 %v459
        %v1179 = vunpack.c.h.b16 %v459
        %v1180 = vunpack.c.l.b16 %v460
        %v1181 = vunpack.c.h.b16 %v460
        %v1182 = vunpack.c.l.b16 %v461
        %v1183 = vunpack.c.h.b16 %v461
        %v1184 = vunpack.c.l.b16 %v462
        %v1185 = vunpack.c.h.b16 %v462
        %v1186 = vunpack.c.l.b16 %v463
        %v1187 = vunpack.c.h.b16 %v463
        %v1188 = vunpack.c.l.b16 %v464
        %v1189 = vunpack.c.h.b16 %v464
        %v1190 = vunpack.c.l.b16 %v465
        %v1191 = vunpack.c.h.b16 %v465
        %v1192 = vunpack.c.l.b16 %v466
        %v1193 = vunpack.c.h.b16 %v466
        %v1194 = vunpack.c.l.b16 %v467
        %v1195 = vunpack.c.h.b16 %v467
        %v1196 = vunpack.c.l.b16 %v468
        %v1197 = vunpack.c.h.b16 %v468
        %v1198 = vunpack.c.l.b16 %v469
        %v1199 = vunpack.c.h.b16 %v469
        %v1200 = vunpack.c.l.b16 %v470
        %v1201 = vunpack.c.h.b16 %v470
        %v1202 = vunpack.c.l.b16 %v471
        %v1203 = vunpack.c.h.b16 %v471
        %v1204 = vunpack.c.l.b16 %v472
        %v1205 = vunpack.c.h.b16 %v472
        %v1206 = vunpack.c.l.b16 %v473
        %v1207 = vunpack.c.h.b16 %v473
        %v1208 = vunpack.c.l.b16 %v474
        %v1209 = vunpack.c.h.b16 %v474
        %v1210 = vunpack.c.l.b16 %v475
        %v1211 = vunpack.c.h.b16 %v475
        %v1212 = vunpack.c.l.b16 %v476
        %v1213 = vunpack.c.h.b16 %v476
        %v1214 = vunpack.c.l.b16 %v477
        %v1215 = vunpack.c.h.b16 %v477
        %v1216 = vunpack.c.l.b16 %v478
        %v1217 = vunpack.c.h.b16 %v478
        %v1218 = vunpack.c.l.b16 %v479
        %v1219 = vunpack.c.h.b16 %v479
        %v1220 = vunpack.c.l.b16 %v480
        %v1221 = vunpack.c.h.b16 %v480
        %v1222 = vunpack.c.l.b16 %v481
        %v1223 = vunpack.c.h.b16 %v481
        %v1224 = vunpack.c.l.b16 %v482
        %v1225 = vunpack.c.h.b16 %v482
        %v1226 = vunpack.c.l.b16 %v483
        %v1227 = vunpack.c.h.b16 %v483
        %v1228 = vunpack.c.l.b16 %v484
        %v1229 = vunpack.c.h.b16 %v484
        %v1230 = vunpack.c.l.b16 %v485
        %v1231 = vunpack.c.h.b16 %v485
        %v1232 = vunpack.c.l.b16 %v486
        %v1233 = vunpack.c.h.b16 %v486
        %v1234 = vunpack.c.l.b16 %v487
        %v1235 = vunpack.c.h.b16 %v487
        %v1236 = vunpack.c.l.b16 %v488
        %v1237 = vunpack.c.h.b16 %v488
        %v1238 = vunpack.c.l.b16 %v489
        %v1239 = vunpack.c.h.b16 %v489
        %v1240 = vunpack.c.l.b16 %v490
        %v1241 = vunpack.c.h.b16 %v490
        %v1242 = vunpack.c.l.b16 %v491
        %v1243 = vunpack.c.h.b16 %v491
        %v1244 = vunpack.c.l.b16 %v492
        %v1245 = vunpack.c.h.b16 %v492
        %v1246 = vunpack.c.l.b16 %v493
        %v1247 = vunpack.c.h.b16 %v493
        %v1248 = vunpack.c.l.b16 %v494
        %v1249 = vunpack.c.h.b16 %v494
        %v1250 = vunpack.c.l.b16 %v495
        %v1251 = vunpack.c.h.b16 %v495
        %v1252 = vunpack.c.l.b16 %v496
        %v1253 = vunpack.c.h.b16 %v496
        %v1254 = vunpack.c.l.b16 %v497
        %v1255 = vunpack.c.h.b16 %v497
        %v1256 = vunpack.c.l.b16 %v498
        %v1257 = vunpack.c.h.b16 %v498
        %v1258 = vunpack.c.l.b16 %v499
        %v1259 = vunpack.c.h.b16 %v499
        %v1260 = vunpack.c.l.b16 %v500
        %v1261 = vunpack.c.h.b16 %v500
        %v1262 = vunpack.c.l.b16 %v501
        %v1263 = vunpack.c.h.b16 %v501
        %v1264 = vunpack.c.l.b16 %v502
        %v1265 = vunpack.c.h.b16 %v502
        %v1266 = vunpack.c.l.b16 %v503
        %v1267 = vunpack.c.h.b16 %v503
        %v1268 = vunpack.c.l.b16 %v504
        %v1269 = vunpack.c.h.b16 %v504
        %v1270 = vunpack.c.l.b16 %v505
        %v1271 = vunpack.c.h.b16 %v505
        %v1272 = vunpack.c.l.b16 %v506
        %v1273 = vunpack.c.h.b16 %v506
        %v1274 = vunpack.c.l.b16 %v507
        %v1275 = vunpack.c.h.b16 %v507
        %v1276 = vpack.c.b16 %v1086, %v1084
        %v1277 = vpack.c.b16 %v1087, %v1085
        %v1278 = vpack.c.b16 %v1090, %v1088
        %v1279 = vpack.c.b16 %v1091, %v1089
        %v1280 = vpack.c.b16 %v1094, %v1092
        %v1281 = vpack.c.b16 %v1095, %v1093
        %v1282 = vpack.c.b16 %v1098, %v1096
        %v1283 = vpack.c.b16 %v1099, %v1097
        %v1284 = vpack.c.b16 %v1102, %v1100
        %v1285 = vpack.c.b16 %v1103, %v1101
        %v1286 = vpack.c.b16 %v1106, %v1104
        %v1287 = vpack.c.b16 %v1107, %v1105
        %v1288 = vpack.c.b16 %v1110, %v1108
        %v1289 = vpack.c.b16 %v1111, %v1109
        %v1290 = vpack.c.b16 %v1114, %v1112
        %v1291 = vpack.c.b16 %v1115, %v1113
        %v1292 = vpack.c.b16 %v1118, %v1116
        %v1293 = vpack.c.b16 %v1119, %v1117
        %v1294 = vpack.c.b16 %v1122, %v1120
        %v1295 = vpack.c.b16 %v1123, %v1121
        %v1296 = vpack.c.b16 %v1126, %v1124
        %v1297 = vpack.c.b16 %v1127, %v1125
        %v1298 = vpack.c.b16 %v1130, %v1128
        %v1299 = vpack.c.b16 %v1131, %v1129
        %v1300 = vpack.c.b16 %v1134, %v1132
        %v1301 = vpack.c.b16 %v1135, %v1133
        %v1302 = vpack.c.b16 %v1138, %v1136
        %v1303 = vpack.c.b16 %v1139, %v1137
        %v1304 = vpack.c.b16 %v1142, %v1140
        %v1305 = vpack.c.b16 %v1143, %v1141
        %v1306 = vpack.c.b16 %v1146, %v1144
        %v1307 = vpack.c.b16 %v1147, %v1145
        %v1308 = vpack.c.b16 %v1150, %v1148
        %v1309 = vpack.c.b16 %v1151, %v1149
        %v1310 = vpack.c.b16 %v1154, %v1152
        %v1311 = vpack.c.b16 %v1155, %v1153
        %v1312 = vpack.c.b16 %v1158, %v1156
        %v1313 = vpack.c.b16 %v1159, %v1157
        %v1314 = vpack.c.b16 %v1162, %v1160
        %v1315 = vpack.c.b16 %v1163, %v1161
        %v1316 = vpack.c.b16 %v1166, %v1164
        %v1317 = vpack.c.b16 %v1167, %v1165
        %v1318 = vpack.c.b16 %v1170, %v1168
        %v1319 = vpack.c.b16 %v1171, %v1169
        %v1320 = vpack.c.b16 %v1174, %v1172
        %v1321 = vpack.c.b16 %v1175, %v1173
        %v1322 = vpack.c.b16 %v1178, %v1176
        %v1323 = vpack.c.b16 %v1179, %v1177
        %v1324 = vpack.c.b16 %v1182, %v1180
        %v1325 = vpack.c.b16 %v1183, %v1181
        %v1326 = vpack.c.b16 %v1186, %v1184
        %v1327 = vpack.c.b16 %v1187, %v1185
        %v1328 = vpack.c.b16 %v1190, %v1188
        %v1329 = vpack.c.b16 %v1191, %v1189
        %v1330 = vpack.c.b16 %v1194, %v1192
        %v1331 = vpack.c.b16 %v1195, %v1193
        %v1332 = vpack.c.b16 %v1198, %v1196
        %v1333 = vpack.c.b16 %v1199, %v1197
        %v1334 = vpack.c.b16 %v1202, %v1200
        %v1335 = vpack.c.b16 %v1203, %v1201
        %v1336 = vpack.c.b16 %v1206, %v1204
        %v1337 = vpack.c.b16 %v1207, %v1205
        %v1338 = vpack.c.b16 %v1210, %v1208
        %v1339 = vpack.c.b16 %v1211, %v1209
        %v1340 = vpack.c.b16 %v1214, %v1212
        %v1341 = vpack.c.b16 %v1215, %v1213
        %v1342 = vpack.c.b16 %v1218, %v1216
        %v1343 = vpack.c.b16 %v1219, %v1217
        %v1344 = vpack.c.b16 %v1222, %v1220
        %v1345 = vpack.c.b16 %v1223, %v1221
        %v1346 = vpack.c.b16 %v1226, %v1224
        %v1347 = vpack.c.b16 %v1227, %v1225
        %v1348 = vpack.c.b16 %v1230, %v1228
        %v1349 = vpack.c.b16 %v1231, %v1229
        %v1350 = vpack.c.b16 %v1234, %v1232
        %v1351 = vpack.c.b16 %v1235, %v1233
        %v1352 = vpack.c.b16 %v1238, %v1236
        %v1353 = vpack.c.b16 %v1239, %v1237
        %v1354 = vpack.c.b16 %v1242, %v1240
        %v1355 = vpack.c.b16 %v1243, %v1241
        %v1356 = vpack.c.b16 %v1246, %v1244
        %v1357 = vpack.c.b16 %v1247, %v1245
        %v1358 = vpack.c.b16 %v1250, %v1248
        %v1359 = vpack.c.b16 %v1251, %v1249
        %v1360 = vpack.c.b16 %v1254, %v1252
        %v1361 = vpack.c.b16 %v1255, %v1253
        %v1362 = vpack.c.b16 %v1258, %v1256
        %v1363 = vpack.c.b16 %v1259, %v1257
        %v1364 = vpack.c.b16 %v1262, %v1260
        %v1365 = vpack.c.b16 %v1263, %v1261
        %v1366 = vpack.c.b16 %v1266, %v1264
        %v1367 = vpack.c.b16 %v1267, %v1265
        %v1368 = vpack.c.b16 %v1270, %v1268
        %v1369 = vpack.c.b16 %v1271, %v1269
        %v1370 = vpack.c.b16 %v1274, %v1272
        %v1371 = vpack.c.b16 %v1275, %v1273
        %1468 = vmatprep.subr.bf16.mxu0 %v1277
        %1469 = vmatpush1.bf16.msra.mxu0 %v1276
        %1470 = vmatprep.subr.bf16.mxu0 %v1279
        %1471 = vmatpush1.bf16.msra.mxu0 %v1278
        %1472 = vmatprep.subr.bf16.mxu0 %v1281
        %1473 = vmatpush1.bf16.msra.mxu0 %v1280
        %1474 = vmatprep.subr.bf16.mxu0 %v1283
        %1475 = vmatpush1.bf16.msra.mxu0 %v1282
        %1476 = vmatprep.subr.bf16.mxu0 %v1285
        %1477 = vmatpush1.bf16.msra.mxu0 %v1284
        %1478 = vmatprep.subr.bf16.mxu0 %v1287
        %1479 = vmatpush1.bf16.msra.mxu0 %v1286
        %1480 = vmatprep.subr.bf16.mxu0 %v1289
        %1481 = vmatpush1.bf16.msra.mxu0 %v1288
        %1482 = vmatprep.subr.bf16.mxu0 %v1291
        %1483 = vmatpush1.bf16.msra.mxu0 %v1290
        %1484 = vmatprep.subr.bf16.mxu0 %v1293
        %1485 = vmatpush1.bf16.msra.mxu0 %v1292
        %1486 = vmatprep.subr.bf16.mxu0 %v1295
        %1487 = vmatpush1.bf16.msra.mxu0 %v1294
        %1488 = vmatprep.subr.bf16.mxu0 %v1297
        %1489 = vmatpush1.bf16.msra.mxu0 %v1296
        %1490 = vmatprep.subr.bf16.mxu0 %v1299
        %1491 = vmatpush1.bf16.msra.mxu0 %v1298
        %1492 = vmatprep.subr.bf16.mxu0 %v1301
        %1493 = vmatpush1.bf16.msra.mxu0 %v1300
        %1494 = vmatprep.subr.bf16.mxu0 %v1303
        %1495 = vmatpush1.bf16.msra.mxu0 %v1302
        %1496 = vmatprep.subr.bf16.mxu0 %v1305
        %1497 = vmatpush1.bf16.msra.mxu0 %v1304
        %1498 = vmatprep.subr.bf16.mxu0 %v1307
        %1499 = vmatpush1.bf16.msra.mxu0 %v1306
        %1500 = vmatprep.mubr.bf16.mxu0 %v797
        %1501 = vmatmul.mubr.bf16.gmra.mrb[0].mxu0 %v796
        %v1502 = vpop.f32.mrb[0].mxu0
        %v1503 = vadd.f32 0.0, %v1502
        %v1504 = vpop.f32.mrb[0].mxu0
        %v1505 = vadd.f32 0.0, %v1504
        %v1506 = vpop.f32.mrb[0].mxu0
        %v1507 = vadd.f32 0.0, %v1506
        %v1508 = vpop.f32.mrb[0].mxu0
        %v1509 = vadd.f32 0.0, %v1508
        %1510 = vmatprep.mubr.bf16.mxu0 %v803
        %1511 = vmatmul.mubr.bf16.gmra.mrb[0].mxu0 %v802
        %v1512 = vpop.f32.mrb[0].mxu0
        %v1513 = vadd.f32 0.0, %v1512
        %v1514 = vpop.f32.mrb[0].mxu0
        %v1515 = vadd.f32 0.0, %v1514
        %v1516 = vpop.f32.mrb[0].mxu0
        %v1517 = vadd.f32 0.0, %v1516
        %v1518 = vpop.f32.mrb[0].mxu0
        %v1519 = vadd.f32 0.0, %v1518
        %1520 = vmatprep.mubr.bf16.mxu0 %v809
        %1521 = vmatmul.mubr.bf16.gmra.mrb[0].mxu0 %v808
        %v1522 = vpop.f32.mrb[0].mxu0
        %v1523 = vadd.f32 0.0, %v1522
        %v1524 = vpop.f32.mrb[0].mxu0
        %v1525 = vadd.f32 0.0, %v1524
        %v1526 = vpop.f32.mrb[0].mxu0
        %v1527 = vadd.f32 0.0, %v1526
        %v1528 = vpop.f32.mrb[0].mxu0
        %v1529 = vadd.f32 0.0, %v1528
        %1530 = vmatprep.mubr.bf16.mxu0 %v815
        %1531 = vmatmul.mubr.bf16.gmra.mrb[0].mxu0 %v814
        %v1532 = vpop.f32.mrb[0].mxu0
        %v1533 = vadd.f32 0.0, %v1532
        %v1534 = vpop.f32.mrb[0].mxu0
        %v1535 = vadd.f32 0.0, %v1534
        %v1536 = vpop.f32.mrb[0].mxu0
        %v1537 = vadd.f32 0.0, %v1536
        %v1538 = vpop.f32.mrb[0].mxu0
        %v1539 = vadd.f32 0.0, %v1538
        %1540 = vmatprep.mubr.bf16.mxu0 %v821
        %1541 = vmatmul.mubr.bf16.gmra.mrb[0].mxu0 %v820
        %v1542 = vpop.f32.mrb[0].mxu0
        %v1543 = vadd.f32 0.0, %v1542
        %v1544 = vpop.f32.mrb[0].mxu0
        %v1545 = vadd.f32 0.0, %v1544
        %v1546 = vpop.f32.mrb[0].mxu0
        %v1547 = vadd.f32 0.0, %v1546
        %v1548 = vpop.f32.mrb[0].mxu0
        %v1549 = vadd.f32 0.0, %v1548
        %1550 = vmatprep.mubr.bf16.mxu0 %v827
        %1551 = vmatmul.mubr.bf16.gmra.mrb[0].mxu0 %v826
        %v1552 = vpop.f32.mrb[0].mxu0
        %v1553 = vadd.f32 0.0, %v1552
        %v1554 = vpop.f32.mrb[0].mxu0
        %v1555 = vadd.f32 0.0, %v1554
        %v1556 = vpop.f32.mrb[0].mxu0
        %v1557 = vadd.f32 0.0, %v1556
        %v1558 = vpop.f32.mrb[0].mxu0
        %v1559 = vadd.f32 0.0, %v1558
        %1560 = vmatprep.mubr.bf16.mxu0 %v833
        %1561 = vmatmul.mubr.bf16.gmra.mrb[0].mxu0 %v832
        %v1562 = vpop.f32.mrb[0].mxu0
        %v1563 = vadd.f32 0.0, %v1562
        %v1564 = vpop.f32.mrb[0].mxu0
        %v1565 = vadd.f32 0.0, %v1564
        %v1566 = vpop.f32.mrb[0].mxu0
        %v1567 = vadd.f32 0.0, %v1566
        %v1568 = vpop.f32.mrb[0].mxu0
        %v1569 = vadd.f32 0.0, %v1568
        %1570 = vmatprep.mubr.bf16.mxu0 %v839
        %1571 = vmatmul.mubr.bf16.gmra.mrb[0].mxu0 %v838
        %v1572 = vpop.f32.mrb[0].mxu0
        %v1573 = vadd.f32 0.0, %v1572
        %v1574 = vpop.f32.mrb[0].mxu0
        %v1575 = vadd.f32 0.0, %v1574
        %v1576 = vpop.f32.mrb[0].mxu0
        %v1577 = vadd.f32 0.0, %v1576
        %v1578 = vpop.f32.mrb[0].mxu0
        %v1579 = vadd.f32 0.0, %v1578
        %1580 = vmatprep.mubr.bf16.mxu0 %v845
        %1581 = vmatmul.mubr.bf16.gmra.mrb[0].mxu0 %v844
        %v1582 = vpop.f32.mrb[0].mxu0
        %v1583 = vadd.f32 0.0, %v1582
        %v1584 = vpop.f32.mrb[0].mxu0
        %v1585 = vadd.f32 0.0, %v1584
        %v1586 = vpop.f32.mrb[0].mxu0
        %v1587 = vadd.f32 0.0, %v1586
        %v1588 = vpop.f32.mrb[0].mxu0
        %v1589 = vadd.f32 0.0, %v1588
        %1590 = vmatprep.mubr.bf16.mxu0 %v851
        %1591 = vmatmul.mubr.bf16.gmra.mrb[0].mxu0 %v850
        %v1592 = vpop.f32.mrb[0].mxu0
        %v1593 = vadd.f32 0.0, %v1592
        %v1594 = vpop.f32.mrb[0].mxu0
        %v1595 = vadd.f32 0.0, %v1594
        %v1596 = vpop.f32.mrb[0].mxu0
        %v1597 = vadd.f32 0.0, %v1596
        %v1598 = vpop.f32.mrb[0].mxu0
        %v1599 = vadd.f32 0.0, %v1598
        %1600 = vmatprep.mubr.bf16.mxu0 %v857
        %1601 = vmatmul.mubr.bf16.gmra.mrb[0].mxu0 %v856
        %v1602 = vpop.f32.mrb[0].mxu0
        %v1603 = vadd.f32 0.0, %v1602
        %v1604 = vpop.f32.mrb[0].mxu0
        %v1605 = vadd.f32 0.0, %v1604
        %v1606 = vpop.f32.mrb[0].mxu0
        %v1607 = vadd.f32 0.0, %v1606
        %v1608 = vpop.f32.mrb[0].mxu0
        %v1609 = vadd.f32 0.0, %v1608
        %1610 = vmatprep.mubr.bf16.mxu0 %v863
        %1611 = vmatmul.mubr.bf16.gmra.mrb[0].mxu0 %v862
        %v1612 = vpop.f32.mrb[0].mxu0
        %v1613 = vadd.f32 0.0, %v1612
        %v1614 = vpop.f32.mrb[0].mxu0
        %v1615 = vadd.f32 0.0, %v1614
        %v1616 = vpop.f32.mrb[0].mxu0
        %v1617 = vadd.f32 0.0, %v1616
        %v1618 = vpop.f32.mrb[0].mxu0
        %v1619 = vadd.f32 0.0, %v1618
        %1620 = vmatprep.mubr.bf16.mxu0 %v869
        %1621 = vmatmul.mubr.bf16.gmra.mrb[0].mxu0 %v868
        %v1622 = vpop.f32.mrb[0].mxu0
        %v1623 = vadd.f32 0.0, %v1622
        %v1624 = vpop.f32.mrb[0].mxu0
        %v1625 = vadd.f32 0.0, %v1624
        %v1626 = vpop.f32.mrb[0].mxu0
        %v1627 = vadd.f32 0.0, %v1626
        %v1628 = vpop.f32.mrb[0].mxu0
        %v1629 = vadd.f32 0.0, %v1628
        %1630 = vmatprep.mubr.bf16.mxu0 %v875
        %1631 = vmatmul.mubr.bf16.gmra.mrb[0].mxu0 %v874
        %v1632 = vpop.f32.mrb[0].mxu0
        %v1633 = vadd.f32 0.0, %v1632
        %v1634 = vpop.f32.mrb[0].mxu0
        %v1635 = vadd.f32 0.0, %v1634
        %v1636 = vpop.f32.mrb[0].mxu0
        %v1637 = vadd.f32 0.0, %v1636
        %v1638 = vpop.f32.mrb[0].mxu0
        %v1639 = vadd.f32 0.0, %v1638
        %1640 = vmatprep.mubr.bf16.mxu0 %v881
        %1641 = vmatmul.mubr.bf16.gmra.mrb[0].mxu0 %v880
        %v1642 = vpop.f32.mrb[0].mxu0
        %v1643 = vadd.f32 0.0, %v1642
        %v1644 = vpop.f32.mrb[0].mxu0
        %v1645 = vadd.f32 0.0, %v1644
        %v1646 = vpop.f32.mrb[0].mxu0
        %v1647 = vadd.f32 0.0, %v1646
        %v1648 = vpop.f32.mrb[0].mxu0
        %v1649 = vadd.f32 0.0, %v1648
        %1650 = vmatprep.mubr.bf16.mxu0 %v887
        %1651 = vmatmul.mubr.bf16.gmra.mrb[0].mxu0 %v886
        %v1652 = vpop.f32.mrb[0].mxu0
        %v1653 = vadd.f32 0.0, %v1652
        %v1654 = vpop.f32.mrb[0].mxu0
        %v1655 = vadd.f32 0.0, %v1654
        %v1656 = vpop.f32.mrb[0].mxu0
        %v1657 = vadd.f32 0.0, %v1656
        %v1658 = vpop.f32.mrb[0].mxu0
        %v1659 = vadd.f32 0.0, %v1658
        %1660 = vdwg.mxu0
        %1661 = vmatprep.subr.bf16.mxu0 %v1309
        %1662 = vmatpush1.bf16.msra.mxu0 %v1308
        %1663 = vmatprep.subr.bf16.mxu0 %v1311
        %1664 = vmatpush1.bf16.msra.mxu0 %v1310
        %1665 = vmatprep.subr.bf16.mxu0 %v1313
        %1666 = vmatpush1.bf16.msra.mxu0 %v1312
        %1667 = vmatprep.subr.bf16.mxu0 %v1315
        %1668 = vmatpush1.bf16.msra.mxu0 %v1314
        %1669 = vmatprep.subr.bf16.mxu0 %v1317
        %1670 = vmatpush1.bf16.msra.mxu0 %v1316
        %1671 = vmatprep.subr.bf16.mxu0 %v1319
        %1672 = vmatpush1.bf16.msra.mxu0 %v1318
        %1673 = vmatprep.subr.bf16.mxu0 %v1321
        %1674 = vmatpush1.bf16.msra.mxu0 %v1320
        %1675 = vmatprep.subr.bf16.mxu0 %v1323
        %1676 = vmatpush1.bf16.msra.mxu0 %v1322
        %1677 = vmatprep.subr.bf16.mxu0 %v1325
        %1678 = vmatpush1.bf16.msra.mxu0 %v1324
        %1679 = vmatprep.subr.bf16.mxu0 %v1327
        %1680 = vmatpush1.bf16.msra.mxu0 %v1326
        %1681 = vmatprep.subr.bf16.mxu0 %v1329
        %1682 = vmatpush1.bf16.msra.mxu0 %v1328
        %1683 = vmatprep.subr.bf16.mxu0 %v1331
        %1684 = vmatpush1.bf16.msra.mxu0 %v1330
        %1685 = vmatprep.subr.bf16.mxu0 %v1333
        %1686 = vmatpush1.bf16.msra.mxu0 %v1332
        %1687 = vmatprep.subr.bf16.mxu0 %v1335
        %1688 = vmatpush1.bf16.msra.mxu0 %v1334
        %1689 = vmatprep.subr.bf16.mxu0 %v1337
        %1690 = vmatpush1.bf16.msra.mxu0 %v1336
        %1691 = vmatprep.subr.bf16.mxu0 %v1339
        %1692 = vmatpush1.bf16.msra.mxu0 %v1338
        %1693 = vmatprep.mubr.bf16.mxu0 %v799
        %1694 = vmatmul.mubr.bf16.gmra.mrb[0].mxu0 %v798
        %v1695 = vpop.f32.mrb[0].mxu0
        %v1696 = vadd.f32 %v1503, %v1695
        %v1697 = vpop.f32.mrb[0].mxu0
        %v1698 = vadd.f32 %v1505, %v1697
        %v1699 = vpop.f32.mrb[0].mxu0
        %v1700 = vadd.f32 %v1507, %v1699
        %v1701 = vpop.f32.mrb[0].mxu0
        %v1702 = vadd.f32 %v1509, %v1701
        %1703 = vmatprep.mubr.bf16.mxu0 %v805
        %1704 = vmatmul.mubr.bf16.gmra.mrb[0].mxu0 %v804
        %v1705 = vpop.f32.mrb[0].mxu0
        %v1706 = vadd.f32 %v1513, %v1705
        %v1707 = vpop.f32.mrb[0].mxu0
        %v1708 = vadd.f32 %v1515, %v1707
        %v1709 = vpop.f32.mrb[0].mxu0
        %v1710 = vadd.f32 %v1517, %v1709
        %v1711 = vpop.f32.mrb[0].mxu0
        %v1712 = vadd.f32 %v1519, %v1711
        %1713 = vmatprep.mubr.bf16.mxu0 %v811
        %1714 = vmatmul.mubr.bf16.gmra.mrb[0].mxu0 %v810
        %v1715 = vpop.f32.mrb[0].mxu0
        %v1716 = vadd.f32 %v1523, %v1715
        %v1717 = vpop.f32.mrb[0].mxu0
        %v1718 = vadd.f32 %v1525, %v1717
        %v1719 = vpop.f32.mrb[0].mxu0
        %v1720 = vadd.f32 %v1527, %v1719
        %v1721 = vpop.f32.mrb[0].mxu0
        %v1722 = vadd.f32 %v1529, %v1721
        %1723 = vmatprep.mubr.bf16.mxu0 %v817
        %1724 = vmatmul.mubr.bf16.gmra.mrb[0].mxu0 %v816
        %v1725 = vpop.f32.mrb[0].mxu0
        %v1726 = vadd.f32 %v1533, %v1725
        %v1727 = vpop.f32.mrb[0].mxu0
        %v1728 = vadd.f32 %v1535, %v1727
        %v1729 = vpop.f32.mrb[0].mxu0
        %v1730 = vadd.f32 %v1537, %v1729
        %v1731 = vpop.f32.mrb[0].mxu0
        %v1732 = vadd.f32 %v1539, %v1731
        %1733 = vmatprep.mubr.bf16.mxu0 %v823
        %1734 = vmatmul.mubr.bf16.gmra.mrb[0].mxu0 %v822
        %v1735 = vpop.f32.mrb[0].mxu0
        %v1736 = vadd.f32 %v1543, %v1735
        %v1737 = vpop.f32.mrb[0].mxu0
        %v1738 = vadd.f32 %v1545, %v1737
        %v1739 = vpop.f32.mrb[0].mxu0
        %v1740 = vadd.f32 %v1547, %v1739
        %v1741 = vpop.f32.mrb[0].mxu0
        %v1742 = vadd.f32 %v1549, %v1741
        %1743 = vmatprep.mubr.bf16.mxu0 %v829
        %1744 = vmatmul.mubr.bf16.gmra.mrb[0].mxu0 %v828
        %v1745 = vpop.f32.mrb[0].mxu0
        %v1746 = vadd.f32 %v1553, %v1745
        %v1747 = vpop.f32.mrb[0].mxu0
        %v1748 = vadd.f32 %v1555, %v1747
        %v1749 = vpop.f32.mrb[0].mxu0
        %v1750 = vadd.f32 %v1557, %v1749
        %v1751 = vpop.f32.mrb[0].mxu0
        %v1752 = vadd.f32 %v1559, %v1751
        %1753 = vmatprep.mubr.bf16.mxu0 %v835
        %1754 = vmatmul.mubr.bf16.gmra.mrb[0].mxu0 %v834
        %v1755 = vpop.f32.mrb[0].mxu0
        %v1756 = vadd.f32 %v1563, %v1755
        %v1757 = vpop.f32.mrb[0].mxu0
        %v1758 = vadd.f32 %v1565, %v1757
        %v1759 = vpop.f32.mrb[0].mxu0
        %v1760 = vadd.f32 %v1567, %v1759
        %v1761 = vpop.f32.mrb[0].mxu0
        %v1762 = vadd.f32 %v1569, %v1761
        %1763 = vmatprep.mubr.bf16.mxu0 %v841
        %1764 = vmatmul.mubr.bf16.gmra.mrb[0].mxu0 %v840
        %v1765 = vpop.f32.mrb[0].mxu0
        %v1766 = vadd.f32 %v1573, %v1765
        %v1767 = vpop.f32.mrb[0].mxu0
        %v1768 = vadd.f32 %v1575, %v1767
        %v1769 = vpop.f32.mrb[0].mxu0
        %v1770 = vadd.f32 %v1577, %v1769
        %v1771 = vpop.f32.mrb[0].mxu0
        %v1772 = vadd.f32 %v1579, %v1771
        %1773 = vmatprep.mubr.bf16.mxu0 %v847
        %1774 = vmatmul.mubr.bf16.gmra.mrb[0].mxu0 %v846
        %v1775 = vpop.f32.mrb[0].mxu0
        %v1776 = vadd.f32 %v1583, %v1775
        %v1777 = vpop.f32.mrb[0].mxu0
        %v1778 = vadd.f32 %v1585, %v1777
        %v1779 = vpop.f32.mrb[0].mxu0
        %v1780 = vadd.f32 %v1587, %v1779
        %v1781 = vpop.f32.mrb[0].mxu0
        %v1782 = vadd.f32 %v1589, %v1781
        %1783 = vmatprep.mubr.bf16.mxu0 %v853
        %1784 = vmatmul.mubr.bf16.gmra.mrb[0].mxu0 %v852
        %v1785 = vpop.f32.mrb[0].mxu0
        %v1786 = vadd.f32 %v1593, %v1785
        %v1787 = vpop.f32.mrb[0].mxu0
        %v1788 = vadd.f32 %v1595, %v1787
        %v1789 = vpop.f32.mrb[0].mxu0
        %v1790 = vadd.f32 %v1597, %v1789
        %v1791 = vpop.f32.mrb[0].mxu0
        %v1792 = vadd.f32 %v1599, %v1791
        %1793 = vmatprep.mubr.bf16.mxu0 %v859
        %1794 = vmatmul.mubr.bf16.gmra.mrb[0].mxu0 %v858
        %v1795 = vpop.f32.mrb[0].mxu0
        %v1796 = vadd.f32 %v1603, %v1795
        %v1797 = vpop.f32.mrb[0].mxu0
        %v1798 = vadd.f32 %v1605, %v1797
        %v1799 = vpop.f32.mrb[0].mxu0
        %v1800 = vadd.f32 %v1607, %v1799
        %v1801 = vpop.f32.mrb[0].mxu0
        %v1802 = vadd.f32 %v1609, %v1801
        %1803 = vmatprep.mubr.bf16.mxu0 %v865
        %1804 = vmatmul.mubr.bf16.gmra.mrb[0].mxu0 %v864
        %v1805 = vpop.f32.mrb[0].mxu0
        %v1806 = vadd.f32 %v1613, %v1805
        %v1807 = vpop.f32.mrb[0].mxu0
        %v1808 = vadd.f32 %v1615, %v1807
        %v1809 = vpop.f32.mrb[0].mxu0
        %v1810 = vadd.f32 %v1617, %v1809
        %v1811 = vpop.f32.mrb[0].mxu0
        %v1812 = vadd.f32 %v1619, %v1811
        %1813 = vmatprep.mubr.bf16.mxu0 %v871
        %1814 = vmatmul.mubr.bf16.gmra.mrb[0].mxu0 %v870
        %v1815 = vpop.f32.mrb[0].mxu0
        %v1816 = vadd.f32 %v1623, %v1815
        %v1817 = vpop.f32.mrb[0].mxu0
        %v1818 = vadd.f32 %v1625, %v1817
        %v1819 = vpop.f32.mrb[0].mxu0
        %v1820 = vadd.f32 %v1627, %v1819
        %v1821 = vpop.f32.mrb[0].mxu0
        %v1822 = vadd.f32 %v1629, %v1821
        %1823 = vmatprep.mubr.bf16.mxu0 %v877
        %1824 = vmatmul.mubr.bf16.gmra.mrb[0].mxu0 %v876
        %v1825 = vpop.f32.mrb[0].mxu0
        %v1826 = vadd.f32 %v1633, %v1825
        %v1827 = vpop.f32.mrb[0].mxu0
        %v1828 = vadd.f32 %v1635, %v1827
        %v1829 = vpop.f32.mrb[0].mxu0
        %v1830 = vadd.f32 %v1637, %v1829
        %v1831 = vpop.f32.mrb[0].mxu0
        %v1832 = vadd.f32 %v1639, %v1831
        %1833 = vmatprep.mubr.bf16.mxu0 %v883
        %1834 = vmatmul.mubr.bf16.gmra.mrb[0].mxu0 %v882
        %v1835 = vpop.f32.mrb[0].mxu0
        %v1836 = vadd.f32 %v1643, %v1835
        %v1837 = vpop.f32.mrb[0].mxu0
        %v1838 = vadd.f32 %v1645, %v1837
        %v1839 = vpop.f32.mrb[0].mxu0
        %v1840 = vadd.f32 %v1647, %v1839
        %v1841 = vpop.f32.mrb[0].mxu0
        %v1842 = vadd.f32 %v1649, %v1841
        %1843 = vmatprep.mubr.bf16.mxu0 %v889
        %1844 = vmatmul.mubr.bf16.gmra.mrb[0].mxu0 %v888
        %v1845 = vpop.f32.mrb[0].mxu0
        %v1846 = vadd.f32 %v1653, %v1845
        %v1847 = vpop.f32.mrb[0].mxu0
        %v1848 = vadd.f32 %v1655, %v1847
        %v1849 = vpop.f32.mrb[0].mxu0
        %v1850 = vadd.f32 %v1657, %v1849
        %v1851 = vpop.f32.mrb[0].mxu0
        %v1852 = vadd.f32 %v1659, %v1851
        %1853 = vdwg.mxu0
        %1854 = vmatprep.subr.bf16.mxu0 %v1341
        %1855 = vmatpush1.bf16.msra.mxu0 %v1340
        %1856 = vmatprep.subr.bf16.mxu0 %v1343
        %1857 = vmatpush1.bf16.msra.mxu0 %v1342
        %1858 = vmatprep.subr.bf16.mxu0 %v1345
        %1859 = vmatpush1.bf16.msra.mxu0 %v1344
        %1860 = vmatprep.subr.bf16.mxu0 %v1347
        %1861 = vmatpush1.bf16.msra.mxu0 %v1346
        %1862 = vmatprep.subr.bf16.mxu0 %v1349
        %1863 = vmatpush1.bf16.msra.mxu0 %v1348
        %1864 = vmatprep.subr.bf16.mxu0 %v1351
        %1865 = vmatpush1.bf16.msra.mxu0 %v1350
        %1866 = vmatprep.subr.bf16.mxu0 %v1353
        %1867 = vmatpush1.bf16.msra.mxu0 %v1352
        %1868 = vmatprep.subr.bf16.mxu0 %v1355
        %1869 = vmatpush1.bf16.msra.mxu0 %v1354
        %1870 = vmatprep.subr.bf16.mxu0 %v1357
        %1871 = vmatpush1.bf16.msra.mxu0 %v1356
        %1872 = vmatprep.subr.bf16.mxu0 %v1359
        %1873 = vmatpush1.bf16.msra.mxu0 %v1358
        %1874 = vmatprep.subr.bf16.mxu0 %v1361
        %1875 = vmatpush1.bf16.msra.mxu0 %v1360
        %1876 = vmatprep.subr.bf16.mxu0 %v1363
        %1877 = vmatpush1.bf16.msra.mxu0 %v1362
        %1878 = vmatprep.subr.bf16.mxu0 %v1365
        %1879 = vmatpush1.bf16.msra.mxu0 %v1364
        %1880 = vmatprep.subr.bf16.mxu0 %v1367
        %1881 = vmatpush1.bf16.msra.mxu0 %v1366
        %1882 = vmatprep.subr.bf16.mxu0 %v1369
        %1883 = vmatpush1.bf16.msra.mxu0 %v1368
        %1884 = vmatprep.subr.bf16.mxu0 %v1371
        %1885 = vmatpush1.bf16.msra.mxu0 %v1370
        %1886 = vmatprep.mubr.bf16.mxu0 %v801
        %1887 = vmatmul.mubr.bf16.gmra.mrb[0].mxu0 %v800
        %v1888 = vpop.f32.mrb[0].mxu0
        %v1889 = vadd.f32 %v1696, %v1888
        %v1890 = vpop.f32.mrb[0].mxu0
        %v1891 = vadd.f32 %v1698, %v1890
        %v1892 = vpop.f32.mrb[0].mxu0
        %v1893 = vadd.f32 %v1700, %v1892
        %v1894 = vpop.f32.mrb[0].mxu0
        %v1895 = vadd.f32 %v1702, %v1894
        %1896 = vmatprep.mubr.bf16.mxu0 %v807
        %1897 = vmatmul.mubr.bf16.gmra.mrb[0].mxu0 %v806
        %v1898 = vpop.f32.mrb[0].mxu0
        %v1899 = vadd.f32 %v1706, %v1898
        %v1900 = vpop.f32.mrb[0].mxu0
        %v1901 = vadd.f32 %v1708, %v1900
        %v1902 = vpop.f32.mrb[0].mxu0
        %v1903 = vadd.f32 %v1710, %v1902
        %v1904 = vpop.f32.mrb[0].mxu0
        %v1905 = vadd.f32 %v1712, %v1904
        %1906 = vmatprep.mubr.bf16.mxu0 %v813
        %1907 = vmatmul.mubr.bf16.gmra.mrb[0].mxu0 %v812
        %v1908 = vpop.f32.mrb[0].mxu0
        %v1909 = vadd.f32 %v1716, %v1908
        %v1910 = vpop.f32.mrb[0].mxu0
        %v1911 = vadd.f32 %v1718, %v1910
        %v1912 = vpop.f32.mrb[0].mxu0
        %v1913 = vadd.f32 %v1720, %v1912
        %v1914 = vpop.f32.mrb[0].mxu0
        %v1915 = vadd.f32 %v1722, %v1914
        %1916 = vmatprep.mubr.bf16.mxu0 %v819
        %1917 = vmatmul.mubr.bf16.gmra.mrb[0].mxu0 %v818
        %v1918 = vpop.f32.mrb[0].mxu0
        %v1919 = vadd.f32 %v1726, %v1918
        %v1920 = vpop.f32.mrb[0].mxu0
        %v1921 = vadd.f32 %v1728, %v1920
        %v1922 = vpop.f32.mrb[0].mxu0
        %v1923 = vadd.f32 %v1730, %v1922
        %v1924 = vpop.f32.mrb[0].mxu0
        %v1925 = vadd.f32 %v1732, %v1924
        %1926 = vmatprep.mubr.bf16.mxu0 %v825
        %1927 = vmatmul.mubr.bf16.gmra.mrb[0].mxu0 %v824
        %v1928 = vpop.f32.mrb[0].mxu0
        %v1929 = vadd.f32 %v1736, %v1928
        %v1930 = vpop.f32.mrb[0].mxu0
        %v1931 = vadd.f32 %v1738, %v1930
        %v1932 = vpop.f32.mrb[0].mxu0
        %v1933 = vadd.f32 %v1740, %v1932
        %v1934 = vpop.f32.mrb[0].mxu0
        %v1935 = vadd.f32 %v1742, %v1934
        %1936 = vmatprep.mubr.bf16.mxu0 %v831
        %1937 = vmatmul.mubr.bf16.gmra.mrb[0].mxu0 %v830
        %v1938 = vpop.f32.mrb[0].mxu0
        %v1939 = vadd.f32 %v1746, %v1938
        %v1940 = vpop.f32.mrb[0].mxu0
        %v1941 = vadd.f32 %v1748, %v1940
        %v1942 = vpop.f32.mrb[0].mxu0
        %v1943 = vadd.f32 %v1750, %v1942
        %v1944 = vpop.f32.mrb[0].mxu0
        %v1945 = vadd.f32 %v1752, %v1944
        %1946 = vmatprep.mubr.bf16.mxu0 %v837
        %1947 = vmatmul.mubr.bf16.gmra.mrb[0].mxu0 %v836
        %v1948 = vpop.f32.mrb[0].mxu0
        %v1949 = vadd.f32 %v1756, %v1948
        %v1950 = vpop.f32.mrb[0].mxu0
        %v1951 = vadd.f32 %v1758, %v1950
        %v1952 = vpop.f32.mrb[0].mxu0
        %v1953 = vadd.f32 %v1760, %v1952
        %v1954 = vpop.f32.mrb[0].mxu0
        %v1955 = vadd.f32 %v1762, %v1954
        %1956 = vmatprep.mubr.bf16.mxu0 %v843
        %1957 = vmatmul.mubr.bf16.gmra.mrb[0].mxu0 %v842
        %v1958 = vpop.f32.mrb[0].mxu0
        %v1959 = vadd.f32 %v1766, %v1958
        %v1960 = vpop.f32.mrb[0].mxu0
        %v1961 = vadd.f32 %v1768, %v1960
        %v1962 = vpop.f32.mrb[0].mxu0
        %v1963 = vadd.f32 %v1770, %v1962
        %v1964 = vpop.f32.mrb[0].mxu0
        %v1965 = vadd.f32 %v1772, %v1964
        %1966 = vmatprep.mubr.bf16.mxu0 %v849
        %1967 = vmatmul.mubr.bf16.gmra.mrb[0].mxu0 %v848
        %v1968 = vpop.f32.mrb[0].mxu0
        %v1969 = vadd.f32 %v1776, %v1968
        %v1970 = vpop.f32.mrb[0].mxu0
        %v1971 = vadd.f32 %v1778, %v1970
        %v1972 = vpop.f32.mrb[0].mxu0
        %v1973 = vadd.f32 %v1780, %v1972
        %v1974 = vpop.f32.mrb[0].mxu0
        %v1975 = vadd.f32 %v1782, %v1974
        %1976 = vmatprep.mubr.bf16.mxu0 %v855
        %1977 = vmatmul.mubr.bf16.gmra.mrb[0].mxu0 %v854
        %v1978 = vpop.f32.mrb[0].mxu0
        %v1979 = vadd.f32 %v1786, %v1978
        %v1980 = vpop.f32.mrb[0].mxu0
        %v1981 = vadd.f32 %v1788, %v1980
        %v1982 = vpop.f32.mrb[0].mxu0
        %v1983 = vadd.f32 %v1790, %v1982
        %v1984 = vpop.f32.mrb[0].mxu0
        %v1985 = vadd.f32 %v1792, %v1984
        %1986 = vmatprep.mubr.bf16.mxu0 %v861
        %1987 = vmatmul.mubr.bf16.gmra.mrb[0].mxu0 %v860
        %v1988 = vpop.f32.mrb[0].mxu0
        %v1989 = vadd.f32 %v1796, %v1988
        %v1990 = vpop.f32.mrb[0].mxu0
        %v1991 = vadd.f32 %v1798, %v1990
        %v1992 = vpop.f32.mrb[0].mxu0
        %v1993 = vadd.f32 %v1800, %v1992
        %v1994 = vpop.f32.mrb[0].mxu0
        %v1995 = vadd.f32 %v1802, %v1994
        %1996 = vmatprep.mubr.bf16.mxu0 %v867
        %1997 = vmatmul.mubr.bf16.gmra.mrb[0].mxu0 %v866
        %v1998 = vpop.f32.mrb[0].mxu0
        %v1999 = vadd.f32 %v1806, %v1998
        %v2000 = vpop.f32.mrb[0].mxu0
        %v2001 = vadd.f32 %v1808, %v2000
        %v2002 = vpop.f32.mrb[0].mxu0
        %v2003 = vadd.f32 %v1810, %v2002
        %v2004 = vpop.f32.mrb[0].mxu0
        %v2005 = vadd.f32 %v1812, %v2004
        %2006 = vmatprep.mubr.bf16.mxu0 %v873
        %2007 = vmatmul.mubr.bf16.gmra.mrb[0].mxu0 %v872
        %v2008 = vpop.f32.mrb[0].mxu0
        %v2009 = vadd.f32 %v1816, %v2008
        %v2010 = vpop.f32.mrb[0].mxu0
        %v2011 = vadd.f32 %v1818, %v2010
        %v2012 = vpop.f32.mrb[0].mxu0
        %v2013 = vadd.f32 %v1820, %v2012
        %v2014 = vpop.f32.mrb[0].mxu0
        %v2015 = vadd.f32 %v1822, %v2014
        %2016 = vmatprep.mubr.bf16.mxu0 %v879
        %2017 = vmatmul.mubr.bf16.gmra.mrb[0].mxu0 %v878
        %v2018 = vpop.f32.mrb[0].mxu0
        %v2019 = vadd.f32 %v1826, %v2018
        %v2020 = vpop.f32.mrb[0].mxu0
        %v2021 = vadd.f32 %v1828, %v2020
        %v2022 = vpop.f32.mrb[0].mxu0
        %v2023 = vadd.f32 %v1830, %v2022
        %v2024 = vpop.f32.mrb[0].mxu0
        %v2025 = vadd.f32 %v1832, %v2024
        %2026 = vmatprep.mubr.bf16.mxu0 %v885
        %2027 = vmatmul.mubr.bf16.gmra.mrb[0].mxu0 %v884
        %v2028 = vpop.f32.mrb[0].mxu0
        %v2029 = vadd.f32 %v1836, %v2028
        %v2030 = vpop.f32.mrb[0].mxu0
        %v2031 = vadd.f32 %v1838, %v2030
        %v2032 = vpop.f32.mrb[0].mxu0
        %v2033 = vadd.f32 %v1840, %v2032
        %v2034 = vpop.f32.mrb[0].mxu0
        %v2035 = vadd.f32 %v1842, %v2034
        %2036 = vmatprep.mubr.bf16.mxu0 %v891
        %2037 = vmatmul.mubr.bf16.gmra.mrb[0].mxu0 %v890
        %v2038 = vpop.f32.mrb[0].mxu0
        %v2039 = vadd.f32 %v1846, %v2038
        %v2040 = vpop.f32.mrb[0].mxu0
        %v2041 = vadd.f32 %v1848, %v2040
        %v2042 = vpop.f32.mrb[0].mxu0
        %v2043 = vadd.f32 %v1850, %v2042
        %v2044 = vpop.f32.mrb[0].mxu0
        %v2045 = vadd.f32 %v1852, %v2044
        %2046 = vdwg.mxu0
        %v2047 = vrot.slane %v1889, 1
        %v2048 = vrot.slane %v1891, 1
        %v2049 = vrot.slane %v1893, 1
        %v2050 = vrot.slane %v1895, 1
        %v2051 = vrot.slane %v1899, 1
        %v2052 = vrot.slane %v1901, 1
        %v2053 = vrot.slane %v1903, 1
        %v2054 = vrot.slane %v1905, 1
        %v2055 = vrot.slane %v1909, 1
        %v2056 = vrot.slane %v1911, 1
        %v2057 = vrot.slane %v1913, 1
        %v2058 = vrot.slane %v1915, 1
        %v2059 = vrot.slane %v1919, 1
        %v2060 = vrot.slane %v1921, 1
        %v2061 = vrot.slane %v1923, 1
        %v2062 = vrot.slane %v1925, 1
        %v2063 = vrot.slane %v1929, 1
        %v2064 = vrot.slane %v1931, 1
        %v2065 = vrot.slane %v1933, 1
        %v2066 = vrot.slane %v1935, 1
        %v2067 = vrot.slane %v1939, 1
        %v2068 = vrot.slane %v1941, 1
        %v2069 = vrot.slane %v1943, 1
        %v2070 = vrot.slane %v1945, 1
        %v2071 = vrot.slane %v1949, 1
        %v2072 = vrot.slane %v1951, 1
        %v2073 = vrot.slane %v1953, 1
        %v2074 = vrot.slane %v1955, 1
        %v2075 = vrot.slane %v1959, 1
        %v2076 = vrot.slane %v1961, 1
        %v2077 = vrot.slane %v1963, 1
        %v2078 = vrot.slane %v1965, 1
        %v2079 = vrot.slane %v1969, 1
        %v2080 = vrot.slane %v1971, 1
        %v2081 = vrot.slane %v1973, 1
        %v2082 = vrot.slane %v1975, 1
        %v2083 = vrot.slane %v1979, 1
        %v2084 = vrot.slane %v1981, 1
        %v2085 = vrot.slane %v1983, 1
        %v2086 = vrot.slane %v1985, 1
        %v2087 = vrot.slane %v1989, 1
        %v2088 = vrot.slane %v1991, 1
        %v2089 = vrot.slane %v1993, 1
        %v2090 = vrot.slane %v1995, 1
        %v2091 = vrot.slane %v1999, 1
        %v2092 = vrot.slane %v2001, 1
        %v2093 = vrot.slane %v2003, 1
        %v2094 = vrot.slane %v2005, 1
        %v2095 = vrot.slane %v2009, 1
        %v2096 = vrot.slane %v2011, 1
        %v2097 = vrot.slane %v2013, 1
        %v2098 = vrot.slane %v2015, 1
        %v2099 = vrot.slane %v2019, 1
        %v2100 = vrot.slane %v2021, 1
        %v2101 = vrot.slane %v2023, 1
        %v2102 = vrot.slane %v2025, 1
        %v2103 = vrot.slane %v2029, 1
        %v2104 = vrot.slane %v2031, 1
        %v2105 = vrot.slane %v2033, 1
        %v2106 = vrot.slane %v2035, 1
        %v2107 = vrot.slane %v2039, 1
        %v2108 = vrot.slane %v2041, 1
        %v2109 = vrot.slane %v2043, 1
        %v2110 = vrot.slane %v2045, 1
        %v2111 = vlaneseq
        %v2112 = vshrl.u32 %v2111, 7
        %vm2113 = vcmp.lt.s32.totalorder %v2112, 7
        %v2114 = vsel %vm2113, %v2107, %v2109
        %v2115 = vsel %vm2113, %v2108, %v2110
        %v2116 = vsel %vm2113, %v2105, %v2107
        %v2117 = vsel %vm2113, %v2106, %v2108
        %v2118 = vsel %vm2113, %v2103, %v2105
        %v2119 = vsel %vm2113, %v2104, %v2106
        %v2120 = vsel %vm2113, %v2101, %v2103
        %v2121 = vsel %vm2113, %v2102, %v2104
        %v2122 = vsel %vm2113, %v2099, %v2101
        %v2123 = vsel %vm2113, %v2100, %v2102
        %v2124 = vsel %vm2113, %v2097, %v2099
        %v2125 = vsel %vm2113, %v2098, %v2100
        %v2126 = vsel %vm2113, %v2095, %v2097
        %v2127 = vsel %vm2113, %v2096, %v2098
        %v2128 = vsel %vm2113, %v2093, %v2095
        %v2129 = vsel %vm2113, %v2094, %v2096
        %v2130 = vsel %vm2113, %v2091, %v2093
        %v2131 = vsel %vm2113, %v2092, %v2094
        %v2132 = vsel %vm2113, %v2089, %v2091
        %v2133 = vsel %vm2113, %v2090, %v2092
        %v2134 = vsel %vm2113, %v2087, %v2089
        %v2135 = vsel %vm2113, %v2088, %v2090
        %v2136 = vsel %vm2113, %v2085, %v2087
        %v2137 = vsel %vm2113, %v2086, %v2088
        %v2138 = vsel %vm2113, %v2083, %v2085
        %v2139 = vsel %vm2113, %v2084, %v2086
        %v2140 = vsel %vm2113, %v2081, %v2083
        %v2141 = vsel %vm2113, %v2082, %v2084
        %v2142 = vsel %vm2113, %v2079, %v2081
        %v2143 = vsel %vm2113, %v2080, %v2082
        %v2144 = vsel %vm2113, %v2077, %v2079
        %v2145 = vsel %vm2113, %v2078, %v2080
        %v2146 = vsel %vm2113, %v2075, %v2077
        %v2147 = vsel %vm2113, %v2076, %v2078
        %v2148 = vsel %vm2113, %v2073, %v2075
        %v2149 = vsel %vm2113, %v2074, %v2076
        %v2150 = vsel %vm2113, %v2071, %v2073
        %v2151 = vsel %vm2113, %v2072, %v2074
        %v2152 = vsel %vm2113, %v2069, %v2071
        %v2153 = vsel %vm2113, %v2070, %v2072
        %v2154 = vsel %vm2113, %v2067, %v2069
        %v2155 = vsel %vm2113, %v2068, %v2070
        %v2156 = vsel %vm2113, %v2065, %v2067
        %v2157 = vsel %vm2113, %v2066, %v2068
        %v2158 = vsel %vm2113, %v2063, %v2065
        %v2159 = vsel %vm2113, %v2064, %v2066
        %v2160 = vsel %vm2113, %v2061, %v2063
        %v2161 = vsel %vm2113, %v2062, %v2064
        %v2162 = vsel %vm2113, %v2059, %v2061
        %v2163 = vsel %vm2113, %v2060, %v2062
        %v2164 = vsel %vm2113, %v2057, %v2059
        %v2165 = vsel %vm2113, %v2058, %v2060
        %v2166 = vsel %vm2113, %v2055, %v2057
        %v2167 = vsel %vm2113, %v2056, %v2058
        %v2168 = vsel %vm2113, %v2053, %v2055
        %v2169 = vsel %vm2113, %v2054, %v2056
        %v2170 = vsel %vm2113, %v2051, %v2053
        %v2171 = vsel %vm2113, %v2052, %v2054
        %v2172 = vsel %vm2113, %v2049, %v2051
        %v2173 = vsel %vm2113, %v2050, %v2052
        %v2174 = vsel %vm2113, %v2047, %v2049
        %v2175 = vsel %vm2113, %v2048, %v2050
        %v2176 = vsel %vm2113, %v2109, %v2047
        %v2177 = vsel %vm2113, %v2110, %v2048
        %v2274 = vunpack.c.l.b16 %v315
        %v2275 = vunpack.c.h.b16 %v315
        %v2276 = vunpack.c.l.b16 %v316
        %v2277 = vunpack.c.h.b16 %v316
        %v2278 = vunpack.c.l.b16 %v317
        %v2279 = vunpack.c.h.b16 %v317
        %v2280 = vunpack.c.l.b16 %v318
        %v2281 = vunpack.c.h.b16 %v318
        %v2282 = vunpack.c.l.b16 %v319
        %v2283 = vunpack.c.h.b16 %v319
        %v2284 = vunpack.c.l.b16 %v320
        %v2285 = vunpack.c.h.b16 %v320
        %v2286 = vunpack.c.l.b16 %v321
        %v2287 = vunpack.c.h.b16 %v321
        %v2288 = vunpack.c.l.b16 %v322
        %v2289 = vunpack.c.h.b16 %v322
        %v2290 = vunpack.c.l.b16 %v323
        %v2291 = vunpack.c.h.b16 %v323
        %v2292 = vunpack.c.l.b16 %v324
        %v2293 = vunpack.c.h.b16 %v324
        %v2294 = vunpack.c.l.b16 %v325
        %v2295 = vunpack.c.h.b16 %v325
        %v2296 = vunpack.c.l.b16 %v326
        %v2297 = vunpack.c.h.b16 %v326
        %v2298 = vunpack.c.l.b16 %v327
        %v2299 = vunpack.c.h.b16 %v327
        %v2300 = vunpack.c.l.b16 %v328
        %v2301 = vunpack.c.h.b16 %v328
        %v2302 = vunpack.c.l.b16 %v329
        %v2303 = vunpack.c.h.b16 %v329
        %v2304 = vunpack.c.l.b16 %v330
        %v2305 = vunpack.c.h.b16 %v330
        %v2306 = vunpack.c.l.b16 %v331
        %v2307 = vunpack.c.h.b16 %v331
        %v2308 = vunpack.c.l.b16 %v332
        %v2309 = vunpack.c.h.b16 %v332
        %v2310 = vunpack.c.l.b16 %v333
        %v2311 = vunpack.c.h.b16 %v333
        %v2312 = vunpack.c.l.b16 %v334
        %v2313 = vunpack.c.h.b16 %v334
        %v2314 = vunpack.c.l.b16 %v335
        %v2315 = vunpack.c.h.b16 %v335
        %v2316 = vunpack.c.l.b16 %v336
        %v2317 = vunpack.c.h.b16 %v336
        %v2318 = vunpack.c.l.b16 %v337
        %v2319 = vunpack.c.h.b16 %v337
        %v2320 = vunpack.c.l.b16 %v338
        %v2321 = vunpack.c.h.b16 %v338
        %v2322 = vunpack.c.l.b16 %v339
        %v2323 = vunpack.c.h.b16 %v339
        %v2324 = vunpack.c.l.b16 %v340
        %v2325 = vunpack.c.h.b16 %v340
        %v2326 = vunpack.c.l.b16 %v341
        %v2327 = vunpack.c.h.b16 %v341
        %v2328 = vunpack.c.l.b16 %v342
        %v2329 = vunpack.c.h.b16 %v342
        %v2330 = vunpack.c.l.b16 %v343
        %v2331 = vunpack.c.h.b16 %v343
        %v2332 = vunpack.c.l.b16 %v344
        %v2333 = vunpack.c.h.b16 %v344
        %v2334 = vunpack.c.l.b16 %v345
        %v2335 = vunpack.c.h.b16 %v345
        %v2336 = vunpack.c.l.b16 %v346
        %v2337 = vunpack.c.h.b16 %v346
        %v2338 = vunpack.c.l.b16 %v347
        %v2339 = vunpack.c.h.b16 %v347
        %v2340 = vunpack.c.l.b16 %v348
        %v2341 = vunpack.c.h.b16 %v348
        %v2342 = vunpack.c.l.b16 %v349
        %v2343 = vunpack.c.h.b16 %v349
        %v2344 = vunpack.c.l.b16 %v350
        %v2345 = vunpack.c.h.b16 %v350
        %v2346 = vunpack.c.l.b16 %v351
        %v2347 = vunpack.c.h.b16 %v351
        %v2348 = vunpack.c.l.b16 %v352
        %v2349 = vunpack.c.h.b16 %v352
        %v2350 = vunpack.c.l.b16 %v353
        %v2351 = vunpack.c.h.b16 %v353
        %v2352 = vunpack.c.l.b16 %v354
        %v2353 = vunpack.c.h.b16 %v354
        %v2354 = vunpack.c.l.b16 %v355
        %v2355 = vunpack.c.h.b16 %v355
        %v2356 = vunpack.c.l.b16 %v356
        %v2357 = vunpack.c.h.b16 %v356
        %v2358 = vunpack.c.l.b16 %v357
        %v2359 = vunpack.c.h.b16 %v357
        %v2360 = vunpack.c.l.b16 %v358
        %v2361 = vunpack.c.h.b16 %v358
        %v2362 = vunpack.c.l.b16 %v359
        %v2363 = vunpack.c.h.b16 %v359
        %v2364 = vunpack.c.l.b16 %v360
        %v2365 = vunpack.c.h.b16 %v360
        %v2366 = vunpack.c.l.b16 %v361
        %v2367 = vunpack.c.h.b16 %v361
        %v2368 = vunpack.c.l.b16 %v362
        %v2369 = vunpack.c.h.b16 %v362
        %v2370 = vunpack.c.l.b16 %v363
        %v2371 = vunpack.c.h.b16 %v363
        %v2372 = vunpack.c.l.b16 %v364
        %v2373 = vunpack.c.h.b16 %v364
        %v2374 = vunpack.c.l.b16 %v365
        %v2375 = vunpack.c.h.b16 %v365
        %v2376 = vunpack.c.l.b16 %v366
        %v2377 = vunpack.c.h.b16 %v366
        %v2378 = vunpack.c.l.b16 %v367
        %v2379 = vunpack.c.h.b16 %v367
        %v2380 = vunpack.c.l.b16 %v368
        %v2381 = vunpack.c.h.b16 %v368
        %v2382 = vunpack.c.l.b16 %v369
        %v2383 = vunpack.c.h.b16 %v369
        %v2384 = vunpack.c.l.b16 %v370
        %v2385 = vunpack.c.h.b16 %v370
        %v2386 = vunpack.c.l.b16 %v371
        %v2387 = vunpack.c.h.b16 %v371
        %v2388 = vunpack.c.l.b16 %v372
        %v2389 = vunpack.c.h.b16 %v372
        %v2390 = vunpack.c.l.b16 %v373
        %v2391 = vunpack.c.h.b16 %v373
        %v2392 = vunpack.c.l.b16 %v374
        %v2393 = vunpack.c.h.b16 %v374
        %v2394 = vunpack.c.l.b16 %v375
        %v2395 = vunpack.c.h.b16 %v375
        %v2396 = vunpack.c.l.b16 %v376
        %v2397 = vunpack.c.h.b16 %v376
        %v2398 = vunpack.c.l.b16 %v377
        %v2399 = vunpack.c.h.b16 %v377
        %v2400 = vunpack.c.l.b16 %v378
        %v2401 = vunpack.c.h.b16 %v378
        %v2402 = vunpack.c.l.b16 %v379
        %v2403 = vunpack.c.h.b16 %v379
        %v2404 = vunpack.c.l.b16 %v380
        %v2405 = vunpack.c.h.b16 %v380
        %v2406 = vunpack.c.l.b16 %v381
        %v2407 = vunpack.c.h.b16 %v381
        %v2408 = vunpack.c.l.b16 %v382
        %v2409 = vunpack.c.h.b16 %v382
        %v2410 = vunpack.c.l.b16 %v383
        %v2411 = vunpack.c.h.b16 %v383
        %v2412 = vunpack.c.l.b16 %v384
        %v2413 = vunpack.c.h.b16 %v384
        %v2414 = vunpack.c.l.b16 %v385
        %v2415 = vunpack.c.h.b16 %v385
        %v2416 = vunpack.c.l.b16 %v386
        %v2417 = vunpack.c.h.b16 %v386
        %v2418 = vunpack.c.l.b16 %v387
        %v2419 = vunpack.c.h.b16 %v387
        %v2420 = vunpack.c.l.b16 %v388
        %v2421 = vunpack.c.h.b16 %v388
        %v2422 = vunpack.c.l.b16 %v389
        %v2423 = vunpack.c.h.b16 %v389
        %v2424 = vunpack.c.l.b16 %v390
        %v2425 = vunpack.c.h.b16 %v390
        %v2426 = vunpack.c.l.b16 %v391
        %v2427 = vunpack.c.h.b16 %v391
        %v2428 = vunpack.c.l.b16 %v392
        %v2429 = vunpack.c.h.b16 %v392
        %v2430 = vunpack.c.l.b16 %v393
        %v2431 = vunpack.c.h.b16 %v393
        %v2432 = vunpack.c.l.b16 %v394
        %v2433 = vunpack.c.h.b16 %v394
        %v2434 = vunpack.c.l.b16 %v395
        %v2435 = vunpack.c.h.b16 %v395
        %v2436 = vunpack.c.l.b16 %v396
        %v2437 = vunpack.c.h.b16 %v396
        %v2438 = vunpack.c.l.b16 %v397
        %v2439 = vunpack.c.h.b16 %v397
        %v2440 = vunpack.c.l.b16 %v398
        %v2441 = vunpack.c.h.b16 %v398
        %v2442 = vunpack.c.l.b16 %v399
        %v2443 = vunpack.c.h.b16 %v399
        %v2444 = vunpack.c.l.b16 %v400
        %v2445 = vunpack.c.h.b16 %v400
        %v2446 = vunpack.c.l.b16 %v401
        %v2447 = vunpack.c.h.b16 %v401
        %v2448 = vunpack.c.l.b16 %v402
        %v2449 = vunpack.c.h.b16 %v402
        %v2450 = vunpack.c.l.b16 %v403
        %v2451 = vunpack.c.h.b16 %v403
        %v2452 = vunpack.c.l.b16 %v404
        %v2453 = vunpack.c.h.b16 %v404
        %v2454 = vunpack.c.l.b16 %v405
        %v2455 = vunpack.c.h.b16 %v405
        %v2456 = vunpack.c.l.b16 %v406
        %v2457 = vunpack.c.h.b16 %v406
        %v2458 = vunpack.c.l.b16 %v407
        %v2459 = vunpack.c.h.b16 %v407
        %v2460 = vunpack.c.l.b16 %v408
        %v2461 = vunpack.c.h.b16 %v408
        %v2462 = vunpack.c.l.b16 %v409
        %v2463 = vunpack.c.h.b16 %v409
        %v2464 = vunpack.c.l.b16 %v410
        %v2465 = vunpack.c.h.b16 %v410
        %v2466 = vpack.c.b16 %v2276, %v2274
        %v2467 = vpack.c.b16 %v2277, %v2275
        %v2468 = vpack.c.b16 %v2280, %v2278
        %v2469 = vpack.c.b16 %v2281, %v2279
        %v2470 = vpack.c.b16 %v2284, %v2282
        %v2471 = vpack.c.b16 %v2285, %v2283
        %v2472 = vpack.c.b16 %v2288, %v2286
        %v2473 = vpack.c.b16 %v2289, %v2287
        %v2474 = vpack.c.b16 %v2292, %v2290
        %v2475 = vpack.c.b16 %v2293, %v2291
        %v2476 = vpack.c.b16 %v2296, %v2294
        %v2477 = vpack.c.b16 %v2297, %v2295
        %v2478 = vpack.c.b16 %v2300, %v2298
        %v2479 = vpack.c.b16 %v2301, %v2299
        %v2480 = vpack.c.b16 %v2304, %v2302
        %v2481 = vpack.c.b16 %v2305, %v2303
        %v2482 = vpack.c.b16 %v2308, %v2306
        %v2483 = vpack.c.b16 %v2309, %v2307
        %v2484 = vpack.c.b16 %v2312, %v2310
        %v2485 = vpack.c.b16 %v2313, %v2311
        %v2486 = vpack.c.b16 %v2316, %v2314
        %v2487 = vpack.c.b16 %v2317, %v2315
        %v2488 = vpack.c.b16 %v2320, %v2318
        %v2489 = vpack.c.b16 %v2321, %v2319
        %v2490 = vpack.c.b16 %v2324, %v2322
        %v2491 = vpack.c.b16 %v2325, %v2323
        %v2492 = vpack.c.b16 %v2328, %v2326
        %v2493 = vpack.c.b16 %v2329, %v2327
        %v2494 = vpack.c.b16 %v2332, %v2330
        %v2495 = vpack.c.b16 %v2333, %v2331
        %v2496 = vpack.c.b16 %v2336, %v2334
        %v2497 = vpack.c.b16 %v2337, %v2335
        %v2498 = vpack.c.b16 %v2340, %v2338
        %v2499 = vpack.c.b16 %v2341, %v2339
        %v2500 = vpack.c.b16 %v2344, %v2342
        %v2501 = vpack.c.b16 %v2345, %v2343
        %v2502 = vpack.c.b16 %v2348, %v2346
        %v2503 = vpack.c.b16 %v2349, %v2347
        %v2504 = vpack.c.b16 %v2352, %v2350
        %v2505 = vpack.c.b16 %v2353, %v2351
        %v2506 = vpack.c.b16 %v2356, %v2354
        %v2507 = vpack.c.b16 %v2357, %v2355
        %v2508 = vpack.c.b16 %v2360, %v2358
        %v2509 = vpack.c.b16 %v2361, %v2359
        %v2510 = vpack.c.b16 %v2364, %v2362
        %v2511 = vpack.c.b16 %v2365, %v2363
        %v2512 = vpack.c.b16 %v2368, %v2366
        %v2513 = vpack.c.b16 %v2369, %v2367
        %v2514 = vpack.c.b16 %v2372, %v2370
        %v2515 = vpack.c.b16 %v2373, %v2371
        %v2516 = vpack.c.b16 %v2376, %v2374
        %v2517 = vpack.c.b16 %v2377, %v2375
        %v2518 = vpack.c.b16 %v2380, %v2378
        %v2519 = vpack.c.b16 %v2381, %v2379
        %v2520 = vpack.c.b16 %v2384, %v2382
        %v2521 = vpack.c.b16 %v2385, %v2383
        %v2522 = vpack.c.b16 %v2388, %v2386
        %v2523 = vpack.c.b16 %v2389, %v2387
        %v2524 = vpack.c.b16 %v2392, %v2390
        %v2525 = vpack.c.b16 %v2393, %v2391
        %v2526 = vpack.c.b16 %v2396, %v2394
        %v2527 = vpack.c.b16 %v2397, %v2395
        %v2528 = vpack.c.b16 %v2400, %v2398
        %v2529 = vpack.c.b16 %v2401, %v2399
        %v2530 = vpack.c.b16 %v2404, %v2402
        %v2531 = vpack.c.b16 %v2405, %v2403
        %v2532 = vpack.c.b16 %v2408, %v2406
        %v2533 = vpack.c.b16 %v2409, %v2407
        %v2534 = vpack.c.b16 %v2412, %v2410
        %v2535 = vpack.c.b16 %v2413, %v2411
        %v2536 = vpack.c.b16 %v2416, %v2414
        %v2537 = vpack.c.b16 %v2417, %v2415
        %v2538 = vpack.c.b16 %v2420, %v2418
        %v2539 = vpack.c.b16 %v2421, %v2419
        %v2540 = vpack.c.b16 %v2424, %v2422
        %v2541 = vpack.c.b16 %v2425, %v2423
        %v2542 = vpack.c.b16 %v2428, %v2426
        %v2543 = vpack.c.b16 %v2429, %v2427
        %v2544 = vpack.c.b16 %v2432, %v2430
        %v2545 = vpack.c.b16 %v2433, %v2431
        %v2546 = vpack.c.b16 %v2436, %v2434
        %v2547 = vpack.c.b16 %v2437, %v2435
        %v2548 = vpack.c.b16 %v2440, %v2438
        %v2549 = vpack.c.b16 %v2441, %v2439
        %v2550 = vpack.c.b16 %v2444, %v2442
        %v2551 = vpack.c.b16 %v2445, %v2443
        %v2552 = vpack.c.b16 %v2448, %v2446
        %v2553 = vpack.c.b16 %v2449, %v2447
        %v2554 = vpack.c.b16 %v2452, %v2450
        %v2555 = vpack.c.b16 %v2453, %v2451
        %v2556 = vpack.c.b16 %v2456, %v2454
        %v2557 = vpack.c.b16 %v2457, %v2455
        %v2558 = vpack.c.b16 %v2460, %v2458
        %v2559 = vpack.c.b16 %v2461, %v2459
        %v2560 = vpack.c.b16 %v2464, %v2462
        %v2561 = vpack.c.b16 %v2465, %v2463
        %2658 = vmatprep.subr.bf16.mxu0 %v2467
        %2659 = vmatpush1.bf16.msra.mxu0 %v2466
        %2660 = vmatprep.subr.bf16.mxu0 %v2469
        %2661 = vmatpush1.bf16.msra.mxu0 %v2468
        %2662 = vmatprep.subr.bf16.mxu0 %v2471
        %2663 = vmatpush1.bf16.msra.mxu0 %v2470
        %2664 = vmatprep.subr.bf16.mxu0 %v2473
        %2665 = vmatpush1.bf16.msra.mxu0 %v2472
        %2666 = vmatprep.subr.bf16.mxu0 %v2475
        %2667 = vmatpush1.bf16.msra.mxu0 %v2474
        %2668 = vmatprep.subr.bf16.mxu0 %v2477
        %2669 = vmatpush1.bf16.msra.mxu0 %v2476
        %2670 = vmatprep.subr.bf16.mxu0 %v2479
        %2671 = vmatpush1.bf16.msra.mxu0 %v2478
        %2672 = vmatprep.subr.bf16.mxu0 %v2481
        %2673 = vmatpush1.bf16.msra.mxu0 %v2480
        %2674 = vmatprep.subr.bf16.mxu0 %v2483
        %2675 = vmatpush1.bf16.msra.mxu0 %v2482
        %2676 = vmatprep.subr.bf16.mxu0 %v2485
        %2677 = vmatpush1.bf16.msra.mxu0 %v2484
        %2678 = vmatprep.subr.bf16.mxu0 %v2487
        %2679 = vmatpush1.bf16.msra.mxu0 %v2486
        %2680 = vmatprep.subr.bf16.mxu0 %v2489
        %2681 = vmatpush1.bf16.msra.mxu0 %v2488
        %2682 = vmatprep.subr.bf16.mxu0 %v2491
        %2683 = vmatpush1.bf16.msra.mxu0 %v2490
        %2684 = vmatprep.subr.bf16.mxu0 %v2493
        %2685 = vmatpush1.bf16.msra.mxu0 %v2492
        %2686 = vmatprep.subr.bf16.mxu0 %v2495
        %2687 = vmatpush1.bf16.msra.mxu0 %v2494
        %2688 = vmatprep.subr.bf16.mxu0 %v2497
        %2689 = vmatpush1.bf16.msra.mxu0 %v2496
        %2690 = vmatprep.mubr.bf16.mxu0 %v797
        %2691 = vmatmul.mubr.bf16.gmra.mrb[0].mxu0 %v796
        %v2692 = vpop.f32.mrb[0].mxu0
        %v2693 = vadd.f32 %v2174, %v2692
        %v2694 = vpop.f32.mrb[0].mxu0
        %v2695 = vadd.f32 %v2175, %v2694
        %v2696 = vpop.f32.mrb[0].mxu0
        %v2697 = vadd.f32 %v2172, %v2696
        %v2698 = vpop.f32.mrb[0].mxu0
        %v2699 = vadd.f32 %v2173, %v2698
        %2700 = vmatprep.mubr.bf16.mxu0 %v803
        %2701 = vmatmul.mubr.bf16.gmra.mrb[0].mxu0 %v802
        %v2702 = vpop.f32.mrb[0].mxu0
        %v2703 = vadd.f32 %v2170, %v2702
        %v2704 = vpop.f32.mrb[0].mxu0
        %v2705 = vadd.f32 %v2171, %v2704
        %v2706 = vpop.f32.mrb[0].mxu0
        %v2707 = vadd.f32 %v2168, %v2706
        %v2708 = vpop.f32.mrb[0].mxu0
        %v2709 = vadd.f32 %v2169, %v2708
        %2710 = vmatprep.mubr.bf16.mxu0 %v809
        %2711 = vmatmul.mubr.bf16.gmra.mrb[0].mxu0 %v808
        %v2712 = vpop.f32.mrb[0].mxu0
        %v2713 = vadd.f32 %v2166, %v2712
        %v2714 = vpop.f32.mrb[0].mxu0
        %v2715 = vadd.f32 %v2167, %v2714
        %v2716 = vpop.f32.mrb[0].mxu0
        %v2717 = vadd.f32 %v2164, %v2716
        %v2718 = vpop.f32.mrb[0].mxu0
        %v2719 = vadd.f32 %v2165, %v2718
        %2720 = vmatprep.mubr.bf16.mxu0 %v815
        %2721 = vmatmul.mubr.bf16.gmra.mrb[0].mxu0 %v814
        %v2722 = vpop.f32.mrb[0].mxu0
        %v2723 = vadd.f32 %v2162, %v2722
        %v2724 = vpop.f32.mrb[0].mxu0
        %v2725 = vadd.f32 %v2163, %v2724
        %v2726 = vpop.f32.mrb[0].mxu0
        %v2727 = vadd.f32 %v2160, %v2726
        %v2728 = vpop.f32.mrb[0].mxu0
        %v2729 = vadd.f32 %v2161, %v2728
        %2730 = vmatprep.mubr.bf16.mxu0 %v821
        %2731 = vmatmul.mubr.bf16.gmra.mrb[0].mxu0 %v820
        %v2732 = vpop.f32.mrb[0].mxu0
        %v2733 = vadd.f32 %v2158, %v2732
        %v2734 = vpop.f32.mrb[0].mxu0
        %v2735 = vadd.f32 %v2159, %v2734
        %v2736 = vpop.f32.mrb[0].mxu0
        %v2737 = vadd.f32 %v2156, %v2736
        %v2738 = vpop.f32.mrb[0].mxu0
        %v2739 = vadd.f32 %v2157, %v2738
        %2740 = vmatprep.mubr.bf16.mxu0 %v827
        %2741 = vmatmul.mubr.bf16.gmra.mrb[0].mxu0 %v826
        %v2742 = vpop.f32.mrb[0].mxu0
        %v2743 = vadd.f32 %v2154, %v2742
        %v2744 = vpop.f32.mrb[0].mxu0
        %v2745 = vadd.f32 %v2155, %v2744
        %v2746 = vpop.f32.mrb[0].mxu0
        %v2747 = vadd.f32 %v2152, %v2746
        %v2748 = vpop.f32.mrb[0].mxu0
        %v2749 = vadd.f32 %v2153, %v2748
        %2750 = vmatprep.mubr.bf16.mxu0 %v833
        %2751 = vmatmul.mubr.bf16.gmra.mrb[0].mxu0 %v832
        %v2752 = vpop.f32.mrb[0].mxu0
        %v2753 = vadd.f32 %v2150, %v2752
        %v2754 = vpop.f32.mrb[0].mxu0
        %v2755 = vadd.f32 %v2151, %v2754
        %v2756 = vpop.f32.mrb[0].mxu0
        %v2757 = vadd.f32 %v2148, %v2756
        %v2758 = vpop.f32.mrb[0].mxu0
        %v2759 = vadd.f32 %v2149, %v2758
        %2760 = vmatprep.mubr.bf16.mxu0 %v839
        %2761 = vmatmul.mubr.bf16.gmra.mrb[0].mxu0 %v838
        %v2762 = vpop.f32.mrb[0].mxu0
        %v2763 = vadd.f32 %v2146, %v2762
        %v2764 = vpop.f32.mrb[0].mxu0
        %v2765 = vadd.f32 %v2147, %v2764
        %v2766 = vpop.f32.mrb[0].mxu0
        %v2767 = vadd.f32 %v2144, %v2766
        %v2768 = vpop.f32.mrb[0].mxu0
        %v2769 = vadd.f32 %v2145, %v2768
        %2770 = vmatprep.mubr.bf16.mxu0 %v845
        %2771 = vmatmul.mubr.bf16.gmra.mrb[0].mxu0 %v844
        %v2772 = vpop.f32.mrb[0].mxu0
        %v2773 = vadd.f32 %v2142, %v2772
        %v2774 = vpop.f32.mrb[0].mxu0
        %v2775 = vadd.f32 %v2143, %v2774
        %v2776 = vpop.f32.mrb[0].mxu0
        %v2777 = vadd.f32 %v2140, %v2776
        %v2778 = vpop.f32.mrb[0].mxu0
        %v2779 = vadd.f32 %v2141, %v2778
        %2780 = vmatprep.mubr.bf16.mxu0 %v851
        %2781 = vmatmul.mubr.bf16.gmra.mrb[0].mxu0 %v850
        %v2782 = vpop.f32.mrb[0].mxu0
        %v2783 = vadd.f32 %v2138, %v2782
        %v2784 = vpop.f32.mrb[0].mxu0
        %v2785 = vadd.f32 %v2139, %v2784
        %v2786 = vpop.f32.mrb[0].mxu0
        %v2787 = vadd.f32 %v2136, %v2786
        %v2788 = vpop.f32.mrb[0].mxu0
        %v2789 = vadd.f32 %v2137, %v2788
        %2790 = vmatprep.mubr.bf16.mxu0 %v857
        %2791 = vmatmul.mubr.bf16.gmra.mrb[0].mxu0 %v856
        %v2792 = vpop.f32.mrb[0].mxu0
        %v2793 = vadd.f32 %v2134, %v2792
        %v2794 = vpop.f32.mrb[0].mxu0
        %v2795 = vadd.f32 %v2135, %v2794
        %v2796 = vpop.f32.mrb[0].mxu0
        %v2797 = vadd.f32 %v2132, %v2796
        %v2798 = vpop.f32.mrb[0].mxu0
        %v2799 = vadd.f32 %v2133, %v2798
        %2800 = vmatprep.mubr.bf16.mxu0 %v863
        %2801 = vmatmul.mubr.bf16.gmra.mrb[0].mxu0 %v862
        %v2802 = vpop.f32.mrb[0].mxu0
        %v2803 = vadd.f32 %v2130, %v2802
        %v2804 = vpop.f32.mrb[0].mxu0
        %v2805 = vadd.f32 %v2131, %v2804
        %v2806 = vpop.f32.mrb[0].mxu0
        %v2807 = vadd.f32 %v2128, %v2806
        %v2808 = vpop.f32.mrb[0].mxu0
        %v2809 = vadd.f32 %v2129, %v2808
        %2810 = vmatprep.mubr.bf16.mxu0 %v869
        %2811 = vmatmul.mubr.bf16.gmra.mrb[0].mxu0 %v868
        %v2812 = vpop.f32.mrb[0].mxu0
        %v2813 = vadd.f32 %v2126, %v2812
        %v2814 = vpop.f32.mrb[0].mxu0
        %v2815 = vadd.f32 %v2127, %v2814
        %v2816 = vpop.f32.mrb[0].mxu0
        %v2817 = vadd.f32 %v2124, %v2816
        %v2818 = vpop.f32.mrb[0].mxu0
        %v2819 = vadd.f32 %v2125, %v2818
        %2820 = vmatprep.mubr.bf16.mxu0 %v875
        %2821 = vmatmul.mubr.bf16.gmra.mrb[0].mxu0 %v874
        %v2822 = vpop.f32.mrb[0].mxu0
        %v2823 = vadd.f32 %v2122, %v2822
        %v2824 = vpop.f32.mrb[0].mxu0
        %v2825 = vadd.f32 %v2123, %v2824
        %v2826 = vpop.f32.mrb[0].mxu0
        %v2827 = vadd.f32 %v2120, %v2826
        %v2828 = vpop.f32.mrb[0].mxu0
        %v2829 = vadd.f32 %v2121, %v2828
        %2830 = vmatprep.mubr.bf16.mxu0 %v881
        %2831 = vmatmul.mubr.bf16.gmra.mrb[0].mxu0 %v880
        %v2832 = vpop.f32.mrb[0].mxu0
        %v2833 = vadd.f32 %v2118, %v2832
        %v2834 = vpop.f32.mrb[0].mxu0
        %v2835 = vadd.f32 %v2119, %v2834
        %v2836 = vpop.f32.mrb[0].mxu0
        %v2837 = vadd.f32 %v2116, %v2836
        %v2838 = vpop.f32.mrb[0].mxu0
        %v2839 = vadd.f32 %v2117, %v2838
        %2840 = vmatprep.mubr.bf16.mxu0 %v887
        %2841 = vmatmul.mubr.bf16.gmra.mrb[0].mxu0 %v886
        %v2842 = vpop.f32.mrb[0].mxu0
        %v2843 = vadd.f32 %v2114, %v2842
        %v2844 = vpop.f32.mrb[0].mxu0
        %v2845 = vadd.f32 %v2115, %v2844
        %v2846 = vpop.f32.mrb[0].mxu0
        %v2847 = vadd.f32 %v2176, %v2846
        %v2848 = vpop.f32.mrb[0].mxu0
        %v2849 = vadd.f32 %v2177, %v2848
        %2850 = vdwg.mxu0
        %2851 = vmatprep.subr.bf16.mxu0 %v2499
        %2852 = vmatpush1.bf16.msra.mxu0 %v2498
        %2853 = vmatprep.subr.bf16.mxu0 %v2501
        %2854 = vmatpush1.bf16.msra.mxu0 %v2500
        %2855 = vmatprep.subr.bf16.mxu0 %v2503
        %2856 = vmatpush1.bf16.msra.mxu0 %v2502
        %2857 = vmatprep.subr.bf16.mxu0 %v2505
        %2858 = vmatpush1.bf16.msra.mxu0 %v2504
        %2859 = vmatprep.subr.bf16.mxu0 %v2507
        %2860 = vmatpush1.bf16.msra.mxu0 %v2506
        %2861 = vmatprep.subr.bf16.mxu0 %v2509
        %2862 = vmatpush1.bf16.msra.mxu0 %v2508
        %2863 = vmatprep.subr.bf16.mxu0 %v2511
        %2864 = vmatpush1.bf16.msra.mxu0 %v2510
        %2865 = vmatprep.subr.bf16.mxu0 %v2513
        %2866 = vmatpush1.bf16.msra.mxu0 %v2512
        %2867 = vmatprep.subr.bf16.mxu0 %v2515
        %2868 = vmatpush1.bf16.msra.mxu0 %v2514
        %2869 = vmatprep.subr.bf16.mxu0 %v2517
        %2870 = vmatpush1.bf16.msra.mxu0 %v2516
        %2871 = vmatprep.subr.bf16.mxu0 %v2519
        %2872 = vmatpush1.bf16.msra.mxu0 %v2518
        %2873 = vmatprep.subr.bf16.mxu0 %v2521
        %2874 = vmatpush1.bf16.msra.mxu0 %v2520
        %2875 = vmatprep.subr.bf16.mxu0 %v2523
        %2876 = vmatpush1.bf16.msra.mxu0 %v2522
        %2877 = vmatprep.subr.bf16.mxu0 %v2525
        %2878 = vmatpush1.bf16.msra.mxu0 %v2524
        %2879 = vmatprep.subr.bf16.mxu0 %v2527
        %2880 = vmatpush1.bf16.msra.mxu0 %v2526
        %2881 = vmatprep.subr.bf16.mxu0 %v2529
        %2882 = vmatpush1.bf16.msra.mxu0 %v2528
        %2883 = vmatprep.mubr.bf16.mxu0 %v799
        %2884 = vmatmul.mubr.bf16.gmra.mrb[0].mxu0 %v798
        %v2885 = vpop.f32.mrb[0].mxu0
        %v2886 = vadd.f32 %v2693, %v2885
        %v2887 = vpop.f32.mrb[0].mxu0
        %v2888 = vadd.f32 %v2695, %v2887
        %v2889 = vpop.f32.mrb[0].mxu0
        %v2890 = vadd.f32 %v2697, %v2889
        %v2891 = vpop.f32.mrb[0].mxu0
        %v2892 = vadd.f32 %v2699, %v2891
        %2893 = vmatprep.mubr.bf16.mxu0 %v805
        %2894 = vmatmul.mubr.bf16.gmra.mrb[0].mxu0 %v804
        %v2895 = vpop.f32.mrb[0].mxu0
        %v2896 = vadd.f32 %v2703, %v2895
        %v2897 = vpop.f32.mrb[0].mxu0
        %v2898 = vadd.f32 %v2705, %v2897
        %v2899 = vpop.f32.mrb[0].mxu0
        %v2900 = vadd.f32 %v2707, %v2899
        %v2901 = vpop.f32.mrb[0].mxu0
        %v2902 = vadd.f32 %v2709, %v2901
        %2903 = vmatprep.mubr.bf16.mxu0 %v811
        %2904 = vmatmul.mubr.bf16.gmra.mrb[0].mxu0 %v810
        %v2905 = vpop.f32.mrb[0].mxu0
        %v2906 = vadd.f32 %v2713, %v2905
        %v2907 = vpop.f32.mrb[0].mxu0
        %v2908 = vadd.f32 %v2715, %v2907
        %v2909 = vpop.f32.mrb[0].mxu0
        %v2910 = vadd.f32 %v2717, %v2909
        %v2911 = vpop.f32.mrb[0].mxu0
        %v2912 = vadd.f32 %v2719, %v2911
        %2913 = vmatprep.mubr.bf16.mxu0 %v817
        %2914 = vmatmul.mubr.bf16.gmra.mrb[0].mxu0 %v816
        %v2915 = vpop.f32.mrb[0].mxu0
        %v2916 = vadd.f32 %v2723, %v2915
        %v2917 = vpop.f32.mrb[0].mxu0
        %v2918 = vadd.f32 %v2725, %v2917
        %v2919 = vpop.f32.mrb[0].mxu0
        %v2920 = vadd.f32 %v2727, %v2919
        %v2921 = vpop.f32.mrb[0].mxu0
        %v2922 = vadd.f32 %v2729, %v2921
        %2923 = vmatprep.mubr.bf16.mxu0 %v823
        %2924 = vmatmul.mubr.bf16.gmra.mrb[0].mxu0 %v822
        %v2925 = vpop.f32.mrb[0].mxu0
        %v2926 = vadd.f32 %v2733, %v2925
        %v2927 = vpop.f32.mrb[0].mxu0
        %v2928 = vadd.f32 %v2735, %v2927
        %v2929 = vpop.f32.mrb[0].mxu0
        %v2930 = vadd.f32 %v2737, %v2929
        %v2931 = vpop.f32.mrb[0].mxu0
        %v2932 = vadd.f32 %v2739, %v2931
        %2933 = vmatprep.mubr.bf16.mxu0 %v829
        %2934 = vmatmul.mubr.bf16.gmra.mrb[0].mxu0 %v828
        %v2935 = vpop.f32.mrb[0].mxu0
        %v2936 = vadd.f32 %v2743, %v2935
        %v2937 = vpop.f32.mrb[0].mxu0
        %v2938 = vadd.f32 %v2745, %v2937
        %v2939 = vpop.f32.mrb[0].mxu0
        %v2940 = vadd.f32 %v2747, %v2939
        %v2941 = vpop.f32.mrb[0].mxu0
        %v2942 = vadd.f32 %v2749, %v2941
        %2943 = vmatprep.mubr.bf16.mxu0 %v835
        %2944 = vmatmul.mubr.bf16.gmra.mrb[0].mxu0 %v834
        %v2945 = vpop.f32.mrb[0].mxu0
        %v2946 = vadd.f32 %v2753, %v2945
        %v2947 = vpop.f32.mrb[0].mxu0
        %v2948 = vadd.f32 %v2755, %v2947
        %v2949 = vpop.f32.mrb[0].mxu0
        %v2950 = vadd.f32 %v2757, %v2949
        %v2951 = vpop.f32.mrb[0].mxu0
        %v2952 = vadd.f32 %v2759, %v2951
        %2953 = vmatprep.mubr.bf16.mxu0 %v841
        %2954 = vmatmul.mubr.bf16.gmra.mrb[0].mxu0 %v840
        %v2955 = vpop.f32.mrb[0].mxu0
        %v2956 = vadd.f32 %v2763, %v2955
        %v2957 = vpop.f32.mrb[0].mxu0
        %v2958 = vadd.f32 %v2765, %v2957
        %v2959 = vpop.f32.mrb[0].mxu0
        %v2960 = vadd.f32 %v2767, %v2959
        %v2961 = vpop.f32.mrb[0].mxu0
        %v2962 = vadd.f32 %v2769, %v2961
        %2963 = vmatprep.mubr.bf16.mxu0 %v847
        %2964 = vmatmul.mubr.bf16.gmra.mrb[0].mxu0 %v846
        %v2965 = vpop.f32.mrb[0].mxu0
        %v2966 = vadd.f32 %v2773, %v2965
        %v2967 = vpop.f32.mrb[0].mxu0
        %v2968 = vadd.f32 %v2775, %v2967
        %v2969 = vpop.f32.mrb[0].mxu0
        %v2970 = vadd.f32 %v2777, %v2969
        %v2971 = vpop.f32.mrb[0].mxu0
        %v2972 = vadd.f32 %v2779, %v2971
        %2973 = vmatprep.mubr.bf16.mxu0 %v853
        %2974 = vmatmul.mubr.bf16.gmra.mrb[0].mxu0 %v852
        %v2975 = vpop.f32.mrb[0].mxu0
        %v2976 = vadd.f32 %v2783, %v2975
        %v2977 = vpop.f32.mrb[0].mxu0
        %v2978 = vadd.f32 %v2785, %v2977
        %v2979 = vpop.f32.mrb[0].mxu0
        %v2980 = vadd.f32 %v2787, %v2979
        %v2981 = vpop.f32.mrb[0].mxu0
        %v2982 = vadd.f32 %v2789, %v2981
        %2983 = vmatprep.mubr.bf16.mxu0 %v859
        %2984 = vmatmul.mubr.bf16.gmra.mrb[0].mxu0 %v858
        %v2985 = vpop.f32.mrb[0].mxu0
        %v2986 = vadd.f32 %v2793, %v2985
        %v2987 = vpop.f32.mrb[0].mxu0
        %v2988 = vadd.f32 %v2795, %v2987
        %v2989 = vpop.f32.mrb[0].mxu0
        %v2990 = vadd.f32 %v2797, %v2989
        %v2991 = vpop.f32.mrb[0].mxu0
        %v2992 = vadd.f32 %v2799, %v2991
        %2993 = vmatprep.mubr.bf16.mxu0 %v865
        %2994 = vmatmul.mubr.bf16.gmra.mrb[0].mxu0 %v864
        %v2995 = vpop.f32.mrb[0].mxu0
        %v2996 = vadd.f32 %v2803, %v2995
        %v2997 = vpop.f32.mrb[0].mxu0
        %v2998 = vadd.f32 %v2805, %v2997
        %v2999 = vpop.f32.mrb[0].mxu0
        %v3000 = vadd.f32 %v2807, %v2999
        %v3001 = vpop.f32.mrb[0].mxu0
        %v3002 = vadd.f32 %v2809, %v3001
        %3003 = vmatprep.mubr.bf16.mxu0 %v871
        %3004 = vmatmul.mubr.bf16.gmra.mrb[0].mxu0 %v870
        %v3005 = vpop.f32.mrb[0].mxu0
        %v3006 = vadd.f32 %v2813, %v3005
        %v3007 = vpop.f32.mrb[0].mxu0
        %v3008 = vadd.f32 %v2815, %v3007
        %v3009 = vpop.f32.mrb[0].mxu0
        %v3010 = vadd.f32 %v2817, %v3009
        %v3011 = vpop.f32.mrb[0].mxu0
        %v3012 = vadd.f32 %v2819, %v3011
        %3013 = vmatprep.mubr.bf16.mxu0 %v877
        %3014 = vmatmul.mubr.bf16.gmra.mrb[0].mxu0 %v876
        %v3015 = vpop.f32.mrb[0].mxu0
        %v3016 = vadd.f32 %v2823, %v3015
        %v3017 = vpop.f32.mrb[0].mxu0
        %v3018 = vadd.f32 %v2825, %v3017
        %v3019 = vpop.f32.mrb[0].mxu0
        %v3020 = vadd.f32 %v2827, %v3019
        %v3021 = vpop.f32.mrb[0].mxu0
        %v3022 = vadd.f32 %v2829, %v3021
        %3023 = vmatprep.mubr.bf16.mxu0 %v883
        %3024 = vmatmul.mubr.bf16.gmra.mrb[0].mxu0 %v882
        %v3025 = vpop.f32.mrb[0].mxu0
        %v3026 = vadd.f32 %v2833, %v3025
        %v3027 = vpop.f32.mrb[0].mxu0
        %v3028 = vadd.f32 %v2835, %v3027
        %v3029 = vpop.f32.mrb[0].mxu0
        %v3030 = vadd.f32 %v2837, %v3029
        %v3031 = vpop.f32.mrb[0].mxu0
        %v3032 = vadd.f32 %v2839, %v3031
        %3033 = vmatprep.mubr.bf16.mxu0 %v889
        %3034 = vmatmul.mubr.bf16.gmra.mrb[0].mxu0 %v888
        %v3035 = vpop.f32.mrb[0].mxu0
        %v3036 = vadd.f32 %v2843, %v3035
        %v3037 = vpop.f32.mrb[0].mxu0
        %v3038 = vadd.f32 %v2845, %v3037
        %v3039 = vpop.f32.mrb[0].mxu0
        %v3040 = vadd.f32 %v2847, %v3039
        %v3041 = vpop.f32.mrb[0].mxu0
        %v3042 = vadd.f32 %v2849, %v3041
        %3043 = vdwg.mxu0
        %3044 = vmatprep.subr.bf16.mxu0 %v2531
        %3045 = vmatpush1.bf16.msra.mxu0 %v2530
        %3046 = vmatprep.subr.bf16.mxu0 %v2533
        %3047 = vmatpush1.bf16.msra.mxu0 %v2532
        %3048 = vmatprep.subr.bf16.mxu0 %v2535
        %3049 = vmatpush1.bf16.msra.mxu0 %v2534
        %3050 = vmatprep.subr.bf16.mxu0 %v2537
        %3051 = vmatpush1.bf16.msra.mxu0 %v2536
        %3052 = vmatprep.subr.bf16.mxu0 %v2539
        %3053 = vmatpush1.bf16.msra.mxu0 %v2538
        %3054 = vmatprep.subr.bf16.mxu0 %v2541
        %3055 = vmatpush1.bf16.msra.mxu0 %v2540
        %3056 = vmatprep.subr.bf16.mxu0 %v2543
        %3057 = vmatpush1.bf16.msra.mxu0 %v2542
        %3058 = vmatprep.subr.bf16.mxu0 %v2545
        %3059 = vmatpush1.bf16.msra.mxu0 %v2544
        %3060 = vmatprep.subr.bf16.mxu0 %v2547
        %3061 = vmatpush1.bf16.msra.mxu0 %v2546
        %3062 = vmatprep.subr.bf16.mxu0 %v2549
        %3063 = vmatpush1.bf16.msra.mxu0 %v2548
        %3064 = vmatprep.subr.bf16.mxu0 %v2551
        %3065 = vmatpush1.bf16.msra.mxu0 %v2550
        %3066 = vmatprep.subr.bf16.mxu0 %v2553
        %3067 = vmatpush1.bf16.msra.mxu0 %v2552
        %3068 = vmatprep.subr.bf16.mxu0 %v2555
        %3069 = vmatpush1.bf16.msra.mxu0 %v2554
        %3070 = vmatprep.subr.bf16.mxu0 %v2557
        %3071 = vmatpush1.bf16.msra.mxu0 %v2556
        %3072 = vmatprep.subr.bf16.mxu0 %v2559
        %3073 = vmatpush1.bf16.msra.mxu0 %v2558
        %3074 = vmatprep.subr.bf16.mxu0 %v2561
        %3075 = vmatpush1.bf16.msra.mxu0 %v2560
        %3076 = vmatprep.mubr.bf16.mxu0 %v801
        %3077 = vmatmul.mubr.bf16.gmra.mrb[0].mxu0 %v800
        %v3078 = vpop.f32.mrb[0].mxu0
        %v3079 = vadd.f32 %v2886, %v3078
        %v3080 = vpop.f32.mrb[0].mxu0
        %v3081 = vadd.f32 %v2888, %v3080
        %v3082 = vpop.f32.mrb[0].mxu0
        %v3083 = vadd.f32 %v2890, %v3082
        %v3084 = vpop.f32.mrb[0].mxu0
        %v3085 = vadd.f32 %v2892, %v3084
        %3086 = vmatprep.mubr.bf16.mxu0 %v807
        %3087 = vmatmul.mubr.bf16.gmra.mrb[0].mxu0 %v806
        %v3088 = vpop.f32.mrb[0].mxu0
        %v3089 = vadd.f32 %v2896, %v3088
        %v3090 = vpop.f32.mrb[0].mxu0
        %v3091 = vadd.f32 %v2898, %v3090
        %v3092 = vpop.f32.mrb[0].mxu0
        %v3093 = vadd.f32 %v2900, %v3092
        %v3094 = vpop.f32.mrb[0].mxu0
        %v3095 = vadd.f32 %v2902, %v3094
        %3096 = vmatprep.mubr.bf16.mxu0 %v813
        %3097 = vmatmul.mubr.bf16.gmra.mrb[0].mxu0 %v812
        %v3098 = vpop.f32.mrb[0].mxu0
        %v3099 = vadd.f32 %v2906, %v3098
        %v3100 = vpop.f32.mrb[0].mxu0
        %v3101 = vadd.f32 %v2908, %v3100
        %v3102 = vpop.f32.mrb[0].mxu0
        %v3103 = vadd.f32 %v2910, %v3102
        %v3104 = vpop.f32.mrb[0].mxu0
        %v3105 = vadd.f32 %v2912, %v3104
        %3106 = vmatprep.mubr.bf16.mxu0 %v819
        %3107 = vmatmul.mubr.bf16.gmra.mrb[0].mxu0 %v818
        %v3108 = vpop.f32.mrb[0].mxu0
        %v3109 = vadd.f32 %v2916, %v3108
        %v3110 = vpop.f32.mrb[0].mxu0
        %v3111 = vadd.f32 %v2918, %v3110
        %v3112 = vpop.f32.mrb[0].mxu0
        %v3113 = vadd.f32 %v2920, %v3112
        %v3114 = vpop.f32.mrb[0].mxu0
        %v3115 = vadd.f32 %v2922, %v3114
        %3116 = vmatprep.mubr.bf16.mxu0 %v825
        %3117 = vmatmul.mubr.bf16.gmra.mrb[0].mxu0 %v824
        %v3118 = vpop.f32.mrb[0].mxu0
        %v3119 = vadd.f32 %v2926, %v3118
        %v3120 = vpop.f32.mrb[0].mxu0
        %v3121 = vadd.f32 %v2928, %v3120
        %v3122 = vpop.f32.mrb[0].mxu0
        %v3123 = vadd.f32 %v2930, %v3122
        %v3124 = vpop.f32.mrb[0].mxu0
        %v3125 = vadd.f32 %v2932, %v3124
        %3126 = vmatprep.mubr.bf16.mxu0 %v831
        %3127 = vmatmul.mubr.bf16.gmra.mrb[0].mxu0 %v830
        %v3128 = vpop.f32.mrb[0].mxu0
        %v3129 = vadd.f32 %v2936, %v3128
        %v3130 = vpop.f32.mrb[0].mxu0
        %v3131 = vadd.f32 %v2938, %v3130
        %v3132 = vpop.f32.mrb[0].mxu0
        %v3133 = vadd.f32 %v2940, %v3132
        %v3134 = vpop.f32.mrb[0].mxu0
        %v3135 = vadd.f32 %v2942, %v3134
        %3136 = vmatprep.mubr.bf16.mxu0 %v837
        %3137 = vmatmul.mubr.bf16.gmra.mrb[0].mxu0 %v836
        %v3138 = vpop.f32.mrb[0].mxu0
        %v3139 = vadd.f32 %v2946, %v3138
        %v3140 = vpop.f32.mrb[0].mxu0
        %v3141 = vadd.f32 %v2948, %v3140
        %v3142 = vpop.f32.mrb[0].mxu0
        %v3143 = vadd.f32 %v2950, %v3142
        %v3144 = vpop.f32.mrb[0].mxu0
        %v3145 = vadd.f32 %v2952, %v3144
        %3146 = vmatprep.mubr.bf16.mxu0 %v843
        %3147 = vmatmul.mubr.bf16.gmra.mrb[0].mxu0 %v842
        %v3148 = vpop.f32.mrb[0].mxu0
        %v3149 = vadd.f32 %v2956, %v3148
        %v3150 = vpop.f32.mrb[0].mxu0
        %v3151 = vadd.f32 %v2958, %v3150
        %v3152 = vpop.f32.mrb[0].mxu0
        %v3153 = vadd.f32 %v2960, %v3152
        %v3154 = vpop.f32.mrb[0].mxu0
        %v3155 = vadd.f32 %v2962, %v3154
        %3156 = vmatprep.mubr.bf16.mxu0 %v849
        %3157 = vmatmul.mubr.bf16.gmra.mrb[0].mxu0 %v848
        %v3158 = vpop.f32.mrb[0].mxu0
        %v3159 = vadd.f32 %v2966, %v3158
        %v3160 = vpop.f32.mrb[0].mxu0
        %v3161 = vadd.f32 %v2968, %v3160
        %v3162 = vpop.f32.mrb[0].mxu0
        %v3163 = vadd.f32 %v2970, %v3162
        %v3164 = vpop.f32.mrb[0].mxu0
        %v3165 = vadd.f32 %v2972, %v3164
        %3166 = vmatprep.mubr.bf16.mxu0 %v855
        %3167 = vmatmul.mubr.bf16.gmra.mrb[0].mxu0 %v854
        %v3168 = vpop.f32.mrb[0].mxu0
        %v3169 = vadd.f32 %v2976, %v3168
        %v3170 = vpop.f32.mrb[0].mxu0
        %v3171 = vadd.f32 %v2978, %v3170
        %v3172 = vpop.f32.mrb[0].mxu0
        %v3173 = vadd.f32 %v2980, %v3172
        %v3174 = vpop.f32.mrb[0].mxu0
        %v3175 = vadd.f32 %v2982, %v3174
        %3176 = vmatprep.mubr.bf16.mxu0 %v861
        %3177 = vmatmul.mubr.bf16.gmra.mrb[0].mxu0 %v860
        %v3178 = vpop.f32.mrb[0].mxu0
        %v3179 = vadd.f32 %v2986, %v3178
        %v3180 = vpop.f32.mrb[0].mxu0
        %v3181 = vadd.f32 %v2988, %v3180
        %v3182 = vpop.f32.mrb[0].mxu0
        %v3183 = vadd.f32 %v2990, %v3182
        %v3184 = vpop.f32.mrb[0].mxu0
        %v3185 = vadd.f32 %v2992, %v3184
        %3186 = vmatprep.mubr.bf16.mxu0 %v867
        %3187 = vmatmul.mubr.bf16.gmra.mrb[0].mxu0 %v866
        %v3188 = vpop.f32.mrb[0].mxu0
        %v3189 = vadd.f32 %v2996, %v3188
        %v3190 = vpop.f32.mrb[0].mxu0
        %v3191 = vadd.f32 %v2998, %v3190
        %v3192 = vpop.f32.mrb[0].mxu0
        %v3193 = vadd.f32 %v3000, %v3192
        %v3194 = vpop.f32.mrb[0].mxu0
        %v3195 = vadd.f32 %v3002, %v3194
        %3196 = vmatprep.mubr.bf16.mxu0 %v873
        %3197 = vmatmul.mubr.bf16.gmra.mrb[0].mxu0 %v872
        %v3198 = vpop.f32.mrb[0].mxu0
        %v3199 = vadd.f32 %v3006, %v3198
        %v3200 = vpop.f32.mrb[0].mxu0
        %v3201 = vadd.f32 %v3008, %v3200
        %v3202 = vpop.f32.mrb[0].mxu0
        %v3203 = vadd.f32 %v3010, %v3202
        %v3204 = vpop.f32.mrb[0].mxu0
        %v3205 = vadd.f32 %v3012, %v3204
        %3206 = vmatprep.mubr.bf16.mxu0 %v879
        %3207 = vmatmul.mubr.bf16.gmra.mrb[0].mxu0 %v878
        %v3208 = vpop.f32.mrb[0].mxu0
        %v3209 = vadd.f32 %v3016, %v3208
        %v3210 = vpop.f32.mrb[0].mxu0
        %v3211 = vadd.f32 %v3018, %v3210
        %v3212 = vpop.f32.mrb[0].mxu0
        %v3213 = vadd.f32 %v3020, %v3212
        %v3214 = vpop.f32.mrb[0].mxu0
        %v3215 = vadd.f32 %v3022, %v3214
        %3216 = vmatprep.mubr.bf16.mxu0 %v885
        %3217 = vmatmul.mubr.bf16.gmra.mrb[0].mxu0 %v884
        %v3218 = vpop.f32.mrb[0].mxu0
        %v3219 = vadd.f32 %v3026, %v3218
        %v3220 = vpop.f32.mrb[0].mxu0
        %v3221 = vadd.f32 %v3028, %v3220
        %v3222 = vpop.f32.mrb[0].mxu0
        %v3223 = vadd.f32 %v3030, %v3222
        %v3224 = vpop.f32.mrb[0].mxu0
        %v3225 = vadd.f32 %v3032, %v3224
        %3226 = vmatprep.mubr.bf16.mxu0 %v891
        %3227 = vmatmul.mubr.bf16.gmra.mrb[0].mxu0 %v890
        %v3228 = vpop.f32.mrb[0].mxu0
        %v3229 = vadd.f32 %v3036, %v3228
        %v3230 = vpop.f32.mrb[0].mxu0
        %v3231 = vadd.f32 %v3038, %v3230
        %v3232 = vpop.f32.mrb[0].mxu0
        %v3233 = vadd.f32 %v3040, %v3232
        %v3234 = vpop.f32.mrb[0].mxu0
        %v3235 = vadd.f32 %v3042, %v3234
        %3236 = vdwg.mxu0
        %s3237 = scalar_lea.vmem [#allocation5], 1536
        %v3238 = vld [vmem:[%s3237] sm:$0xff]
        %v3239 = vld [vmem:[%s3237 + $0x8] sm:$0xff]
        %v3240 = vld [vmem:[%s3237 + $0x10] sm:$0xff]
        %v3241 = vld [vmem:[%s3237 + $0x18] sm:$0xff]
        %v3242 = vld [vmem:[%s3237 + $0x20] sm:$0xff]
        %v3243 = vld [vmem:[%s3237 + $0x28] sm:$0xff]
        %v3244 = vld [vmem:[%s3237 + $0x30] sm:$0xff]
        %v3245 = vld [vmem:[%s3237 + $0x38] sm:$0xff]
        %v3246 = vld [vmem:[%s3237 + $0x40] sm:$0xff]
        %v3247 = vld [vmem:[%s3237 + $0x48] sm:$0xff]
        %v3248 = vld [vmem:[%s3237 + $0x50] sm:$0xff]
        %v3249 = vld [vmem:[%s3237 + $0x58] sm:$0xff]
        %v3250 = vld [vmem:[%s3237 + $0x60] sm:$0xff]
        %v3251 = vld [vmem:[%s3237 + $0x68] sm:$0xff]
        %v3252 = vld [vmem:[%s3237 + $0x70] sm:$0xff]
        %v3253 = vld [vmem:[%s3237 + $0x78] sm:$0xff]
        %v3254 = vld [vmem:[%s3237 + $0x80] sm:$0xff]
        %v3255 = vld [vmem:[%s3237 + $0x88] sm:$0xff]
        %v3256 = vld [vmem:[%s3237 + $0x90] sm:$0xff]
        %v3257 = vld [vmem:[%s3237 + $0x98] sm:$0xff]
        %v3258 = vld [vmem:[%s3237 + $0xa0] sm:$0xff]
        %v3259 = vld [vmem:[%s3237 + $0xa8] sm:$0xff]
        %v3260 = vld [vmem:[%s3237 + $0xb0] sm:$0xff]
        %v3261 = vld [vmem:[%s3237 + $0xb8] sm:$0xff]
        %v3262 = vld [vmem:[%s3237 + $0xc0] sm:$0xff]
        %v3263 = vld [vmem:[%s3237 + $0xc8] sm:$0xff]
        %v3264 = vld [vmem:[%s3237 + $0xd0] sm:$0xff]
        %v3265 = vld [vmem:[%s3237 + $0xd8] sm:$0xff]
        %v3266 = vld [vmem:[%s3237 + $0xe0] sm:$0xff]
        %v3267 = vld [vmem:[%s3237 + $0xe8] sm:$0xff]
        %v3268 = vld [vmem:[%s3237 + $0xf0] sm:$0xff]
        %v3269 = vld [vmem:[%s3237 + $0xf8] sm:$0xff]
        %v3270 = vld [vmem:[%s3237 + $0x100] sm:$0xff]
        %v3271 = vld [vmem:[%s3237 + $0x108] sm:$0xff]
        %v3272 = vld [vmem:[%s3237 + $0x110] sm:$0xff]
        %v3273 = vld [vmem:[%s3237 + $0x118] sm:$0xff]
        %v3274 = vld [vmem:[%s3237 + $0x120] sm:$0xff]
        %v3275 = vld [vmem:[%s3237 + $0x128] sm:$0xff]
        %v3276 = vld [vmem:[%s3237 + $0x130] sm:$0xff]
        %v3277 = vld [vmem:[%s3237 + $0x138] sm:$0xff]
        %v3278 = vld [vmem:[%s3237 + $0x140] sm:$0xff]
        %v3279 = vld [vmem:[%s3237 + $0x148] sm:$0xff]
        %v3280 = vld [vmem:[%s3237 + $0x150] sm:$0xff]
        %v3281 = vld [vmem:[%s3237 + $0x158] sm:$0xff]
        %v3282 = vld [vmem:[%s3237 + $0x160] sm:$0xff]
        %v3283 = vld [vmem:[%s3237 + $0x168] sm:$0xff]
        %v3284 = vld [vmem:[%s3237 + $0x170] sm:$0xff]
        %v3285 = vld [vmem:[%s3237 + $0x178] sm:$0xff]
        %v3286 = vld [vmem:[%s3237 + $0x180] sm:$0xff]
        %v3287 = vld [vmem:[%s3237 + $0x188] sm:$0xff]
        %v3288 = vld [vmem:[%s3237 + $0x190] sm:$0xff]
        %v3289 = vld [vmem:[%s3237 + $0x198] sm:$0xff]
        %v3290 = vld [vmem:[%s3237 + $0x1a0] sm:$0xff]
        %v3291 = vld [vmem:[%s3237 + $0x1a8] sm:$0xff]
        %v3292 = vld [vmem:[%s3237 + $0x1b0] sm:$0xff]
        %v3293 = vld [vmem:[%s3237 + $0x1b8] sm:$0xff]
        %v3294 = vld [vmem:[%s3237 + $0x1c0] sm:$0xff]
        %v3295 = vld [vmem:[%s3237 + $0x1c8] sm:$0xff]
        %v3296 = vld [vmem:[%s3237 + $0x1d0] sm:$0xff]
        %v3297 = vld [vmem:[%s3237 + $0x1d8] sm:$0xff]
        %v3298 = vld [vmem:[%s3237 + $0x1e0] sm:$0xff]
        %v3299 = vld [vmem:[%s3237 + $0x1e8] sm:$0xff]
        %v3300 = vld [vmem:[%s3237 + $0x1f0] sm:$0xff]
        %v3301 = vld [vmem:[%s3237 + $0x1f8] sm:$0xff]
        %v3302 = vld [vmem:[%s3237 + $0x200] sm:$0xff]
        %v3303 = vld [vmem:[%s3237 + $0x208] sm:$0xff]
        %v3304 = vld [vmem:[%s3237 + $0x210] sm:$0xff]
        %v3305 = vld [vmem:[%s3237 + $0x218] sm:$0xff]
        %v3306 = vld [vmem:[%s3237 + $0x220] sm:$0xff]
        %v3307 = vld [vmem:[%s3237 + $0x228] sm:$0xff]
        %v3308 = vld [vmem:[%s3237 + $0x230] sm:$0xff]
        %v3309 = vld [vmem:[%s3237 + $0x238] sm:$0xff]
        %v3310 = vld [vmem:[%s3237 + $0x240] sm:$0xff]
        %v3311 = vld [vmem:[%s3237 + $0x248] sm:$0xff]
        %v3312 = vld [vmem:[%s3237 + $0x250] sm:$0xff]
        %v3313 = vld [vmem:[%s3237 + $0x258] sm:$0xff]
        %v3314 = vld [vmem:[%s3237 + $0x260] sm:$0xff]
        %v3315 = vld [vmem:[%s3237 + $0x268] sm:$0xff]
        %v3316 = vld [vmem:[%s3237 + $0x270] sm:$0xff]
        %v3317 = vld [vmem:[%s3237 + $0x278] sm:$0xff]
        %v3318 = vld [vmem:[%s3237 + $0x280] sm:$0xff]
        %v3319 = vld [vmem:[%s3237 + $0x288] sm:$0xff]
        %v3320 = vld [vmem:[%s3237 + $0x290] sm:$0xff]
        %v3321 = vld [vmem:[%s3237 + $0x298] sm:$0xff]
        %v3322 = vld [vmem:[%s3237 + $0x2a0] sm:$0xff]
        %v3323 = vld [vmem:[%s3237 + $0x2a8] sm:$0xff]
        %v3324 = vld [vmem:[%s3237 + $0x2b0] sm:$0xff]
        %v3325 = vld [vmem:[%s3237 + $0x2b8] sm:$0xff]
        %v3326 = vld [vmem:[%s3237 + $0x2c0] sm:$0xff]
        %v3327 = vld [vmem:[%s3237 + $0x2c8] sm:$0xff]
        %v3328 = vld [vmem:[%s3237 + $0x2d0] sm:$0xff]
        %v3329 = vld [vmem:[%s3237 + $0x2d8] sm:$0xff]
        %v3330 = vld [vmem:[%s3237 + $0x2e0] sm:$0xff]
        %v3331 = vld [vmem:[%s3237 + $0x2e8] sm:$0xff]
        %v3332 = vld [vmem:[%s3237 + $0x2f0] sm:$0xff]
        %v3333 = vld [vmem:[%s3237 + $0x2f8] sm:$0xff]
        %v3430 = vunpack.c.l.b16 %v3238
        %v3431 = vunpack.c.h.b16 %v3238
        %v3432 = vunpack.c.l.b16 %v3239
        %v3433 = vunpack.c.h.b16 %v3239
        %v3434 = vunpack.c.l.b16 %v3240
        %v3435 = vunpack.c.h.b16 %v3240
        %v3436 = vunpack.c.l.b16 %v3241
        %v3437 = vunpack.c.h.b16 %v3241
        %v3438 = vunpack.c.l.b16 %v3242
        %v3439 = vunpack.c.h.b16 %v3242
        %v3440 = vunpack.c.l.b16 %v3243
        %v3441 = vunpack.c.h.b16 %v3243
        %v3442 = vunpack.c.l.b16 %v3244
        %v3443 = vunpack.c.h.b16 %v3244
        %v3444 = vunpack.c.l.b16 %v3245
        %v3445 = vunpack.c.h.b16 %v3245
        %v3446 = vunpack.c.l.b16 %v3246
        %v3447 = vunpack.c.h.b16 %v3246
        %v3448 = vunpack.c.l.b16 %v3247
        %v3449 = vunpack.c.h.b16 %v3247
        %v3450 = vunpack.c.l.b16 %v3248
        %v3451 = vunpack.c.h.b16 %v3248
        %v3452 = vunpack.c.l.b16 %v3249
        %v3453 = vunpack.c.h.b16 %v3249
        %v3454 = vunpack.c.l.b16 %v3250
        %v3455 = vunpack.c.h.b16 %v3250
        %v3456 = vunpack.c.l.b16 %v3251
        %v3457 = vunpack.c.h.b16 %v3251
        %v3458 = vunpack.c.l.b16 %v3252
        %v3459 = vunpack.c.h.b16 %v3252
        %v3460 = vunpack.c.l.b16 %v3253
        %v3461 = vunpack.c.h.b16 %v3253
        %v3462 = vunpack.c.l.b16 %v3254
        %v3463 = vunpack.c.h.b16 %v3254
        %v3464 = vunpack.c.l.b16 %v3255
        %v3465 = vunpack.c.h.b16 %v3255
        %v3466 = vunpack.c.l.b16 %v3256
        %v3467 = vunpack.c.h.b16 %v3256
        %v3468 = vunpack.c.l.b16 %v3257
        %v3469 = vunpack.c.h.b16 %v3257
        %v3470 = vunpack.c.l.b16 %v3258
        %v3471 = vunpack.c.h.b16 %v3258
        %v3472 = vunpack.c.l.b16 %v3259
        %v3473 = vunpack.c.h.b16 %v3259
        %v3474 = vunpack.c.l.b16 %v3260
        %v3475 = vunpack.c.h.b16 %v3260
        %v3476 = vunpack.c.l.b16 %v3261
        %v3477 = vunpack.c.h.b16 %v3261
        %v3478 = vunpack.c.l.b16 %v3262
        %v3479 = vunpack.c.h.b16 %v3262
        %v3480 = vunpack.c.l.b16 %v3263
        %v3481 = vunpack.c.h.b16 %v3263
        %v3482 = vunpack.c.l.b16 %v3264
        %v3483 = vunpack.c.h.b16 %v3264
        %v3484 = vunpack.c.l.b16 %v3265
        %v3485 = vunpack.c.h.b16 %v3265
        %v3486 = vunpack.c.l.b16 %v3266
        %v3487 = vunpack.c.h.b16 %v3266
        %v3488 = vunpack.c.l.b16 %v3267
        %v3489 = vunpack.c.h.b16 %v3267
        %v3490 = vunpack.c.l.b16 %v3268
        %v3491 = vunpack.c.h.b16 %v3268
        %v3492 = vunpack.c.l.b16 %v3269
        %v3493 = vunpack.c.h.b16 %v3269
        %v3494 = vunpack.c.l.b16 %v3270
        %v3495 = vunpack.c.h.b16 %v3270
        %v3496 = vunpack.c.l.b16 %v3271
        %v3497 = vunpack.c.h.b16 %v3271
        %v3498 = vunpack.c.l.b16 %v3272
        %v3499 = vunpack.c.h.b16 %v3272
        %v3500 = vunpack.c.l.b16 %v3273
        %v3501 = vunpack.c.h.b16 %v3273
        %v3502 = vunpack.c.l.b16 %v3274
        %v3503 = vunpack.c.h.b16 %v3274
        %v3504 = vunpack.c.l.b16 %v3275
        %v3505 = vunpack.c.h.b16 %v3275
        %v3506 = vunpack.c.l.b16 %v3276
        %v3507 = vunpack.c.h.b16 %v3276
        %v3508 = vunpack.c.l.b16 %v3277
        %v3509 = vunpack.c.h.b16 %v3277
        %v3510 = vunpack.c.l.b16 %v3278
        %v3511 = vunpack.c.h.b16 %v3278
        %v3512 = vunpack.c.l.b16 %v3279
        %v3513 = vunpack.c.h.b16 %v3279
        %v3514 = vunpack.c.l.b16 %v3280
        %v3515 = vunpack.c.h.b16 %v3280
        %v3516 = vunpack.c.l.b16 %v3281
        %v3517 = vunpack.c.h.b16 %v3281
        %v3518 = vunpack.c.l.b16 %v3282
        %v3519 = vunpack.c.h.b16 %v3282
        %v3520 = vunpack.c.l.b16 %v3283
        %v3521 = vunpack.c.h.b16 %v3283
        %v3522 = vunpack.c.l.b16 %v3284
        %v3523 = vunpack.c.h.b16 %v3284
        %v3524 = vunpack.c.l.b16 %v3285
        %v3525 = vunpack.c.h.b16 %v3285
        %v3526 = vunpack.c.l.b16 %v3286
        %v3527 = vunpack.c.h.b16 %v3286
        %v3528 = vunpack.c.l.b16 %v3287
        %v3529 = vunpack.c.h.b16 %v3287
        %v3530 = vunpack.c.l.b16 %v3288
        %v3531 = vunpack.c.h.b16 %v3288
        %v3532 = vunpack.c.l.b16 %v3289
        %v3533 = vunpack.c.h.b16 %v3289
        %v3534 = vunpack.c.l.b16 %v3290
        %v3535 = vunpack.c.h.b16 %v3290
        %v3536 = vunpack.c.l.b16 %v3291
        %v3537 = vunpack.c.h.b16 %v3291
        %v3538 = vunpack.c.l.b16 %v3292
        %v3539 = vunpack.c.h.b16 %v3292
        %v3540 = vunpack.c.l.b16 %v3293
        %v3541 = vunpack.c.h.b16 %v3293
        %v3542 = vunpack.c.l.b16 %v3294
        %v3543 = vunpack.c.h.b16 %v3294
        %v3544 = vunpack.c.l.b16 %v3295
        %v3545 = vunpack.c.h.b16 %v3295
        %v3546 = vunpack.c.l.b16 %v3296
        %v3547 = vunpack.c.h.b16 %v3296
        %v3548 = vunpack.c.l.b16 %v3297
        %v3549 = vunpack.c.h.b16 %v3297
        %v3550 = vunpack.c.l.b16 %v3298
        %v3551 = vunpack.c.h.b16 %v3298
        %v3552 = vunpack.c.l.b16 %v3299
        %v3553 = vunpack.c.h.b16 %v3299
        %v3554 = vunpack.c.l.b16 %v3300
        %v3555 = vunpack.c.h.b16 %v3300
        %v3556 = vunpack.c.l.b16 %v3301
        %v3557 = vunpack.c.h.b16 %v3301
        %v3558 = vunpack.c.l.b16 %v3302
        %v3559 = vunpack.c.h.b16 %v3302
        %v3560 = vunpack.c.l.b16 %v3303
        %v3561 = vunpack.c.h.b16 %v3303
        %v3562 = vunpack.c.l.b16 %v3304
        %v3563 = vunpack.c.h.b16 %v3304
        %v3564 = vunpack.c.l.b16 %v3305
        %v3565 = vunpack.c.h.b16 %v3305
        %v3566 = vunpack.c.l.b16 %v3306
        %v3567 = vunpack.c.h.b16 %v3306
        %v3568 = vunpack.c.l.b16 %v3307
        %v3569 = vunpack.c.h.b16 %v3307
        %v3570 = vunpack.c.l.b16 %v3308
        %v3571 = vunpack.c.h.b16 %v3308
        %v3572 = vunpack.c.l.b16 %v3309
        %v3573 = vunpack.c.h.b16 %v3309
        %v3574 = vunpack.c.l.b16 %v3310
        %v3575 = vunpack.c.h.b16 %v3310
        %v3576 = vunpack.c.l.b16 %v3311
        %v3577 = vunpack.c.h.b16 %v3311
        %v3578 = vunpack.c.l.b16 %v3312
        %v3579 = vunpack.c.h.b16 %v3312
        %v3580 = vunpack.c.l.b16 %v3313
        %v3581 = vunpack.c.h.b16 %v3313
        %v3582 = vunpack.c.l.b16 %v3314
        %v3583 = vunpack.c.h.b16 %v3314
        %v3584 = vunpack.c.l.b16 %v3315
        %v3585 = vunpack.c.h.b16 %v3315
        %v3586 = vunpack.c.l.b16 %v3316
        %v3587 = vunpack.c.h.b16 %v3316
        %v3588 = vunpack.c.l.b16 %v3317
        %v3589 = vunpack.c.h.b16 %v3317
        %v3590 = vunpack.c.l.b16 %v3318
        %v3591 = vunpack.c.h.b16 %v3318
        %v3592 = vunpack.c.l.b16 %v3319
        %v3593 = vunpack.c.h.b16 %v3319
        %v3594 = vunpack.c.l.b16 %v3320
        %v3595 = vunpack.c.h.b16 %v3320
        %v3596 = vunpack.c.l.b16 %v3321
        %v3597 = vunpack.c.h.b16 %v3321
        %v3598 = vunpack.c.l.b16 %v3322
        %v3599 = vunpack.c.h.b16 %v3322
        %v3600 = vunpack.c.l.b16 %v3323
        %v3601 = vunpack.c.h.b16 %v3323
        %v3602 = vunpack.c.l.b16 %v3324
        %v3603 = vunpack.c.h.b16 %v3324
        %v3604 = vunpack.c.l.b16 %v3325
        %v3605 = vunpack.c.h.b16 %v3325
        %v3606 = vunpack.c.l.b16 %v3326
        %v3607 = vunpack.c.h.b16 %v3326
        %v3608 = vunpack.c.l.b16 %v3327
        %v3609 = vunpack.c.h.b16 %v3327
        %v3610 = vunpack.c.l.b16 %v3328
        %v3611 = vunpack.c.h.b16 %v3328
        %v3612 = vunpack.c.l.b16 %v3329
        %v3613 = vunpack.c.h.b16 %v3329
        %v3614 = vunpack.c.l.b16 %v3330
        %v3615 = vunpack.c.h.b16 %v3330
        %v3616 = vunpack.c.l.b16 %v3331
        %v3617 = vunpack.c.h.b16 %v3331
        %v3618 = vunpack.c.l.b16 %v3332
        %v3619 = vunpack.c.h.b16 %v3332
        %v3620 = vunpack.c.l.b16 %v3333
        %v3621 = vunpack.c.h.b16 %v3333
        %v3622 = vpack.c.b16 %v3432, %v3430
        %v3623 = vpack.c.b16 %v3433, %v3431
        %v3624 = vpack.c.b16 %v3436, %v3434
        %v3625 = vpack.c.b16 %v3437, %v3435
        %v3626 = vpack.c.b16 %v3440, %v3438
        %v3627 = vpack.c.b16 %v3441, %v3439
        %v3628 = vpack.c.b16 %v3444, %v3442
        %v3629 = vpack.c.b16 %v3445, %v3443
        %v3630 = vpack.c.b16 %v3448, %v3446
        %v3631 = vpack.c.b16 %v3449, %v3447
        %v3632 = vpack.c.b16 %v3452, %v3450
        %v3633 = vpack.c.b16 %v3453, %v3451
        %v3634 = vpack.c.b16 %v3456, %v3454
        %v3635 = vpack.c.b16 %v3457, %v3455
        %v3636 = vpack.c.b16 %v3460, %v3458
        %v3637 = vpack.c.b16 %v3461, %v3459
        %v3638 = vpack.c.b16 %v3464, %v3462
        %v3639 = vpack.c.b16 %v3465, %v3463
        %v3640 = vpack.c.b16 %v3468, %v3466
        %v3641 = vpack.c.b16 %v3469, %v3467
        %v3642 = vpack.c.b16 %v3472, %v3470
        %v3643 = vpack.c.b16 %v3473, %v3471
        %v3644 = vpack.c.b16 %v3476, %v3474
        %v3645 = vpack.c.b16 %v3477, %v3475
        %v3646 = vpack.c.b16 %v3480, %v3478
        %v3647 = vpack.c.b16 %v3481, %v3479
        %v3648 = vpack.c.b16 %v3484, %v3482
        %v3649 = vpack.c.b16 %v3485, %v3483
        %v3650 = vpack.c.b16 %v3488, %v3486
        %v3651 = vpack.c.b16 %v3489, %v3487
        %v3652 = vpack.c.b16 %v3492, %v3490
        %v3653 = vpack.c.b16 %v3493, %v3491
        %v3654 = vpack.c.b16 %v3496, %v3494
        %v3655 = vpack.c.b16 %v3497, %v3495
        %v3656 = vpack.c.b16 %v3500, %v3498
        %v3657 = vpack.c.b16 %v3501, %v3499
        %v3658 = vpack.c.b16 %v3504, %v3502
        %v3659 = vpack.c.b16 %v3505, %v3503
        %v3660 = vpack.c.b16 %v3508, %v3506
        %v3661 = vpack.c.b16 %v3509, %v3507
        %v3662 = vpack.c.b16 %v3512, %v3510
        %v3663 = vpack.c.b16 %v3513, %v3511
        %v3664 = vpack.c.b16 %v3516, %v3514
        %v3665 = vpack.c.b16 %v3517, %v3515
        %v3666 = vpack.c.b16 %v3520, %v3518
        %v3667 = vpack.c.b16 %v3521, %v3519
        %v3668 = vpack.c.b16 %v3524, %v3522
        %v3669 = vpack.c.b16 %v3525, %v3523
        %v3670 = vpack.c.b16 %v3528, %v3526
        %v3671 = vpack.c.b16 %v3529, %v3527
        %v3672 = vpack.c.b16 %v3532, %v3530
        %v3673 = vpack.c.b16 %v3533, %v3531
        %v3674 = vpack.c.b16 %v3536, %v3534
        %v3675 = vpack.c.b16 %v3537, %v3535
        %v3676 = vpack.c.b16 %v3540, %v3538
        %v3677 = vpack.c.b16 %v3541, %v3539
        %v3678 = vpack.c.b16 %v3544, %v3542
        %v3679 = vpack.c.b16 %v3545, %v3543
        %v3680 = vpack.c.b16 %v3548, %v3546
        %v3681 = vpack.c.b16 %v3549, %v3547
        %v3682 = vpack.c.b16 %v3552, %v3550
        %v3683 = vpack.c.b16 %v3553, %v3551
        %v3684 = vpack.c.b16 %v3556, %v3554
        %v3685 = vpack.c.b16 %v3557, %v3555
        %v3686 = vpack.c.b16 %v3560, %v3558
        %v3687 = vpack.c.b16 %v3561, %v3559
        %v3688 = vpack.c.b16 %v3564, %v3562
        %v3689 = vpack.c.b16 %v3565, %v3563
        %v3690 = vpack.c.b16 %v3568, %v3566
        %v3691 = vpack.c.b16 %v3569, %v3567
        %v3692 = vpack.c.b16 %v3572, %v3570
        %v3693 = vpack.c.b16 %v3573, %v3571
        %v3694 = vpack.c.b16 %v3576, %v3574
        %v3695 = vpack.c.b16 %v3577, %v3575
        %v3696 = vpack.c.b16 %v3580, %v3578
        %v3697 = vpack.c.b16 %v3581, %v3579
        %v3698 = vpack.c.b16 %v3584, %v3582
        %v3699 = vpack.c.b16 %v3585, %v3583
        %v3700 = vpack.c.b16 %v3588, %v3586
        %v3701 = vpack.c.b16 %v3589, %v3587
        %v3702 = vpack.c.b16 %v3592, %v3590
        %v3703 = vpack.c.b16 %v3593, %v3591
        %v3704 = vpack.c.b16 %v3596, %v3594
        %v3705 = vpack.c.b16 %v3597, %v3595
        %v3706 = vpack.c.b16 %v3600, %v3598
        %v3707 = vpack.c.b16 %v3601, %v3599
        %v3708 = vpack.c.b16 %v3604, %v3602
        %v3709 = vpack.c.b16 %v3605, %v3603
        %v3710 = vpack.c.b16 %v3608, %v3606
        %v3711 = vpack.c.b16 %v3609, %v3607
        %v3712 = vpack.c.b16 %v3612, %v3610
        %v3713 = vpack.c.b16 %v3613, %v3611
        %v3714 = vpack.c.b16 %v3616, %v3614
        %v3715 = vpack.c.b16 %v3617, %v3615
        %v3716 = vpack.c.b16 %v3620, %v3618
        %v3717 = vpack.c.b16 %v3621, %v3619
        %3814 = vmatprep.subr.bf16.mxu0 %v3623
        %3815 = vmatpush1.bf16.msra.mxu0 %v3622
        %3816 = vmatprep.subr.bf16.mxu0 %v3625
        %3817 = vmatpush1.bf16.msra.mxu0 %v3624
        %3818 = vmatprep.subr.bf16.mxu0 %v3627
        %3819 = vmatpush1.bf16.msra.mxu0 %v3626
        %3820 = vmatprep.subr.bf16.mxu0 %v3629
        %3821 = vmatpush1.bf16.msra.mxu0 %v3628
        %3822 = vmatprep.subr.bf16.mxu0 %v3631
        %3823 = vmatpush1.bf16.msra.mxu0 %v3630
        %3824 = vmatprep.subr.bf16.mxu0 %v3633
        %3825 = vmatpush1.bf16.msra.mxu0 %v3632
        %3826 = vmatprep.subr.bf16.mxu0 %v3635
        %3827 = vmatpush1.bf16.msra.mxu0 %v3634
        %3828 = vmatprep.subr.bf16.mxu0 %v3637
        %3829 = vmatpush1.bf16.msra.mxu0 %v3636
        %3830 = vmatprep.subr.bf16.mxu0 %v3639
        %3831 = vmatpush1.bf16.msra.mxu0 %v3638
        %3832 = vmatprep.subr.bf16.mxu0 %v3641
        %3833 = vmatpush1.bf16.msra.mxu0 %v3640
        %3834 = vmatprep.subr.bf16.mxu0 %v3643
        %3835 = vmatpush1.bf16.msra.mxu0 %v3642
        %3836 = vmatprep.subr.bf16.mxu0 %v3645
        %3837 = vmatpush1.bf16.msra.mxu0 %v3644
        %3838 = vmatprep.subr.bf16.mxu0 %v3647
        %3839 = vmatpush1.bf16.msra.mxu0 %v3646
        %3840 = vmatprep.subr.bf16.mxu0 %v3649
        %3841 = vmatpush1.bf16.msra.mxu0 %v3648
        %3842 = vmatprep.subr.bf16.mxu0 %v3651
        %3843 = vmatpush1.bf16.msra.mxu0 %v3650
        %3844 = vmatprep.subr.bf16.mxu0 %v3653
        %3845 = vmatpush1.bf16.msra.mxu0 %v3652
        %3846 = vmatprep.mubr.bf16.mxu0 %v797
        %3847 = vmatmul.mubr.bf16.gmra.mrb[0].mxu0 %v796
        %v3848 = vpop.f32.mrb[0].mxu0
        %v3849 = vadd.f32 0.0, %v3848
        %v3850 = vpop.f32.mrb[0].mxu0
        %v3851 = vadd.f32 0.0, %v3850
        %v3852 = vpop.f32.mrb[0].mxu0
        %v3853 = vadd.f32 0.0, %v3852
        %v3854 = vpop.f32.mrb[0].mxu0
        %v3855 = vadd.f32 0.0, %v3854
        %3856 = vmatprep.mubr.bf16.mxu0 %v803
        %3857 = vmatmul.mubr.bf16.gmra.mrb[0].mxu0 %v802
        %v3858 = vpop.f32.mrb[0].mxu0
        %v3859 = vadd.f32 0.0, %v3858
        %v3860 = vpop.f32.mrb[0].mxu0
        %v3861 = vadd.f32 0.0, %v3860
        %v3862 = vpop.f32.mrb[0].mxu0
        %v3863 = vadd.f32 0.0, %v3862
        %v3864 = vpop.f32.mrb[0].mxu0
        %v3865 = vadd.f32 0.0, %v3864
        %3866 = vmatprep.mubr.bf16.mxu0 %v809
        %3867 = vmatmul.mubr.bf16.gmra.mrb[0].mxu0 %v808
        %v3868 = vpop.f32.mrb[0].mxu0
        %v3869 = vadd.f32 0.0, %v3868
        %v3870 = vpop.f32.mrb[0].mxu0
        %v3871 = vadd.f32 0.0, %v3870
        %v3872 = vpop.f32.mrb[0].mxu0
        %v3873 = vadd.f32 0.0, %v3872
        %v3874 = vpop.f32.mrb[0].mxu0
        %v3875 = vadd.f32 0.0, %v3874
        %3876 = vmatprep.mubr.bf16.mxu0 %v815
        %3877 = vmatmul.mubr.bf16.gmra.mrb[0].mxu0 %v814
        %v3878 = vpop.f32.mrb[0].mxu0
        %v3879 = vadd.f32 0.0, %v3878
        %v3880 = vpop.f32.mrb[0].mxu0
        %v3881 = vadd.f32 0.0, %v3880
        %v3882 = vpop.f32.mrb[0].mxu0
        %v3883 = vadd.f32 0.0, %v3882
        %v3884 = vpop.f32.mrb[0].mxu0
        %v3885 = vadd.f32 0.0, %v3884
        %3886 = vmatprep.mubr.bf16.mxu0 %v821
        %3887 = vmatmul.mubr.bf16.gmra.mrb[0].mxu0 %v820
        %v3888 = vpop.f32.mrb[0].mxu0
        %v3889 = vadd.f32 0.0, %v3888
        %v3890 = vpop.f32.mrb[0].mxu0
        %v3891 = vadd.f32 0.0, %v3890
        %v3892 = vpop.f32.mrb[0].mxu0
        %v3893 = vadd.f32 0.0, %v3892
        %v3894 = vpop.f32.mrb[0].mxu0
        %v3895 = vadd.f32 0.0, %v3894
        %3896 = vmatprep.mubr.bf16.mxu0 %v827
        %3897 = vmatmul.mubr.bf16.gmra.mrb[0].mxu0 %v826
        %v3898 = vpop.f32.mrb[0].mxu0
        %v3899 = vadd.f32 0.0, %v3898
        %v3900 = vpop.f32.mrb[0].mxu0
        %v3901 = vadd.f32 0.0, %v3900
        %v3902 = vpop.f32.mrb[0].mxu0
        %v3903 = vadd.f32 0.0, %v3902
        %v3904 = vpop.f32.mrb[0].mxu0
        %v3905 = vadd.f32 0.0, %v3904
        %3906 = vmatprep.mubr.bf16.mxu0 %v833
        %3907 = vmatmul.mubr.bf16.gmra.mrb[0].mxu0 %v832
        %v3908 = vpop.f32.mrb[0].mxu0
        %v3909 = vadd.f32 0.0, %v3908
        %v3910 = vpop.f32.mrb[0].mxu0
        %v3911 = vadd.f32 0.0, %v3910
        %v3912 = vpop.f32.mrb[0].mxu0
        %v3913 = vadd.f32 0.0, %v3912
        %v3914 = vpop.f32.mrb[0].mxu0
        %v3915 = vadd.f32 0.0, %v3914
        %3916 = vmatprep.mubr.bf16.mxu0 %v839
        %3917 = vmatmul.mubr.bf16.gmra.mrb[0].mxu0 %v838
        %v3918 = vpop.f32.mrb[0].mxu0
        %v3919 = vadd.f32 0.0, %v3918
        %v3920 = vpop.f32.mrb[0].mxu0
        %v3921 = vadd.f32 0.0, %v3920
        %v3922 = vpop.f32.mrb[0].mxu0
        %v3923 = vadd.f32 0.0, %v3922
        %v3924 = vpop.f32.mrb[0].mxu0
        %v3925 = vadd.f32 0.0, %v3924
        %3926 = vmatprep.mubr.bf16.mxu0 %v845
        %3927 = vmatmul.mubr.bf16.gmra.mrb[0].mxu0 %v844
        %v3928 = vpop.f32.mrb[0].mxu0
        %v3929 = vadd.f32 0.0, %v3928
        %v3930 = vpop.f32.mrb[0].mxu0
        %v3931 = vadd.f32 0.0, %v3930
        %v3932 = vpop.f32.mrb[0].mxu0
        %v3933 = vadd.f32 0.0, %v3932
        %v3934 = vpop.f32.mrb[0].mxu0
        %v3935 = vadd.f32 0.0, %v3934
        %3936 = vmatprep.mubr.bf16.mxu0 %v851
        %3937 = vmatmul.mubr.bf16.gmra.mrb[0].mxu0 %v850
        %v3938 = vpop.f32.mrb[0].mxu0
        %v3939 = vadd.f32 0.0, %v3938
        %v3940 = vpop.f32.mrb[0].mxu0
        %v3941 = vadd.f32 0.0, %v3940
        %v3942 = vpop.f32.mrb[0].mxu0
        %v3943 = vadd.f32 0.0, %v3942
        %v3944 = vpop.f32.mrb[0].mxu0
        %v3945 = vadd.f32 0.0, %v3944
        %3946 = vmatprep.mubr.bf16.mxu0 %v857
        %3947 = vmatmul.mubr.bf16.gmra.mrb[0].mxu0 %v856
        %v3948 = vpop.f32.mrb[0].mxu0
        %v3949 = vadd.f32 0.0, %v3948
        %v3950 = vpop.f32.mrb[0].mxu0
        %v3951 = vadd.f32 0.0, %v3950
        %v3952 = vpop.f32.mrb[0].mxu0
        %v3953 = vadd.f32 0.0, %v3952
        %v3954 = vpop.f32.mrb[0].mxu0
        %v3955 = vadd.f32 0.0, %v3954
        %3956 = vmatprep.mubr.bf16.mxu0 %v863
        %3957 = vmatmul.mubr.bf16.gmra.mrb[0].mxu0 %v862
        %v3958 = vpop.f32.mrb[0].mxu0
        %v3959 = vadd.f32 0.0, %v3958
        %v3960 = vpop.f32.mrb[0].mxu0
        %v3961 = vadd.f32 0.0, %v3960
        %v3962 = vpop.f32.mrb[0].mxu0
        %v3963 = vadd.f32 0.0, %v3962
        %v3964 = vpop.f32.mrb[0].mxu0
        %v3965 = vadd.f32 0.0, %v3964
        %3966 = vmatprep.mubr.bf16.mxu0 %v869
        %3967 = vmatmul.mubr.bf16.gmra.mrb[0].mxu0 %v868
        %v3968 = vpop.f32.mrb[0].mxu0
        %v3969 = vadd.f32 0.0, %v3968
        %v3970 = vpop.f32.mrb[0].mxu0
        %v3971 = vadd.f32 0.0, %v3970
        %v3972 = vpop.f32.mrb[0].mxu0
        %v3973 = vadd.f32 0.0, %v3972
        %v3974 = vpop.f32.mrb[0].mxu0
        %v3975 = vadd.f32 0.0, %v3974
        %3976 = vmatprep.mubr.bf16.mxu0 %v875
        %3977 = vmatmul.mubr.bf16.gmra.mrb[0].mxu0 %v874
        %v3978 = vpop.f32.mrb[0].mxu0
        %v3979 = vadd.f32 0.0, %v3978
        %v3980 = vpop.f32.mrb[0].mxu0
        %v3981 = vadd.f32 0.0, %v3980
        %v3982 = vpop.f32.mrb[0].mxu0
        %v3983 = vadd.f32 0.0, %v3982
        %v3984 = vpop.f32.mrb[0].mxu0
        %v3985 = vadd.f32 0.0, %v3984
        %3986 = vmatprep.mubr.bf16.mxu0 %v881
        %3987 = vmatmul.mubr.bf16.gmra.mrb[0].mxu0 %v880
        %v3988 = vpop.f32.mrb[0].mxu0
        %v3989 = vadd.f32 0.0, %v3988
        %v3990 = vpop.f32.mrb[0].mxu0
        %v3991 = vadd.f32 0.0, %v3990
        %v3992 = vpop.f32.mrb[0].mxu0
        %v3993 = vadd.f32 0.0, %v3992
        %v3994 = vpop.f32.mrb[0].mxu0
        %v3995 = vadd.f32 0.0, %v3994
        %3996 = vmatprep.mubr.bf16.mxu0 %v887
        %3997 = vmatmul.mubr.bf16.gmra.mrb[0].mxu0 %v886
        %v3998 = vpop.f32.mrb[0].mxu0
        %v3999 = vadd.f32 0.0, %v3998
        %v4000 = vpop.f32.mrb[0].mxu0
        %v4001 = vadd.f32 0.0, %v4000
        %v4002 = vpop.f32.mrb[0].mxu0
        %v4003 = vadd.f32 0.0, %v4002
        %v4004 = vpop.f32.mrb[0].mxu0
        %v4005 = vadd.f32 0.0, %v4004
        %4006 = vdwg.mxu0
        %4007 = vmatprep.subr.bf16.mxu0 %v3655
        %4008 = vmatpush1.bf16.msra.mxu0 %v3654
        %4009 = vmatprep.subr.bf16.mxu0 %v3657
        %4010 = vmatpush1.bf16.msra.mxu0 %v3656
        %4011 = vmatprep.subr.bf16.mxu0 %v3659
        %4012 = vmatpush1.bf16.msra.mxu0 %v3658
        %4013 = vmatprep.subr.bf16.mxu0 %v3661
        %4014 = vmatpush1.bf16.msra.mxu0 %v3660
        %4015 = vmatprep.subr.bf16.mxu0 %v3663
        %4016 = vmatpush1.bf16.msra.mxu0 %v3662
        %4017 = vmatprep.subr.bf16.mxu0 %v3665
        %4018 = vmatpush1.bf16.msra.mxu0 %v3664
        %4019 = vmatprep.subr.bf16.mxu0 %v3667
        %4020 = vmatpush1.bf16.msra.mxu0 %v3666
        %4021 = vmatprep.subr.bf16.mxu0 %v3669
        %4022 = vmatpush1.bf16.msra.mxu0 %v3668
        %4023 = vmatprep.subr.bf16.mxu0 %v3671
        %4024 = vmatpush1.bf16.msra.mxu0 %v3670
        %4025 = vmatprep.subr.bf16.mxu0 %v3673
        %4026 = vmatpush1.bf16.msra.mxu0 %v3672
        %4027 = vmatprep.subr.bf16.mxu0 %v3675
        %4028 = vmatpush1.bf16.msra.mxu0 %v3674
        %4029 = vmatprep.subr.bf16.mxu0 %v3677
        %4030 = vmatpush1.bf16.msra.mxu0 %v3676
        %4031 = vmatprep.subr.bf16.mxu0 %v3679
        %4032 = vmatpush1.bf16.msra.mxu0 %v3678
        %4033 = vmatprep.subr.bf16.mxu0 %v3681
        %4034 = vmatpush1.bf16.msra.mxu0 %v3680
        %4035 = vmatprep.subr.bf16.mxu0 %v3683
        %4036 = vmatpush1.bf16.msra.mxu0 %v3682
        %4037 = vmatprep.subr.bf16.mxu0 %v3685
        %4038 = vmatpush1.bf16.msra.mxu0 %v3684
        %4039 = vmatprep.mubr.bf16.mxu0 %v799
        %4040 = vmatmul.mubr.bf16.gmra.mrb[0].mxu0 %v798
        %v4041 = vpop.f32.mrb[0].mxu0
        %v4042 = vadd.f32 %v3849, %v4041
        %v4043 = vpop.f32.mrb[0].mxu0
        %v4044 = vadd.f32 %v3851, %v4043
        %v4045 = vpop.f32.mrb[0].mxu0
        %v4046 = vadd.f32 %v3853, %v4045
        %v4047 = vpop.f32.mrb[0].mxu0
        %v4048 = vadd.f32 %v3855, %v4047
        %4049 = vmatprep.mubr.bf16.mxu0 %v805
        %4050 = vmatmul.mubr.bf16.gmra.mrb[0].mxu0 %v804
        %v4051 = vpop.f32.mrb[0].mxu0
        %v4052 = vadd.f32 %v3859, %v4051
        %v4053 = vpop.f32.mrb[0].mxu0
        %v4054 = vadd.f32 %v3861, %v4053
        %v4055 = vpop.f32.mrb[0].mxu0
        %v4056 = vadd.f32 %v3863, %v4055
        %v4057 = vpop.f32.mrb[0].mxu0
        %v4058 = vadd.f32 %v3865, %v4057
        %4059 = vmatprep.mubr.bf16.mxu0 %v811
        %4060 = vmatmul.mubr.bf16.gmra.mrb[0].mxu0 %v810
        %v4061 = vpop.f32.mrb[0].mxu0
        %v4062 = vadd.f32 %v3869, %v4061
        %v4063 = vpop.f32.mrb[0].mxu0
        %v4064 = vadd.f32 %v3871, %v4063
        %v4065 = vpop.f32.mrb[0].mxu0
        %v4066 = vadd.f32 %v3873, %v4065
        %v4067 = vpop.f32.mrb[0].mxu0
        %v4068 = vadd.f32 %v3875, %v4067
        %4069 = vmatprep.mubr.bf16.mxu0 %v817
        %4070 = vmatmul.mubr.bf16.gmra.mrb[0].mxu0 %v816
        %v4071 = vpop.f32.mrb[0].mxu0
        %v4072 = vadd.f32 %v3879, %v4071
        %v4073 = vpop.f32.mrb[0].mxu0
        %v4074 = vadd.f32 %v3881, %v4073
        %v4075 = vpop.f32.mrb[0].mxu0
        %v4076 = vadd.f32 %v3883, %v4075
        %v4077 = vpop.f32.mrb[0].mxu0
        %v4078 = vadd.f32 %v3885, %v4077
        %4079 = vmatprep.mubr.bf16.mxu0 %v823
        %4080 = vmatmul.mubr.bf16.gmra.mrb[0].mxu0 %v822
        %v4081 = vpop.f32.mrb[0].mxu0
        %v4082 = vadd.f32 %v3889, %v4081
        %v4083 = vpop.f32.mrb[0].mxu0
        %v4084 = vadd.f32 %v3891, %v4083
        %v4085 = vpop.f32.mrb[0].mxu0
        %v4086 = vadd.f32 %v3893, %v4085
        %v4087 = vpop.f32.mrb[0].mxu0
        %v4088 = vadd.f32 %v3895, %v4087
        %4089 = vmatprep.mubr.bf16.mxu0 %v829
        %4090 = vmatmul.mubr.bf16.gmra.mrb[0].mxu0 %v828
        %v4091 = vpop.f32.mrb[0].mxu0
        %v4092 = vadd.f32 %v3899, %v4091
        %v4093 = vpop.f32.mrb[0].mxu0
        %v4094 = vadd.f32 %v3901, %v4093
        %v4095 = vpop.f32.mrb[0].mxu0
        %v4096 = vadd.f32 %v3903, %v4095
        %v4097 = vpop.f32.mrb[0].mxu0
        %v4098 = vadd.f32 %v3905, %v4097
        %4099 = vmatprep.mubr.bf16.mxu0 %v835
        %4100 = vmatmul.mubr.bf16.gmra.mrb[0].mxu0 %v834
        %v4101 = vpop.f32.mrb[0].mxu0
        %v4102 = vadd.f32 %v3909, %v4101
        %v4103 = vpop.f32.mrb[0].mxu0
        %v4104 = vadd.f32 %v3911, %v4103
        %v4105 = vpop.f32.mrb[0].mxu0
        %v4106 = vadd.f32 %v3913, %v4105
        %v4107 = vpop.f32.mrb[0].mxu0
        %v4108 = vadd.f32 %v3915, %v4107
        %4109 = vmatprep.mubr.bf16.mxu0 %v841
        %4110 = vmatmul.mubr.bf16.gmra.mrb[0].mxu0 %v840
        %v4111 = vpop.f32.mrb[0].mxu0
        %v4112 = vadd.f32 %v3919, %v4111
        %v4113 = vpop.f32.mrb[0].mxu0
        %v4114 = vadd.f32 %v3921, %v4113
        %v4115 = vpop.f32.mrb[0].mxu0
        %v4116 = vadd.f32 %v3923, %v4115
        %v4117 = vpop.f32.mrb[0].mxu0
        %v4118 = vadd.f32 %v3925, %v4117
        %4119 = vmatprep.mubr.bf16.mxu0 %v847
        %4120 = vmatmul.mubr.bf16.gmra.mrb[0].mxu0 %v846
        %v4121 = vpop.f32.mrb[0].mxu0
        %v4122 = vadd.f32 %v3929, %v4121
        %v4123 = vpop.f32.mrb[0].mxu0
        %v4124 = vadd.f32 %v3931, %v4123
        %v4125 = vpop.f32.mrb[0].mxu0
        %v4126 = vadd.f32 %v3933, %v4125
        %v4127 = vpop.f32.mrb[0].mxu0
        %v4128 = vadd.f32 %v3935, %v4127
        %4129 = vmatprep.mubr.bf16.mxu0 %v853
        %4130 = vmatmul.mubr.bf16.gmra.mrb[0].mxu0 %v852
        %v4131 = vpop.f32.mrb[0].mxu0
        %v4132 = vadd.f32 %v3939, %v4131
        %v4133 = vpop.f32.mrb[0].mxu0
        %v4134 = vadd.f32 %v3941, %v4133
        %v4135 = vpop.f32.mrb[0].mxu0
        %v4136 = vadd.f32 %v3943, %v4135
        %v4137 = vpop.f32.mrb[0].mxu0
        %v4138 = vadd.f32 %v3945, %v4137
        %4139 = vmatprep.mubr.bf16.mxu0 %v859
        %4140 = vmatmul.mubr.bf16.gmra.mrb[0].mxu0 %v858
        %v4141 = vpop.f32.mrb[0].mxu0
        %v4142 = vadd.f32 %v3949, %v4141
        %v4143 = vpop.f32.mrb[0].mxu0
        %v4144 = vadd.f32 %v3951, %v4143
        %v4145 = vpop.f32.mrb[0].mxu0
        %v4146 = vadd.f32 %v3953, %v4145
        %v4147 = vpop.f32.mrb[0].mxu0
        %v4148 = vadd.f32 %v3955, %v4147
        %4149 = vmatprep.mubr.bf16.mxu0 %v865
        %4150 = vmatmul.mubr.bf16.gmra.mrb[0].mxu0 %v864
        %v4151 = vpop.f32.mrb[0].mxu0
        %v4152 = vadd.f32 %v3959, %v4151
        %v4153 = vpop.f32.mrb[0].mxu0
        %v4154 = vadd.f32 %v3961, %v4153
        %v4155 = vpop.f32.mrb[0].mxu0
        %v4156 = vadd.f32 %v3963, %v4155
        %v4157 = vpop.f32.mrb[0].mxu0
        %v4158 = vadd.f32 %v3965, %v4157
        %4159 = vmatprep.mubr.bf16.mxu0 %v871
        %4160 = vmatmul.mubr.bf16.gmra.mrb[0].mxu0 %v870
        %v4161 = vpop.f32.mrb[0].mxu0
        %v4162 = vadd.f32 %v3969, %v4161
        %v4163 = vpop.f32.mrb[0].mxu0
        %v4164 = vadd.f32 %v3971, %v4163
        %v4165 = vpop.f32.mrb[0].mxu0
        %v4166 = vadd.f32 %v3973, %v4165
        %v4167 = vpop.f32.mrb[0].mxu0
        %v4168 = vadd.f32 %v3975, %v4167
        %4169 = vmatprep.mubr.bf16.mxu0 %v877
        %4170 = vmatmul.mubr.bf16.gmra.mrb[0].mxu0 %v876
        %v4171 = vpop.f32.mrb[0].mxu0
        %v4172 = vadd.f32 %v3979, %v4171
        %v4173 = vpop.f32.mrb[0].mxu0
        %v4174 = vadd.f32 %v3981, %v4173
        %v4175 = vpop.f32.mrb[0].mxu0
        %v4176 = vadd.f32 %v3983, %v4175
        %v4177 = vpop.f32.mrb[0].mxu0
        %v4178 = vadd.f32 %v3985, %v4177
        %4179 = vmatprep.mubr.bf16.mxu0 %v883
        %4180 = vmatmul.mubr.bf16.gmra.mrb[0].mxu0 %v882
        %v4181 = vpop.f32.mrb[0].mxu0
        %v4182 = vadd.f32 %v3989, %v4181
        %v4183 = vpop.f32.mrb[0].mxu0
        %v4184 = vadd.f32 %v3991, %v4183
        %v4185 = vpop.f32.mrb[0].mxu0
        %v4186 = vadd.f32 %v3993, %v4185
        %v4187 = vpop.f32.mrb[0].mxu0
        %v4188 = vadd.f32 %v3995, %v4187
        %4189 = vmatprep.mubr.bf16.mxu0 %v889
        %4190 = vmatmul.mubr.bf16.gmra.mrb[0].mxu0 %v888
        %v4191 = vpop.f32.mrb[0].mxu0
        %v4192 = vadd.f32 %v3999, %v4191
        %v4193 = vpop.f32.mrb[0].mxu0
        %v4194 = vadd.f32 %v4001, %v4193
        %v4195 = vpop.f32.mrb[0].mxu0
        %v4196 = vadd.f32 %v4003, %v4195
        %v4197 = vpop.f32.mrb[0].mxu0
        %v4198 = vadd.f32 %v4005, %v4197
        %4199 = vdwg.mxu0
        %4200 = vmatprep.subr.bf16.mxu0 %v3687
        %4201 = vmatpush1.bf16.msra.mxu0 %v3686
        %4202 = vmatprep.subr.bf16.mxu0 %v3689
        %4203 = vmatpush1.bf16.msra.mxu0 %v3688
        %4204 = vmatprep.subr.bf16.mxu0 %v3691
        %4205 = vmatpush1.bf16.msra.mxu0 %v3690
        %4206 = vmatprep.subr.bf16.mxu0 %v3693
        %4207 = vmatpush1.bf16.msra.mxu0 %v3692
        %4208 = vmatprep.subr.bf16.mxu0 %v3695
        %4209 = vmatpush1.bf16.msra.mxu0 %v3694
        %4210 = vmatprep.subr.bf16.mxu0 %v3697
        %4211 = vmatpush1.bf16.msra.mxu0 %v3696
        %4212 = vmatprep.subr.bf16.mxu0 %v3699
        %4213 = vmatpush1.bf16.msra.mxu0 %v3698
        %4214 = vmatprep.subr.bf16.mxu0 %v3701
        %4215 = vmatpush1.bf16.msra.mxu0 %v3700
        %4216 = vmatprep.subr.bf16.mxu0 %v3703
        %4217 = vmatpush1.bf16.msra.mxu0 %v3702
        %4218 = vmatprep.subr.bf16.mxu0 %v3705
        %4219 = vmatpush1.bf16.msra.mxu0 %v3704
        %4220 = vmatprep.subr.bf16.mxu0 %v3707
        %4221 = vmatpush1.bf16.msra.mxu0 %v3706
        %4222 = vmatprep.subr.bf16.mxu0 %v3709
        %4223 = vmatpush1.bf16.msra.mxu0 %v3708
        %4224 = vmatprep.subr.bf16.mxu0 %v3711
        %4225 = vmatpush1.bf16.msra.mxu0 %v3710
        %4226 = vmatprep.subr.bf16.mxu0 %v3713
        %4227 = vmatpush1.bf16.msra.mxu0 %v3712
        %4228 = vmatprep.subr.bf16.mxu0 %v3715
        %4229 = vmatpush1.bf16.msra.mxu0 %v3714
        %4230 = vmatprep.subr.bf16.mxu0 %v3717
        %4231 = vmatpush1.bf16.msra.mxu0 %v3716
        %4232 = vmatprep.mubr.bf16.mxu0 %v801
        %4233 = vmatmul.mubr.bf16.gmra.mrb[0].mxu0 %v800
        %v4234 = vpop.f32.mrb[0].mxu0
        %v4235 = vadd.f32 %v4042, %v4234
        %v4236 = vpop.f32.mrb[0].mxu0
        %v4237 = vadd.f32 %v4044, %v4236
        %v4238 = vpop.f32.mrb[0].mxu0
        %v4239 = vadd.f32 %v4046, %v4238
        %v4240 = vpop.f32.mrb[0].mxu0
        %v4241 = vadd.f32 %v4048, %v4240
        %4242 = vmatprep.mubr.bf16.mxu0 %v807
        %4243 = vmatmul.mubr.bf16.gmra.mrb[0].mxu0 %v806
        %v4244 = vpop.f32.mrb[0].mxu0
        %v4245 = vadd.f32 %v4052, %v4244
        %v4246 = vpop.f32.mrb[0].mxu0
        %v4247 = vadd.f32 %v4054, %v4246
        %v4248 = vpop.f32.mrb[0].mxu0
        %v4249 = vadd.f32 %v4056, %v4248
        %v4250 = vpop.f32.mrb[0].mxu0
        %v4251 = vadd.f32 %v4058, %v4250
        %4252 = vmatprep.mubr.bf16.mxu0 %v813
        %4253 = vmatmul.mubr.bf16.gmra.mrb[0].mxu0 %v812
        %v4254 = vpop.f32.mrb[0].mxu0
        %v4255 = vadd.f32 %v4062, %v4254
        %v4256 = vpop.f32.mrb[0].mxu0
        %v4257 = vadd.f32 %v4064, %v4256
        %v4258 = vpop.f32.mrb[0].mxu0
        %v4259 = vadd.f32 %v4066, %v4258
        %v4260 = vpop.f32.mrb[0].mxu0
        %v4261 = vadd.f32 %v4068, %v4260
        %4262 = vmatprep.mubr.bf16.mxu0 %v819
        %4263 = vmatmul.mubr.bf16.gmra.mrb[0].mxu0 %v818
        %v4264 = vpop.f32.mrb[0].mxu0
        %v4265 = vadd.f32 %v4072, %v4264
        %v4266 = vpop.f32.mrb[0].mxu0
        %v4267 = vadd.f32 %v4074, %v4266
        %v4268 = vpop.f32.mrb[0].mxu0
        %v4269 = vadd.f32 %v4076, %v4268
        %v4270 = vpop.f32.mrb[0].mxu0
        %v4271 = vadd.f32 %v4078, %v4270
        %4272 = vmatprep.mubr.bf16.mxu0 %v825
        %4273 = vmatmul.mubr.bf16.gmra.mrb[0].mxu0 %v824
        %v4274 = vpop.f32.mrb[0].mxu0
        %v4275 = vadd.f32 %v4082, %v4274
        %v4276 = vpop.f32.mrb[0].mxu0
        %v4277 = vadd.f32 %v4084, %v4276
        %v4278 = vpop.f32.mrb[0].mxu0
        %v4279 = vadd.f32 %v4086, %v4278
        %v4280 = vpop.f32.mrb[0].mxu0
        %v4281 = vadd.f32 %v4088, %v4280
        %4282 = vmatprep.mubr.bf16.mxu0 %v831
        %4283 = vmatmul.mubr.bf16.gmra.mrb[0].mxu0 %v830
        %v4284 = vpop.f32.mrb[0].mxu0
        %v4285 = vadd.f32 %v4092, %v4284
        %v4286 = vpop.f32.mrb[0].mxu0
        %v4287 = vadd.f32 %v4094, %v4286
        %v4288 = vpop.f32.mrb[0].mxu0
        %v4289 = vadd.f32 %v4096, %v4288
        %v4290 = vpop.f32.mrb[0].mxu0
        %v4291 = vadd.f32 %v4098, %v4290
        %4292 = vmatprep.mubr.bf16.mxu0 %v837
        %4293 = vmatmul.mubr.bf16.gmra.mrb[0].mxu0 %v836
        %v4294 = vpop.f32.mrb[0].mxu0
        %v4295 = vadd.f32 %v4102, %v4294
        %v4296 = vpop.f32.mrb[0].mxu0
        %v4297 = vadd.f32 %v4104, %v4296
        %v4298 = vpop.f32.mrb[0].mxu0
        %v4299 = vadd.f32 %v4106, %v4298
        %v4300 = vpop.f32.mrb[0].mxu0
        %v4301 = vadd.f32 %v4108, %v4300
        %4302 = vmatprep.mubr.bf16.mxu0 %v843
        %4303 = vmatmul.mubr.bf16.gmra.mrb[0].mxu0 %v842
        %v4304 = vpop.f32.mrb[0].mxu0
        %v4305 = vadd.f32 %v4112, %v4304
        %v4306 = vpop.f32.mrb[0].mxu0
        %v4307 = vadd.f32 %v4114, %v4306
        %v4308 = vpop.f32.mrb[0].mxu0
        %v4309 = vadd.f32 %v4116, %v4308
        %v4310 = vpop.f32.mrb[0].mxu0
        %v4311 = vadd.f32 %v4118, %v4310
        %4312 = vmatprep.mubr.bf16.mxu0 %v849
        %4313 = vmatmul.mubr.bf16.gmra.mrb[0].mxu0 %v848
        %v4314 = vpop.f32.mrb[0].mxu0
        %v4315 = vadd.f32 %v4122, %v4314
        %v4316 = vpop.f32.mrb[0].mxu0
        %v4317 = vadd.f32 %v4124, %v4316
        %v4318 = vpop.f32.mrb[0].mxu0
        %v4319 = vadd.f32 %v4126, %v4318
        %v4320 = vpop.f32.mrb[0].mxu0
        %v4321 = vadd.f32 %v4128, %v4320
        %4322 = vmatprep.mubr.bf16.mxu0 %v855
        %4323 = vmatmul.mubr.bf16.gmra.mrb[0].mxu0 %v854
        %v4324 = vpop.f32.mrb[0].mxu0
        %v4325 = vadd.f32 %v4132, %v4324
        %v4326 = vpop.f32.mrb[0].mxu0
        %v4327 = vadd.f32 %v4134, %v4326
        %v4328 = vpop.f32.mrb[0].mxu0
        %v4329 = vadd.f32 %v4136, %v4328
        %v4330 = vpop.f32.mrb[0].mxu0
        %v4331 = vadd.f32 %v4138, %v4330
        %4332 = vmatprep.mubr.bf16.mxu0 %v861
        %4333 = vmatmul.mubr.bf16.gmra.mrb[0].mxu0 %v860
        %v4334 = vpop.f32.mrb[0].mxu0
        %v4335 = vadd.f32 %v4142, %v4334
        %v4336 = vpop.f32.mrb[0].mxu0
        %v4337 = vadd.f32 %v4144, %v4336
        %v4338 = vpop.f32.mrb[0].mxu0
        %v4339 = vadd.f32 %v4146, %v4338
        %v4340 = vpop.f32.mrb[0].mxu0
        %v4341 = vadd.f32 %v4148, %v4340
        %4342 = vmatprep.mubr.bf16.mxu0 %v867
        %4343 = vmatmul.mubr.bf16.gmra.mrb[0].mxu0 %v866
        %v4344 = vpop.f32.mrb[0].mxu0
        %v4345 = vadd.f32 %v4152, %v4344
        %v4346 = vpop.f32.mrb[0].mxu0
        %v4347 = vadd.f32 %v4154, %v4346
        %v4348 = vpop.f32.mrb[0].mxu0
        %v4349 = vadd.f32 %v4156, %v4348
        %v4350 = vpop.f32.mrb[0].mxu0
        %v4351 = vadd.f32 %v4158, %v4350
        %4352 = vmatprep.mubr.bf16.mxu0 %v873
        %4353 = vmatmul.mubr.bf16.gmra.mrb[0].mxu0 %v872
        %v4354 = vpop.f32.mrb[0].mxu0
        %v4355 = vadd.f32 %v4162, %v4354
        %v4356 = vpop.f32.mrb[0].mxu0
        %v4357 = vadd.f32 %v4164, %v4356
        %v4358 = vpop.f32.mrb[0].mxu0
        %v4359 = vadd.f32 %v4166, %v4358
        %v4360 = vpop.f32.mrb[0].mxu0
        %v4361 = vadd.f32 %v4168, %v4360
        %4362 = vmatprep.mubr.bf16.mxu0 %v879
        %4363 = vmatmul.mubr.bf16.gmra.mrb[0].mxu0 %v878
        %v4364 = vpop.f32.mrb[0].mxu0
        %v4365 = vadd.f32 %v4172, %v4364
        %v4366 = vpop.f32.mrb[0].mxu0
        %v4367 = vadd.f32 %v4174, %v4366
        %v4368 = vpop.f32.mrb[0].mxu0
        %v4369 = vadd.f32 %v4176, %v4368
        %v4370 = vpop.f32.mrb[0].mxu0
        %v4371 = vadd.f32 %v4178, %v4370
        %4372 = vmatprep.mubr.bf16.mxu0 %v885
        %4373 = vmatmul.mubr.bf16.gmra.mrb[0].mxu0 %v884
        %v4374 = vpop.f32.mrb[0].mxu0
        %v4375 = vadd.f32 %v4182, %v4374
        %v4376 = vpop.f32.mrb[0].mxu0
        %v4377 = vadd.f32 %v4184, %v4376
        %v4378 = vpop.f32.mrb[0].mxu0
        %v4379 = vadd.f32 %v4186, %v4378
        %v4380 = vpop.f32.mrb[0].mxu0
        %v4381 = vadd.f32 %v4188, %v4380
        %4382 = vmatprep.mubr.bf16.mxu0 %v891
        %4383 = vmatmul.mubr.bf16.gmra.mrb[0].mxu0 %v890
        %v4384 = vpop.f32.mrb[0].mxu0
        %v4385 = vadd.f32 %v4192, %v4384
        %v4386 = vpop.f32.mrb[0].mxu0
        %v4387 = vadd.f32 %v4194, %v4386
        %v4388 = vpop.f32.mrb[0].mxu0
        %v4389 = vadd.f32 %v4196, %v4388
        %v4390 = vpop.f32.mrb[0].mxu0
        %v4391 = vadd.f32 %v4198, %v4390
        %4392 = vdwg.mxu0
        %v4393 = vrot.slane %v4235, 2
        %v4394 = vrot.slane %v4237, 2
        %v4395 = vrot.slane %v4239, 2
        %v4396 = vrot.slane %v4241, 2
        %v4397 = vrot.slane %v4245, 2
        %v4398 = vrot.slane %v4247, 2
        %v4399 = vrot.slane %v4249, 2
        %v4400 = vrot.slane %v4251, 2
        %v4401 = vrot.slane %v4255, 2
        %v4402 = vrot.slane %v4257, 2
        %v4403 = vrot.slane %v4259, 2
        %v4404 = vrot.slane %v4261, 2
        %v4405 = vrot.slane %v4265, 2
        %v4406 = vrot.slane %v4267, 2
        %v4407 = vrot.slane %v4269, 2
        %v4408 = vrot.slane %v4271, 2
        %v4409 = vrot.slane %v4275, 2
        %v4410 = vrot.slane %v4277, 2
        %v4411 = vrot.slane %v4279, 2
        %v4412 = vrot.slane %v4281, 2
        %v4413 = vrot.slane %v4285, 2
        %v4414 = vrot.slane %v4287, 2
        %v4415 = vrot.slane %v4289, 2
        %v4416 = vrot.slane %v4291, 2
        %v4417 = vrot.slane %v4295, 2
        %v4418 = vrot.slane %v4297, 2
        %v4419 = vrot.slane %v4299, 2
        %v4420 = vrot.slane %v4301, 2
        %v4421 = vrot.slane %v4305, 2
        %v4422 = vrot.slane %v4307, 2
        %v4423 = vrot.slane %v4309, 2
        %v4424 = vrot.slane %v4311, 2
        %v4425 = vrot.slane %v4315, 2
        %v4426 = vrot.slane %v4317, 2
        %v4427 = vrot.slane %v4319, 2
        %v4428 = vrot.slane %v4321, 2
        %v4429 = vrot.slane %v4325, 2
        %v4430 = vrot.slane %v4327, 2
        %v4431 = vrot.slane %v4329, 2
        %v4432 = vrot.slane %v4331, 2
        %v4433 = vrot.slane %v4335, 2
        %v4434 = vrot.slane %v4337, 2
        %v4435 = vrot.slane %v4339, 2
        %v4436 = vrot.slane %v4341, 2
        %v4437 = vrot.slane %v4345, 2
        %v4438 = vrot.slane %v4347, 2
        %v4439 = vrot.slane %v4349, 2
        %v4440 = vrot.slane %v4351, 2
        %v4441 = vrot.slane %v4355, 2
        %v4442 = vrot.slane %v4357, 2
        %v4443 = vrot.slane %v4359, 2
        %v4444 = vrot.slane %v4361, 2
        %v4445 = vrot.slane %v4365, 2
        %v4446 = vrot.slane %v4367, 2
        %v4447 = vrot.slane %v4369, 2
        %v4448 = vrot.slane %v4371, 2
        %v4449 = vrot.slane %v4375, 2
        %v4450 = vrot.slane %v4377, 2
        %v4451 = vrot.slane %v4379, 2
        %v4452 = vrot.slane %v4381, 2
        %v4453 = vrot.slane %v4385, 2
        %v4454 = vrot.slane %v4387, 2
        %v4455 = vrot.slane %v4389, 2
        %v4456 = vrot.slane %v4391, 2
        %vm4457 = vcmp.lt.s32.totalorder %v2112, 6
        %v4458 = vsel %vm4457, %v4453, %v4455
        %v4459 = vsel %vm4457, %v4454, %v4456
        %v4460 = vsel %vm4457, %v4451, %v4453
        %v4461 = vsel %vm4457, %v4452, %v4454
        %v4462 = vsel %vm4457, %v4449, %v4451
        %v4463 = vsel %vm4457, %v4450, %v4452
        %v4464 = vsel %vm4457, %v4447, %v4449
        %v4465 = vsel %vm4457, %v4448, %v4450
        %v4466 = vsel %vm4457, %v4445, %v4447
        %v4467 = vsel %vm4457, %v4446, %v4448
        %v4468 = vsel %vm4457, %v4443, %v4445
        %v4469 = vsel %vm4457, %v4444, %v4446
        %v4470 = vsel %vm4457, %v4441, %v4443
        %v4471 = vsel %vm4457, %v4442, %v4444
        %v4472 = vsel %vm4457, %v4439, %v4441
        %v4473 = vsel %vm4457, %v4440, %v4442
        %v4474 = vsel %vm4457, %v4437, %v4439
        %v4475 = vsel %vm4457, %v4438, %v4440
        %v4476 = vsel %vm4457, %v4435, %v4437
        %v4477 = vsel %vm4457, %v4436, %v4438
        %v4478 = vsel %vm4457, %v4433, %v4435
        %v4479 = vsel %vm4457, %v4434, %v4436
        %v4480 = vsel %vm4457, %v4431, %v4433
        %v4481 = vsel %vm4457, %v4432, %v4434
        %v4482 = vsel %vm4457, %v4429, %v4431
        %v4483 = vsel %vm4457, %v4430, %v4432
        %v4484 = vsel %vm4457, %v4427, %v4429
        %v4485 = vsel %vm4457, %v4428, %v4430
        %v4486 = vsel %vm4457, %v4425, %v4427
        %v4487 = vsel %vm4457, %v4426, %v4428
        %v4488 = vsel %vm4457, %v4423, %v4425
        %v4489 = vsel %vm4457, %v4424, %v4426
        %v4490 = vsel %vm4457, %v4421, %v4423
        %v4491 = vsel %vm4457, %v4422, %v4424
        %v4492 = vsel %vm4457, %v4419, %v4421
        %v4493 = vsel %vm4457, %v4420, %v4422
        %v4494 = vsel %vm4457, %v4417, %v4419
        %v4495 = vsel %vm4457, %v4418, %v4420
        %v4496 = vsel %vm4457, %v4415, %v4417
        %v4497 = vsel %vm4457, %v4416, %v4418
        %v4498 = vsel %vm4457, %v4413, %v4415
        %v4499 = vsel %vm4457, %v4414, %v4416
        %v4500 = vsel %vm4457, %v4411, %v4413
        %v4501 = vsel %vm4457, %v4412, %v4414
        %v4502 = vsel %vm4457, %v4409, %v4411
        %v4503 = vsel %vm4457, %v4410, %v4412
        %v4504 = vsel %vm4457, %v4407, %v4409
        %v4505 = vsel %vm4457, %v4408, %v4410
        %v4506 = vsel %vm4457, %v4405, %v4407
        %v4507 = vsel %vm4457, %v4406, %v4408
        %v4508 = vsel %vm4457, %v4403, %v4405
        %v4509 = vsel %vm4457, %v4404, %v4406
        %v4510 = vsel %vm4457, %v4401, %v4403
        %v4511 = vsel %vm4457, %v4402, %v4404
        %v4512 = vsel %vm4457, %v4399, %v4401
        %v4513 = vsel %vm4457, %v4400, %v4402
        %v4514 = vsel %vm4457, %v4397, %v4399
        %v4515 = vsel %vm4457, %v4398, %v4400
        %v4516 = vsel %vm4457, %v4395, %v4397
        %v4517 = vsel %vm4457, %v4396, %v4398
        %v4518 = vsel %vm4457, %v4393, %v4395
        %v4519 = vsel %vm4457, %v4394, %v4396
        %v4520 = vsel %vm4457, %v4455, %v4393
        %v4521 = vsel %vm4457, %v4456, %v4394
        %v4522 = vadd.f32 %v3079, %v4518
        %v4523 = vadd.f32 %v3081, %v4519
        %v4524 = vadd.f32 %v3083, %v4516
        %v4525 = vadd.f32 %v3085, %v4517
        %v4526 = vadd.f32 %v3089, %v4514
        %v4527 = vadd.f32 %v3091, %v4515
        %v4528 = vadd.f32 %v3093, %v4512
        %v4529 = vadd.f32 %v3095, %v4513
        %v4530 = vadd.f32 %v3099, %v4510
        %v4531 = vadd.f32 %v3101, %v4511
        %v4532 = vadd.f32 %v3103, %v4508
        %v4533 = vadd.f32 %v3105, %v4509
        %v4534 = vadd.f32 %v3109, %v4506
        %v4535 = vadd.f32 %v3111, %v4507
        %v4536 = vadd.f32 %v3113, %v4504
        %v4537 = vadd.f32 %v3115, %v4505
        %v4538 = vadd.f32 %v3119, %v4502
        %v4539 = vadd.f32 %v3121, %v4503
        %v4540 = vadd.f32 %v3123, %v4500
        %v4541 = vadd.f32 %v3125, %v4501
        %v4542 = vadd.f32 %v3129, %v4498
        %v4543 = vadd.f32 %v3131, %v4499
        %v4544 = vadd.f32 %v3133, %v4496
        %v4545 = vadd.f32 %v3135, %v4497
        %v4546 = vadd.f32 %v3139, %v4494
        %v4547 = vadd.f32 %v3141, %v4495
        %v4548 = vadd.f32 %v3143, %v4492
        %v4549 = vadd.f32 %v3145, %v4493
        %v4550 = vadd.f32 %v3149, %v4490
        %v4551 = vadd.f32 %v3151, %v4491
        %v4552 = vadd.f32 %v3153, %v4488
        %v4553 = vadd.f32 %v3155, %v4489
        %v4554 = vadd.f32 %v3159, %v4486
        %v4555 = vadd.f32 %v3161, %v4487
        %v4556 = vadd.f32 %v3163, %v4484
        %v4557 = vadd.f32 %v3165, %v4485
        %v4558 = vadd.f32 %v3169, %v4482
        %v4559 = vadd.f32 %v3171, %v4483
        %v4560 = vadd.f32 %v3173, %v4480
        %v4561 = vadd.f32 %v3175, %v4481
        %v4562 = vadd.f32 %v3179, %v4478
        %v4563 = vadd.f32 %v3181, %v4479
        %v4564 = vadd.f32 %v3183, %v4476
        %v4565 = vadd.f32 %v3185, %v4477
        %v4566 = vadd.f32 %v3189, %v4474
        %v4567 = vadd.f32 %v3191, %v4475
        %v4568 = vadd.f32 %v3193, %v4472
        %v4569 = vadd.f32 %v3195, %v4473
        %v4570 = vadd.f32 %v3199, %v4470
        %v4571 = vadd.f32 %v3201, %v4471
        %v4572 = vadd.f32 %v3203, %v4468
        %v4573 = vadd.f32 %v3205, %v4469
        %v4574 = vadd.f32 %v3209, %v4466
        %v4575 = vadd.f32 %v3211, %v4467
        %v4576 = vadd.f32 %v3213, %v4464
        %v4577 = vadd.f32 %v3215, %v4465
        %v4578 = vadd.f32 %v3219, %v4462
        %v4579 = vadd.f32 %v3221, %v4463
        %v4580 = vadd.f32 %v3223, %v4460
        %v4581 = vadd.f32 %v3225, %v4461
        %v4582 = vadd.f32 %v3229, %v4458
        %v4583 = vadd.f32 %v3231, %v4459
        %v4584 = vadd.f32 %v3233, %v4520
        %v4585 = vadd.f32 %v3235, %v4521
        %v4586 = vadd.s32 %v2112, 8
        %vm4587 = vcmp.lt.s32.totalorder %v2112, 14
        %vm4588 = vcmp.lt.s32.totalorder %v4586, 14
        %v4589 = vsel %vm4587, 0.0, -inf
        %v4590 = vsel %vm4588, 0.0, -inf
        %v4591 = vadd.f32 %v4522, %v4589
        %v4592 = vadd.f32 %v4523, %v4589
        %v4593 = vadd.f32 %v4524, %v4590
        %v4594 = vadd.f32 %v4525, %v4590
        %v4595 = vadd.f32 %v4526, %v4589
        %v4596 = vadd.f32 %v4527, %v4589
        %v4597 = vadd.f32 %v4528, %v4590
        %v4598 = vadd.f32 %v4529, %v4590
        %v4599 = vadd.f32 %v4530, %v4589
        %v4600 = vadd.f32 %v4531, %v4589
        %v4601 = vadd.f32 %v4532, %v4590
        %v4602 = vadd.f32 %v4533, %v4590
        %v4603 = vadd.f32 %v4534, %v4589
        %v4604 = vadd.f32 %v4535, %v4589
        %v4605 = vadd.f32 %v4536, %v4590
        %v4606 = vadd.f32 %v4537, %v4590
        %v4607 = vadd.f32 %v4538, %v4589
        %v4608 = vadd.f32 %v4539, %v4589
        %v4609 = vadd.f32 %v4540, %v4590
        %v4610 = vadd.f32 %v4541, %v4590
        %v4611 = vadd.f32 %v4542, %v4589
        %v4612 = vadd.f32 %v4543, %v4589
        %v4613 = vadd.f32 %v4544, %v4590
        %v4614 = vadd.f32 %v4545, %v4590
        %v4615 = vadd.f32 %v4546, %v4589
        %v4616 = vadd.f32 %v4547, %v4589
        %v4617 = vadd.f32 %v4548, %v4590
        %v4618 = vadd.f32 %v4549, %v4590
        %v4619 = vadd.f32 %v4550, %v4589
        %v4620 = vadd.f32 %v4551, %v4589
        %v4621 = vadd.f32 %v4552, %v4590
        %v4622 = vadd.f32 %v4553, %v4590
        %v4623 = vadd.f32 %v4554, %v4589
        %v4624 = vadd.f32 %v4555, %v4589
        %v4625 = vadd.f32 %v4556, %v4590
        %v4626 = vadd.f32 %v4557, %v4590
        %v4627 = vadd.f32 %v4558, %v4589
        %v4628 = vadd.f32 %v4559, %v4589
        %v4629 = vadd.f32 %v4560, %v4590
        %v4630 = vadd.f32 %v4561, %v4590
        %v4631 = vadd.f32 %v4562, %v4589
        %v4632 = vadd.f32 %v4563, %v4589
        %v4633 = vadd.f32 %v4564, %v4590
        %v4634 = vadd.f32 %v4565, %v4590
        %v4635 = vadd.f32 %v4566, %v4589
        %v4636 = vadd.f32 %v4567, %v4589
        %v4637 = vadd.f32 %v4568, %v4590
        %v4638 = vadd.f32 %v4569, %v4590
        %v4639 = vadd.f32 %v4570, %v4589
        %v4640 = vadd.f32 %v4571, %v4589
        %v4641 = vadd.f32 %v4572, %v4590
        %v4642 = vadd.f32 %v4573, %v4590
        %v4643 = vadd.f32 %v4574, %v4589
        %v4644 = vadd.f32 %v4575, %v4589
        %v4645 = vadd.f32 %v4576, %v4590
        %v4646 = vadd.f32 %v4577, %v4590
        %v4647 = vadd.f32 %v4578, %v4589
        %v4648 = vadd.f32 %v4579, %v4589
        %v4649 = vadd.f32 %v4580, %v4590
        %v4650 = vadd.f32 %v4581, %v4590
        %v4651 = vadd.f32 %v4582, %v4589
        %v4652 = vadd.f32 %v4583, %v4589
        %v4653 = vadd.f32 %v4584, %v4590
        %v4654 = vadd.f32 %v4585, %v4590
        %v4655 = vmax.f32 %v4591, %v4593
        %v4656 = vrot.slane %v4655, 4
        %v4657 = vmax.f32 %v4655, %v4656
        %v4658 = vrot.slane %v4657, 2
        %v4659 = vmax.f32 %v4657, %v4658
        %v4660 = vrot.slane %v4659, 1
        %v4661 = vmax.f32 %v4659, %v4660
        %v4662 = vmax.f32 %v4592, %v4594
        %v4663 = vrot.slane %v4662, 4
        %v4664 = vmax.f32 %v4662, %v4663
        %v4665 = vrot.slane %v4664, 2
        %v4666 = vmax.f32 %v4664, %v4665
        %v4667 = vrot.slane %v4666, 1
        %v4668 = vmax.f32 %v4666, %v4667
        %v4669 = vmax.f32 %v4595, %v4597
        %v4670 = vrot.slane %v4669, 4
        %v4671 = vmax.f32 %v4669, %v4670
        %v4672 = vrot.slane %v4671, 2
        %v4673 = vmax.f32 %v4671, %v4672
        %v4674 = vrot.slane %v4673, 1
        %v4675 = vmax.f32 %v4673, %v4674
        %v4676 = vmax.f32 %v4596, %v4598
        %v4677 = vrot.slane %v4676, 4
        %v4678 = vmax.f32 %v4676, %v4677
        %v4679 = vrot.slane %v4678, 2
        %v4680 = vmax.f32 %v4678, %v4679
        %v4681 = vrot.slane %v4680, 1
        %v4682 = vmax.f32 %v4680, %v4681
        %v4683 = vmax.f32 %v4599, %v4601
        %v4684 = vrot.slane %v4683, 4
        %v4685 = vmax.f32 %v4683, %v4684
        %v4686 = vrot.slane %v4685, 2
        %v4687 = vmax.f32 %v4685, %v4686
        %v4688 = vrot.slane %v4687, 1
        %v4689 = vmax.f32 %v4687, %v4688
        %v4690 = vmax.f32 %v4600, %v4602
        %v4691 = vrot.slane %v4690, 4
        %v4692 = vmax.f32 %v4690, %v4691
        %v4693 = vrot.slane %v4692, 2
        %v4694 = vmax.f32 %v4692, %v4693
        %v4695 = vrot.slane %v4694, 1
        %v4696 = vmax.f32 %v4694, %v4695
        %v4697 = vmax.f32 %v4603, %v4605
        %v4698 = vrot.slane %v4697, 4
        %v4699 = vmax.f32 %v4697, %v4698
        %v4700 = vrot.slane %v4699, 2
        %v4701 = vmax.f32 %v4699, %v4700
        %v4702 = vrot.slane %v4701, 1
        %v4703 = vmax.f32 %v4701, %v4702
        %v4704 = vmax.f32 %v4604, %v4606
        %v4705 = vrot.slane %v4704, 4
        %v4706 = vmax.f32 %v4704, %v4705
        %v4707 = vrot.slane %v4706, 2
        %v4708 = vmax.f32 %v4706, %v4707
        %v4709 = vrot.slane %v4708, 1
        %v4710 = vmax.f32 %v4708, %v4709
        %v4711 = vmax.f32 %v4607, %v4609
        %v4712 = vrot.slane %v4711, 4
        %v4713 = vmax.f32 %v4711, %v4712
        %v4714 = vrot.slane %v4713, 2
        %v4715 = vmax.f32 %v4713, %v4714
        %v4716 = vrot.slane %v4715, 1
        %v4717 = vmax.f32 %v4715, %v4716
        %v4718 = vmax.f32 %v4608, %v4610
        %v4719 = vrot.slane %v4718, 4
        %v4720 = vmax.f32 %v4718, %v4719
        %v4721 = vrot.slane %v4720, 2
        %v4722 = vmax.f32 %v4720, %v4721
        %v4723 = vrot.slane %v4722, 1
        %v4724 = vmax.f32 %v4722, %v4723
        %v4725 = vmax.f32 %v4611, %v4613
        %v4726 = vrot.slane %v4725, 4
        %v4727 = vmax.f32 %v4725, %v4726
        %v4728 = vrot.slane %v4727, 2
        %v4729 = vmax.f32 %v4727, %v4728
        %v4730 = vrot.slane %v4729, 1
        %v4731 = vmax.f32 %v4729, %v4730
        %v4732 = vmax.f32 %v4612, %v4614
        %v4733 = vrot.slane %v4732, 4
        %v4734 = vmax.f32 %v4732, %v4733
        %v4735 = vrot.slane %v4734, 2
        %v4736 = vmax.f32 %v4734, %v4735
        %v4737 = vrot.slane %v4736, 1
        %v4738 = vmax.f32 %v4736, %v4737
        %v4739 = vmax.f32 %v4615, %v4617
        %v4740 = vrot.slane %v4739, 4
        %v4741 = vmax.f32 %v4739, %v4740
        %v4742 = vrot.slane %v4741, 2
        %v4743 = vmax.f32 %v4741, %v4742
        %v4744 = vrot.slane %v4743, 1
        %v4745 = vmax.f32 %v4743, %v4744
        %v4746 = vmax.f32 %v4616, %v4618
        %v4747 = vrot.slane %v4746, 4
        %v4748 = vmax.f32 %v4746, %v4747
        %v4749 = vrot.slane %v4748, 2
        %v4750 = vmax.f32 %v4748, %v4749
        %v4751 = vrot.slane %v4750, 1
        %v4752 = vmax.f32 %v4750, %v4751
        %v4753 = vmax.f32 %v4619, %v4621
        %v4754 = vrot.slane %v4753, 4
        %v4755 = vmax.f32 %v4753, %v4754
        %v4756 = vrot.slane %v4755, 2
        %v4757 = vmax.f32 %v4755, %v4756
        %v4758 = vrot.slane %v4757, 1
        %v4759 = vmax.f32 %v4757, %v4758
        %v4760 = vmax.f32 %v4620, %v4622
        %v4761 = vrot.slane %v4760, 4
        %v4762 = vmax.f32 %v4760, %v4761
        %v4763 = vrot.slane %v4762, 2
        %v4764 = vmax.f32 %v4762, %v4763
        %v4765 = vrot.slane %v4764, 1
        %v4766 = vmax.f32 %v4764, %v4765
        %v4767 = vmax.f32 %v4623, %v4625
        %v4768 = vrot.slane %v4767, 4
        %v4769 = vmax.f32 %v4767, %v4768
        %v4770 = vrot.slane %v4769, 2
        %v4771 = vmax.f32 %v4769, %v4770
        %v4772 = vrot.slane %v4771, 1
        %v4773 = vmax.f32 %v4771, %v4772
        %v4774 = vmax.f32 %v4624, %v4626
        %v4775 = vrot.slane %v4774, 4
        %v4776 = vmax.f32 %v4774, %v4775
        %v4777 = vrot.slane %v4776, 2
        %v4778 = vmax.f32 %v4776, %v4777
        %v4779 = vrot.slane %v4778, 1
        %v4780 = vmax.f32 %v4778, %v4779
        %v4781 = vmax.f32 %v4627, %v4629
        %v4782 = vrot.slane %v4781, 4
        %v4783 = vmax.f32 %v4781, %v4782
        %v4784 = vrot.slane %v4783, 2
        %v4785 = vmax.f32 %v4783, %v4784
        %v4786 = vrot.slane %v4785, 1
        %v4787 = vmax.f32 %v4785, %v4786
        %v4788 = vmax.f32 %v4628, %v4630
        %v4789 = vrot.slane %v4788, 4
        %v4790 = vmax.f32 %v4788, %v4789
        %v4791 = vrot.slane %v4790, 2
        %v4792 = vmax.f32 %v4790, %v4791
        %v4793 = vrot.slane %v4792, 1
        %v4794 = vmax.f32 %v4792, %v4793
        %v4795 = vmax.f32 %v4631, %v4633
        %v4796 = vrot.slane %v4795, 4
        %v4797 = vmax.f32 %v4795, %v4796
        %v4798 = vrot.slane %v4797, 2
        %v4799 = vmax.f32 %v4797, %v4798
        %v4800 = vrot.slane %v4799, 1
        %v4801 = vmax.f32 %v4799, %v4800
        %v4802 = vmax.f32 %v4632, %v4634
        %v4803 = vrot.slane %v4802, 4
        %v4804 = vmax.f32 %v4802, %v4803
        %v4805 = vrot.slane %v4804, 2
        %v4806 = vmax.f32 %v4804, %v4805
        %v4807 = vrot.slane %v4806, 1
        %v4808 = vmax.f32 %v4806, %v4807
        %v4809 = vmax.f32 %v4635, %v4637
        %v4810 = vrot.slane %v4809, 4
        %v4811 = vmax.f32 %v4809, %v4810
        %v4812 = vrot.slane %v4811, 2
        %v4813 = vmax.f32 %v4811, %v4812
        %v4814 = vrot.slane %v4813, 1
        %v4815 = vmax.f32 %v4813, %v4814
        %v4816 = vmax.f32 %v4636, %v4638
        %v4817 = vrot.slane %v4816, 4
        %v4818 = vmax.f32 %v4816, %v4817
        %v4819 = vrot.slane %v4818, 2
        %v4820 = vmax.f32 %v4818, %v4819
        %v4821 = vrot.slane %v4820, 1
        %v4822 = vmax.f32 %v4820, %v4821
        %v4823 = vmax.f32 %v4639, %v4641
        %v4824 = vrot.slane %v4823, 4
        %v4825 = vmax.f32 %v4823, %v4824
        %v4826 = vrot.slane %v4825, 2
        %v4827 = vmax.f32 %v4825, %v4826
        %v4828 = vrot.slane %v4827, 1
        %v4829 = vmax.f32 %v4827, %v4828
        %v4830 = vmax.f32 %v4640, %v4642
        %v4831 = vrot.slane %v4830, 4
        %v4832 = vmax.f32 %v4830, %v4831
        %v4833 = vrot.slane %v4832, 2
        %v4834 = vmax.f32 %v4832, %v4833
        %v4835 = vrot.slane %v4834, 1
        %v4836 = vmax.f32 %v4834, %v4835
        %v4837 = vmax.f32 %v4643, %v4645
        %v4838 = vrot.slane %v4837, 4
        %v4839 = vmax.f32 %v4837, %v4838
        %v4840 = vrot.slane %v4839, 2
        %v4841 = vmax.f32 %v4839, %v4840
        %v4842 = vrot.slane %v4841, 1
        %v4843 = vmax.f32 %v4841, %v4842
        %v4844 = vmax.f32 %v4644, %v4646
        %v4845 = vrot.slane %v4844, 4
        %v4846 = vmax.f32 %v4844, %v4845
        %v4847 = vrot.slane %v4846, 2
        %v4848 = vmax.f32 %v4846, %v4847
        %v4849 = vrot.slane %v4848, 1
        %v4850 = vmax.f32 %v4848, %v4849
        %v4851 = vmax.f32 %v4647, %v4649
        %v4852 = vrot.slane %v4851, 4
        %v4853 = vmax.f32 %v4851, %v4852
        %v4854 = vrot.slane %v4853, 2
        %v4855 = vmax.f32 %v4853, %v4854
        %v4856 = vrot.slane %v4855, 1
        %v4857 = vmax.f32 %v4855, %v4856
        %v4858 = vmax.f32 %v4648, %v4650
        %v4859 = vrot.slane %v4858, 4
        %v4860 = vmax.f32 %v4858, %v4859
        %v4861 = vrot.slane %v4860, 2
        %v4862 = vmax.f32 %v4860, %v4861
        %v4863 = vrot.slane %v4862, 1
        %v4864 = vmax.f32 %v4862, %v4863
        %v4865 = vmax.f32 %v4651, %v4653
        %v4866 = vrot.slane %v4865, 4
        %v4867 = vmax.f32 %v4865, %v4866
        %v4868 = vrot.slane %v4867, 2
        %v4869 = vmax.f32 %v4867, %v4868
        %v4870 = vrot.slane %v4869, 1
        %v4871 = vmax.f32 %v4869, %v4870
        %v4872 = vmax.f32 %v4652, %v4654
        %v4873 = vrot.slane %v4872, 4
        %v4874 = vmax.f32 %v4872, %v4873
        %v4875 = vrot.slane %v4874, 2
        %v4876 = vmax.f32 %v4874, %v4875
        %v4877 = vrot.slane %v4876, 1
        %v4878 = vmax.f32 %v4876, %v4877
        %v4879 = vld [vmem:[#allocation7] sm:$0x3]
        %v4881 = vlaneseq
        %v4882 = vshrl.u32 %v4881, 7
        %v4883 = vsub.s32 0, %v4882
        %v4884 = vrot.slane %v4879, %v4883
        %v4885 = vlaneseq
        %v4886 = vshrl.u32 %v4885, 7
        %v4887 = vsub.s32 1, %v4886
        %v4888 = vrot.slane %v4879, %v4887
        %v4891 = vadd.f32 %v4661, %v4884
        %v4892 = vadd.f32 %v4668, %v4888
        %v4893 = vadd.f32 %v4675, %v4884
        %v4894 = vadd.f32 %v4682, %v4888
        %v4895 = vadd.f32 %v4689, %v4884
        %v4896 = vadd.f32 %v4696, %v4888
        %v4897 = vadd.f32 %v4703, %v4884
        %v4898 = vadd.f32 %v4710, %v4888
        %v4899 = vadd.f32 %v4717, %v4884
        %v4900 = vadd.f32 %v4724, %v4888
        %v4901 = vadd.f32 %v4731, %v4884
        %v4902 = vadd.f32 %v4738, %v4888
        %v4903 = vadd.f32 %v4745, %v4884
        %v4904 = vadd.f32 %v4752, %v4888
        %v4905 = vadd.f32 %v4759, %v4884
        %v4906 = vadd.f32 %v4766, %v4888
        %v4907 = vadd.f32 %v4773, %v4884
        %v4908 = vadd.f32 %v4780, %v4888
        %v4909 = vadd.f32 %v4787, %v4884
        %v4910 = vadd.f32 %v4794, %v4888
        %v4911 = vadd.f32 %v4801, %v4884
        %v4912 = vadd.f32 %v4808, %v4888
        %v4913 = vadd.f32 %v4815, %v4884
        %v4914 = vadd.f32 %v4822, %v4888
        %v4915 = vadd.f32 %v4829, %v4884
        %v4916 = vadd.f32 %v4836, %v4888
        %v4917 = vadd.f32 %v4843, %v4884
        %v4918 = vadd.f32 %v4850, %v4888
        %v4919 = vadd.f32 %v4857, %v4884
        %v4920 = vadd.f32 %v4864, %v4888
        %v4921 = vadd.f32 %v4871, %v4884
        %v4922 = vadd.f32 %v4878, %v4888
        %v4955 = vrot.slane %v4893, 7
        %vm4956 = vcmask 1041409
        %v4957 = vsel %vm4956, %v4955, %v4891
        %v4958 = vrot.slane %v4895, 6
        %vm4959 = vcmask 1042434
        %v4960 = vsel %vm4959, %v4958, %v4957
        %v4961 = vrot.slane %v4897, 5
        %vm4962 = vcmask 1043459
        %v4963 = vsel %vm4962, %v4961, %v4960
        %v4964 = vrot.slane %v4899, 4
        %vm4965 = vcmask 1044484
        %v4966 = vsel %vm4965, %v4964, %v4963
        %v4967 = vrot.slane %v4901, 3
        %vm4968 = vcmask 1045509
        %v4969 = vsel %vm4968, %v4967, %v4966
        %v4970 = vrot.slane %v4903, 2
        %vm4971 = vcmask 1046534
        %v4972 = vsel %vm4971, %v4970, %v4969
        %v4973 = vrot.slane %v4905, 1
        %vm4974 = vcmask 1047559
        %v4975 = vsel %vm4974, %v4973, %v4972
        %v4976 = vrot.slane %v4894, 7
        %v4977 = vsel %vm4956, %v4976, %v4892
        %v4978 = vrot.slane %v4896, 6
        %v4979 = vsel %vm4959, %v4978, %v4977
        %v4980 = vrot.slane %v4898, 5
        %v4981 = vsel %vm4962, %v4980, %v4979
        %v4982 = vrot.slane %v4900, 4
        %v4983 = vsel %vm4965, %v4982, %v4981
        %v4984 = vrot.slane %v4902, 3
        %v4985 = vsel %vm4968, %v4984, %v4983
        %v4986 = vrot.slane %v4904, 2
        %v4987 = vsel %vm4971, %v4986, %v4985
        %v4988 = vrot.slane %v4906, 1
        %v4989 = vsel %vm4974, %v4988, %v4987
        %v4990 = vrot.slane %v4909, 7
        %v4991 = vsel %vm4956, %v4990, %v4907
        %v4992 = vrot.slane %v4911, 6
        %v4993 = vsel %vm4959, %v4992, %v4991
        %v4994 = vrot.slane %v4913, 5
        %v4995 = vsel %vm4962, %v4994, %v4993
        %v4996 = vrot.slane %v4915, 4
        %v4997 = vsel %vm4965, %v4996, %v4995
        %v4998 = vrot.slane %v4917, 3
        %v4999 = vsel %vm4968, %v4998, %v4997
        %v5000 = vrot.slane %v4919, 2
        %v5001 = vsel %vm4971, %v5000, %v4999
        %v5002 = vrot.slane %v4921, 1
        %v5003 = vsel %vm4974, %v5002, %v5001
        %v5004 = vrot.slane %v4910, 7
        %v5005 = vsel %vm4956, %v5004, %v4908
        %v5006 = vrot.slane %v4912, 6
        %v5007 = vsel %vm4959, %v5006, %v5005
        %v5008 = vrot.slane %v4914, 5
        %v5009 = vsel %vm4962, %v5008, %v5007
        %v5010 = vrot.slane %v4916, 4
        %v5011 = vsel %vm4965, %v5010, %v5009
        %v5012 = vrot.slane %v4918, 3
        %v5013 = vsel %vm4968, %v5012, %v5011
        %v5014 = vrot.slane %v4920, 2
        %v5015 = vsel %vm4971, %v5014, %v5013
        %v5016 = vrot.slane %v4922, 1
        %v5017 = vsel %vm4974, %v5016, %v5015
        %5022 = vst [vmem:[%s216] sm:$0xff] %v4975
        %5023 = vst [vmem:[%s216 + $0x8] sm:$0xff] %v4989
        %5024 = vst [vmem:[%s216 + $0x10] sm:$0xff] %v5003
        %5025 = vst [vmem:[%s216 + $0x18] sm:$0xff] %v5017
        %s5026 = sand.u32 %s97, 1
        %s5027 = scalar_lea.sflag [#allocation4], %s5026
        %s5028 = sand.u32 %s97, 1
        %s5029 = smul.addr %s5028, 32
        %s5030 = scalar_lea.vmem [#allocation8], %s5029
        // Predicated region
        $region45: #{tpu_custom_call.1} parent=31 // pred_check
          %p5031 = pneg %p107
        $region46: #{tpu_custom_call.1} parent=31 // pred_check_branch
          %5033 = sbr.rel (%p5031) target = $region48
        $region47: #{tpu_custom_call.1} parent=31 // pred_region
          %s5034 = smul.u32 2, %s21
          %s5036 = ssub.s32 512, 512
          %5037 = vsyncadd %s5027, %s5036
          %s5038 = smul.addr %s5034, 2
          %s5039 = smul.addr %s5038, 128
          %s5040 = scalar_lea.hbm %s3, %s5039
          %s5041 = sshll.u32 %s5030, 4
          %s5042 = int_to_ptr.vmem [resolvable:$true] %s5041
          %5047 = dma.vmem_to_hbm [thread:$0]  %s5042, 512, %s5040, %s5027, 256, 256, 16
        $region48: #{tpu_custom_call.1} parent=31 // pred_fallthru
          _
      $region32: #{tpu_custom_call.1} parent=5 // pred_fallthru
        _
      %p5048 = scmp.le.s32.totalorder 2, %s16
      // Predicated region
      $region49: #{tpu_custom_call.1} parent=5 // pred_check
        %p5049 = pneg %p5048
      $region50: #{tpu_custom_call.1} parent=5 // pred_check_branch
        %5051 = sbr.rel (%p5049) target = $region52
      $region51: #{tpu_custom_call.1} parent=5 // pred_region
        %s5052 = ssub.s32 %s16, 2
        // Predicated region
        $region53: #{tpu_custom_call.1} parent=51 // pred_check
          %p5053 = pneg %p113
        $region54: #{tpu_custom_call.1} parent=51 // pred_check_branch
          %5055 = sbr.rel (%p5053) target = $region56
        $region55: #{tpu_custom_call.1} parent=51 // pred_region
          %s5056 = sand.u32 %s98, 1
          %s5057 = scalar_lea.sflag [#allocation4], %s5056
          %s5058 = sand.u32 %s98, 1
          %s5059 = smul.addr %s5058, 32
          %s5060 = scalar_lea.vmem [#allocation8], %s5059
          %5061 = dma.done %s5057, 512
        $region56: #{tpu_custom_call.1} parent=51 // pred_fallthru
          _
      $region52: #{tpu_custom_call.1} parent=5 // pred_fallthru
        _
    $region6: #{tpu_custom_call.1} parent=1 // loop_footer
      %s20 = sadd.s32 1, %s16
    $region7: #{tpu_custom_call.1} parent=1 // loop_footer_branch
      %15 = sbr.rel target = $region3
    $region8: #{tpu_custom_call.1} parent=1 // loop_exit
      _
    %5062 = vsyncpa [#allocation3], 1
    %s5063 = scalar_lea.sflag [#allocation3], 1
    %5064 = vsyncpa %s5063, 1
    %5065 = vsyncpa [#allocation6], 1
    %5066 = vsyncpa [#allocation4], 1
    %s5067 = scalar_lea.sflag [#allocation4], 1
    %5068 = vsyncpa %s5067, 1

</llo_original>
